<compile_context>
chip_gen: v7x
topology: tpu7x:2x2x1
jax: 0.10.0
libtpu: 0.0.40
codegen_flags: <defaults>
</compile_context>

<pallas_src>
import functools
import math

import jax
import jax.numpy as jnp
from jax.experimental import pallas as pl
from jax.experimental.pallas import tpu as pltpu

try:
    _Tracer = jax.core.Tracer
except AttributeError:  # very old/new jax without jax.core.Tracer
    _Tracer = ()


def _fourier_kernel(x_ref, f_ref, w1s_ref, w1c_ref, b1_ref, w2_ref, b2_ref, o_ref):
    """One row-tile: Fourier encoding + Linear/SiLU/Linear, fully lane-packed.

    x_ref:    (P, k)          k logical rows packed per output row.
    f_ref:    (k, k*d/2)      block-diag of 2*pi/wavelengths (f32).
    w1s_ref:  (k*d/2, k*d)    block-diag of W1^T[:d/2]  (compute dtype).
    w1c_ref:  (k*d/2, k*d)    block-diag of W1^T[d/2:]  (compute dtype).
    b1_ref:   (1, k*d)        b1 tiled k times (f32).
    w2_ref:   (k*d, k*d)      block-diag of W2^T        (compute dtype).
    b2_ref:   (1, k*d)        b2 tiled k times (f32).
    o_ref:    (P, k*d)        lane-dense packed output.
    """
    cdt = w1s_ref.dtype                                   # matmul operand dtype
    x = x_ref[...]                                        # (P, k) f32
    # prod[r, j*dh + i] = x[r, j] * 2*pi/wavelength[i]  (block-diagonal frequencies)
    prod = jnp.dot(x, f_ref[...], preferred_element_type=jnp.float32)   # (P, k*d/2)
    s = jnp.sin(prod)
    c = jnp.cos(prod)
    # [sin, cos] @ W1^T == sin @ W1^T[:d/2] + cos @ W1^T[d/2:]   (no lane concat)
    h = (jnp.dot(s.astype(cdt), w1s_ref[...], preferred_element_type=jnp.float32)
         + jnp.dot(c.astype(cdt), w1c_ref[...], preferred_element_type=jnp.float32)
         + b1_ref[...])
    h = h * jax.nn.sigmoid(h)                             # SiLU (sigmoid on the EUP)
    y = (jnp.dot(h.astype(cdt), w2_ref[...], preferred_element_type=jnp.float32)
         + b2_ref[...])
    o_ref[...] = y.astype(o_ref.dtype)                    # single lane-dense store


@functools.partial(jax.jit,
                   static_argnames=("d", "k", "tile_n", "compute_dtype", "out_dtype"))
def _fourier_expansion_impl(xf, wavelengths, w1, b1, w2, b2, *,
                            d, k, tile_n, compute_dtype, out_dtype):
    """xf: (N,) f32 flattened input.  Returns (N, d) of dtype `out_dtype`."""
    n_rows = xf.shape[0]
    dh = d // 2
    kd, kdh = k * d, k * dh

    # ---- parameter prep (inside jit: one dispatch, no un-jitted transposes) ----------
    eye_k = jnp.eye(k, dtype=jnp.float32)
    freqs = (2.0 * jnp.pi / wavelengths.astype(jnp.float32)).reshape(1, dh)
    f_blk = jnp.kron(eye_k, freqs)                                         # (k, k*dh)
    w1t = w1.astype(jnp.float32).T                                         # (d, d)
    w1s_blk = jnp.kron(eye_k, w1t[:dh]).astype(compute_dtype)              # (k*dh, k*d)
    w1c_blk = jnp.kron(eye_k, w1t[dh:]).astype(compute_dtype)              # (k*dh, k*d)
    w2_blk = jnp.kron(eye_k, w2.astype(jnp.float32).T).astype(compute_dtype)  # (kd, kd)
    b1_t = jnp.tile(b1.astype(jnp.float32).reshape(1, d), (1, k))          # (1, k*d)
    b2_t = jnp.tile(b2.astype(jnp.float32).reshape(1, d), (1, k))          # (1, k*d)

    # ---- pack x: (N,) -> (N/k, k); pad at most k-1 rows -------------------------------
    rows_packed = pl.cdiv(n_rows, k)
    n_pad = rows_packed * k
    if n_pad != n_rows:
        xf = jnp.pad(xf, (0, n_pad - n_rows))
    xp = xf.reshape(rows_packed, k)

    # ---- tile size: ~2 MB of output per grid step, >=4 steps when N allows -----------
    out_itemsize = jnp.dtype(out_dtype).itemsize
    row_align = 8 * k
    if tile_n is None:
        desired = max(1024, (2 * 1024 * 1024) // (d * out_itemsize))
        tn = min(desired, pl.cdiv(n_rows, 4))     # keep >=4 grid steps (v7x: 2 TCs)
    else:
        tn = tile_n
    tn = max(row_align, pl.cdiv(tn, row_align) * row_align)
    p_rows = tn // k
    if rows_packed < 8:
        p_rows = rows_packed                       # tiny input: one full-extent block
    else:
        p_rows = min(p_rows, (rows_packed // 8) * 8)
    grid = (pl.cdiv(rows_packed, p_rows),)         # ragged last block masked by Pallas

    # ---- VMEM budget / cost hint ------------------------------------------------------
    cdt_bytes = jnp.dtype(compute_dtype).itemsize
    weight_bytes = (2 * kdh * kd + kd * kd) * cdt_bytes + (k * kdh + 2 * kd) * 4
    block_bytes = p_rows * k * 4 + p_rows * kd * out_itemsize
    interm_bytes = p_rows * (2 * kdh + 2 * kd) * 4     # s, c, h, y f32 temporaries
    vmem_est = 2 * block_bytes + weight_bytes + interm_bytes + (4 << 20)
    try:
        vmem_cap = pltpu.get_tpu_info().vmem_capacity_bytes
    except Exception:                                   # conservative fallback (v7x)
        vmem_cap = 64 * 1024 * 1024
    vmem_limit = int(min(max(vmem_est * 1.3, 32 * 1024 * 1024), 0.85 * vmem_cap))

    cost = pl.CostEstimate(
        flops=rows_packed * (2 * k * kdh + 4 * kdh * kd + 2 * kd * kd),
        transcendentals=n_pad * 2 * d,                  # sin + cos + sigmoid
        bytes_accessed=n_pad * 4 + n_pad * d * out_itemsize + weight_bytes)

    # Grid-invariant weights/biases: single-buffered, whole-array VMEM residents.
    vmem_full = pl.BlockSpec(memory_space=pltpu.MemorySpace.VMEM)

    out = pl.pallas_call(
        _fourier_kernel,
        out_shape=jax.ShapeDtypeStruct((rows_packed, kd), out_dtype),
        grid_spec=pltpu.PrefetchScalarGridSpec(
            num_scalar_prefetch=0,
            grid=grid,
            in_specs=[
                pl.BlockSpec((p_rows, k), lambda i: (i, 0)),   # packed x rows (pipelined)
                vmem_full,   # block-diag 2*pi/wavelengths
                vmem_full,   # block-diag W1^T sin half
                vmem_full,   # block-diag W1^T cos half
                vmem_full,   # b1 tiled
                vmem_full,   # block-diag W2^T
                vmem_full,   # b2 tiled
            ],
            out_specs=pl.BlockSpec((p_rows, kd), lambda i: (i, 0)),
        ),
        compiler_params=pltpu.CompilerParams(
            dimension_semantics=("parallel",),
            vmem_limit_bytes=vmem_limit),
        cost_estimate=cost,
    )(xp, f_blk, w1s_blk, w1c_blk, b1_t, w2_blk, b2_t)

    # Row-major (N/k, k*d) is the same memory as (N, d): free un-pack.
    out = out.reshape(n_pad, d)
    if n_pad != n_rows:                                 # at most k-1 extra rows
        out = out[:n_rows]
    return out


def fourier_expansion(x, wavelengths, w1, b1, w2, b2, lower, upper,
                      assert_range=True, tile_n=None, compute_dtype=None,
                      out_dtype=jnp.float32):
    """Pallas implementation of FourierExpansion.forward.

    x: (..., n) array with |x| in [lower, upper] (or exactly zero).
    Returns an array of shape (..., n, d) and dtype `out_dtype` (f32 by default, matching
    the module; bf16 halves HBM writeback for large inputs).
    """
    d = w1.shape[0]
    if d % 2 != 0:
        raise ValueError(f"d must be a multiple of two, got {d}.")
    if w1.shape != (d, d) or w2.shape != (d, d):
        raise ValueError(f"w1/w2 must be ({d}, {d}); got {w1.shape} / {w2.shape}.")
    if b1.shape != (d,) or b2.shape != (d,):
        raise ValueError(f"b1/b2 must be ({d},); got {b1.shape} / {b2.shape}.")
    if tuple(jnp.shape(wavelengths)) != (d // 2,):
        raise ValueError(f"wavelengths must be ({d // 2},); got {jnp.shape(wavelengths)}.")

    # Eager-only range check (needs a host sync; skipped for traced inputs).  Elementwise
    # predicate: same pass/fail outcome as the module's global-upper-bound formulation.
    if assert_range and not isinstance(x, _Tracer):
        ax = jnp.abs(x)
        in_range = jnp.logical_and(lower <= ax, ax <= upper)
        if not bool(jnp.all(jnp.logical_or(in_range, x == 0))):
            raise AssertionError(
                f"The input tensor is not within the configured range "
                f"`[{lower}, {upper}]`.")

    if compute_dtype is None:
        # bf16 matmul operands only pay off once the MXU matters (large d); at small d
        # the extra casts just load the binding VPU slot.
        compute_dtype = jnp.bfloat16 if d >= 256 else jnp.float32

    # Lane-packing factor: k logical rows per output row so the output lane dim k*d is a
    # multiple of 128 (dense vst + dense HBM writeback).  d % 128 == 0 gives k == 1.
    k = 128 // math.gcd(d, 128)
    if k > 1 and k * d > 1024:
        # TODO(synk): lane-dense repack for awkward large d (falls back to masked stores).
        k = 1

    orig_shape = x.shape
    xf = jnp.asarray(x, jnp.float32).reshape(-1)
    out = _fourier_expansion_impl(
        xf, wavelengths, w1, b1, w2, b2,
        d=d, k=k, tile_n=None if tile_n is None else int(tile_n),
        compute_dtype=jnp.dtype(compute_dtype), out_dtype=jnp.dtype(out_dtype))
    return out.reshape(*orig_shape, d)


def _init_params(key, d, lower, upper):
    """Deterministic parameter init matching the module's shapes."""
    wavelengths = jnp.logspace(math.log10(lower), math.log10(upper), d // 2,
                               base=10.0, dtype=jnp.float32)
    k1, k2, k3, k4 = jax.random.split(key, 4)
    bound = 1.0 / math.sqrt(d)
    w1 = jax.random.uniform(k1, (d, d), jnp.float32, -bound, bound)
    b1 = jax.random.uniform(k2, (d,), jnp.float32, -bound, bound)
    w2 = jax.random.uniform(k3, (d, d), jnp.float32, -bound, bound)
    b2 = jax.random.uniform(k4, (d,), jnp.float32, -bound, bound)
    return wavelengths, w1, b1, w2, b2


def _reference(x, wavelengths, w1, b1, w2, b2):
    prod = x[..., None] * (2.0 * jnp.pi / wavelengths)
    enc = jnp.concatenate([jnp.sin(prod), jnp.cos(prod)], axis=-1).astype(jnp.float32)
    h = enc @ w1.T + b1
    h = h * jax.nn.sigmoid(h)
    return h @ w2.T + b2


if __name__ == "__main__":
    key = jax.random.PRNGKey(0)
    lower, upper = 0.1, 10.0
    d = 32                               # expansion dimensionality (multiple of 2)

    wavelengths, w1, b1, w2, b2 = _init_params(key, d, lower, upper)

    xkey1, xkey2 = jax.random.split(jax.random.fold_in(key, 1))
    # Main input: (2, 4, 16, 16) -> N = 2048 logical rows -> 4 grid steps.
    x_big = jax.random.uniform(xkey1, (2, 4, 16, 16), jnp.float32,
                               minval=lower, maxval=upper)
    # Small non-aligned input exercising the ragged-block path; includes exact zeros
    # (allowed by the range check).
    x_small = jax.random.uniform(xkey2, (3, 7, 5), jnp.float32,
                                 minval=lower, maxval=upper)
    x_small = x_small.at[0, 0, 0].set(0.0).at[2, 6, 4].set(0.0)

    out_big = jax.block_until_ready(
        fourier_expansion(x_big, wavelengths, w1, b1, w2, b2, lower, upper,
                          assert_range=True))
    out_small = jax.block_until_ready(
        fourier_expansion(x_small, wavelengths, w1, b1, w2, b2, lower, upper,
                          assert_range=True))

    ref_big = _reference(x_big, wavelengths, w1, b1, w2, b2)
    ref_small = _reference(x_small, wavelengths, w1, b1, w2, b2)

    assert out_big.shape == (2, 4, 16, 16, d), out_big.shape
    assert out_small.shape == (3, 7, 5, d), out_small.shape
    # TPU f32 matmul precision is backend-defined; compare at a tolerance covering that.
    assert jnp.allclose(out_big, ref_big, atol=2e-2, rtol=2e-2), \
        float(jnp.max(jnp.abs(out_big - ref_big)))
    assert jnp.allclose(out_small, ref_small, atol=2e-2, rtol=2e-2), \
        float(jnp.max(jnp.abs(out_small - ref_small)))

    # Reduced-precision output path (halves HBM writeback): loose sanity check only.
    out_bf16 = jax.block_until_ready(
        fourier_expansion(x_big, wavelengths, w1, b1, w2, b2, lower, upper,
                          assert_range=False, out_dtype=jnp.bfloat16))
    assert out_bf16.shape == (2, 4, 16, 16, d), out_bf16.shape
    assert out_bf16.dtype == jnp.bfloat16
    out_bf16_f32 = out_bf16.astype(jnp.float32)
    assert bool(jnp.all(jnp.isfinite(out_bf16_f32)))
    assert float(jnp.max(jnp.abs(out_bf16_f32 - ref_big))) < 0.1

    print("KERNEL_OK")
</pallas_src>

<mosaic_0001>
module attributes {stable_mosaic.version = 11 : i64} {
  func.func @_fourier_kernel(%arg0: i32, %arg1: memref<128x4xf32, #tpu.memory_space<vmem>>, %arg2: memref<4x64xf32, #tpu.memory_space<vmem>>, %arg3: memref<64x128xf32, #tpu.memory_space<vmem>>, %arg4: memref<64x128xf32, #tpu.memory_space<vmem>>, %arg5: memref<1x128xf32, #tpu.memory_space<vmem>>, %arg6: memref<128x128xf32, #tpu.memory_space<vmem>>, %arg7: memref<1x128xf32, #tpu.memory_space<vmem>>, %arg8: memref<128x128xf32, #tpu.memory_space<vmem>>) attributes {dimension_semantics = [#tpu.dimension_semantics<parallel>], iteration_bounds = array<i64: 4>, scalar_prefetch = 0 : i64, scratch_operands = 0 : i64, tpu.core_type = #tpu.core_type<tc>, window_params = [{transform_indices = @transform_0, window_bounds = array<i64: 128, 4>}, {pipeline_mode = #tpu.pipeline_mode<synchronous>, transform_indices = @transform_1, window_bounds = array<i64: 4, 64>}, {pipeline_mode = #tpu.pipeline_mode<synchronous>, transform_indices = @transform_2, window_bounds = array<i64: 64, 128>}, {pipeline_mode = #tpu.pipeline_mode<synchronous>, transform_indices = @transform_3, window_bounds = array<i64: 64, 128>}, {pipeline_mode = #tpu.pipeline_mode<synchronous>, transform_indices = @transform_4, window_bounds = array<i64: 1, 128>}, {pipeline_mode = #tpu.pipeline_mode<synchronous>, transform_indices = @transform_5, window_bounds = array<i64: 128, 128>}, {pipeline_mode = #tpu.pipeline_mode<synchronous>, transform_indices = @transform_6, window_bounds = array<i64: 1, 128>}, {transform_indices = @transform_7, window_bounds = array<i64: 128, 128>}]} {
    %c0 = arith.constant 0 : index
    %c0_0 = arith.constant 0 : index
    %0 = vector.load %arg1[%c0, %c0_0] : memref<128x4xf32, #tpu.memory_space<vmem>>, vector<128x4xf32>
    %c0_1 = arith.constant 0 : index
    %c0_2 = arith.constant 0 : index
    %1 = vector.load %arg2[%c0_1, %c0_2] : memref<4x64xf32, #tpu.memory_space<vmem>>, vector<4x64xf32>
    %cst = arith.constant dense<0.000000e+00> : vector<128x64xf32>
    %2 = tpu.matmul %0, %1, %cst {dimension_numbers = #tpu.dot_dimension_numbers<[1], [0], [0], [1], [0, 0, 1, 1], [], []>} : vector<128x4xf32>, vector<4x64xf32>, vector<128x64xf32> -> vector<128x64xf32>
    %3 = math.sin %2 : vector<128x64xf32>
    %4 = math.cos %2 : vector<128x64xf32>
    %c0_3 = arith.constant 0 : index
    %c0_4 = arith.constant 0 : index
    %5 = vector.load %arg3[%c0_3, %c0_4] : memref<64x128xf32, #tpu.memory_space<vmem>>, vector<64x128xf32>
    %cst_5 = arith.constant dense<0.000000e+00> : vector<128x128xf32>
    %6 = tpu.matmul %3, %5, %cst_5 {dimension_numbers = #tpu.dot_dimension_numbers<[1], [0], [0], [1], [0, 0, 1, 1], [], []>} : vector<128x64xf32>, vector<64x128xf32>, vector<128x128xf32> -> vector<128x128xf32>
    %c0_6 = arith.constant 0 : index
    %c0_7 = arith.constant 0 : index
    %7 = vector.load %arg4[%c0_6, %c0_7] : memref<64x128xf32, #tpu.memory_space<vmem>>, vector<64x128xf32>
    %cst_8 = arith.constant dense<0.000000e+00> : vector<128x128xf32>
    %8 = tpu.matmul %4, %7, %cst_8 {dimension_numbers = #tpu.dot_dimension_numbers<[1], [0], [0], [1], [0, 0, 1, 1], [], []>} : vector<128x64xf32>, vector<64x128xf32>, vector<128x128xf32> -> vector<128x128xf32>
    %9 = arith.addf %6, %8 : vector<128x128xf32>
    %c0_9 = arith.constant 0 : index
    %c0_10 = arith.constant 0 : index
    %10 = vector.load %arg5[%c0_9, %c0_10] : memref<1x128xf32, #tpu.memory_space<vmem>>, vector<1x128xf32>
    %11 = vector.broadcast %10 : vector<1x128xf32> to vector<128x128xf32>
    %12 = arith.addf %9, %11 : vector<128x128xf32>
    %13 = arith.negf %12 : vector<128x128xf32>
    %14 = math.exp %13 : vector<128x128xf32>
    %cst_11 = arith.constant 1.000000e+00 : f32
    %15 = vector.broadcast %cst_11 : f32 to vector<128x128xf32>
    %16 = arith.addf %15, %14 : vector<128x128xf32>
    %17 = arith.divf %15, %16 : vector<128x128xf32>
    %18 = arith.mulf %12, %17 : vector<128x128xf32>
    %c0_12 = arith.constant 0 : index
    %c0_13 = arith.constant 0 : index
    %19 = vector.load %arg6[%c0_12, %c0_13] : memref<128x128xf32, #tpu.memory_space<vmem>>, vector<128x128xf32>
    %cst_14 = arith.constant dense<0.000000e+00> : vector<128x128xf32>
    %20 = tpu.matmul %18, %19, %cst_14 {dimension_numbers = #tpu.dot_dimension_numbers<[1], [0], [0], [1], [0, 0, 1, 1], [], []>} : vector<128x128xf32>, vector<128x128xf32>, vector<128x128xf32> -> vector<128x128xf32>
    %c0_15 = arith.constant 0 : index
    %c0_16 = arith.constant 0 : index
    %21 = vector.load %arg7[%c0_15, %c0_16] : memref<1x128xf32, #tpu.memory_space<vmem>>, vector<1x128xf32>
    %22 = vector.broadcast %21 : vector<1x128xf32> to vector<128x128xf32>
    %23 = arith.addf %20, %22 : vector<128x128xf32>
    %c0_17 = arith.constant 0 : index
    %c0_18 = arith.constant 0 : index
    %24 = vector.load %arg8[%c0_17, %c0_18] : memref<128x128xf32, #tpu.memory_space<vmem>>, vector<128x128xf32>
    tpu.vector_store %arg8[%c0_17, %c0_18], %23 {strides = array<i32>} : memref<128x128xf32, #tpu.memory_space<vmem>>, vector<128x128xf32>,
    return
  }
  func.func @transform_0(%arg0: i32) -> (i32, i32) {
    %c0_i32 = arith.constant 0 : i32
    %c0_i32_0 = arith.constant 0 : i32
    return %arg0, %c0_i32 : i32, i32
  }
  func.func @transform_1(%arg0: i32) -> (i32, i32) {
    %c0_i32 = arith.constant 0 : i32
    %c0_i32_0 = arith.constant 0 : i32
    %c0_i32_1 = arith.constant 0 : i32
    return %c0_i32, %c0_i32_0 : i32, i32
  }
  func.func @transform_2(%arg0: i32) -> (i32, i32) {
    %c0_i32 = arith.constant 0 : i32
    %c0_i32_0 = arith.constant 0 : i32
    %c0_i32_1 = arith.constant 0 : i32
    return %c0_i32, %c0_i32_0 : i32, i32
  }
  func.func @transform_3(%arg0: i32) -> (i32, i32) {
    %c0_i32 = arith.constant 0 : i32
    %c0_i32_0 = arith.constant 0 : i32
    %c0_i32_1 = arith.constant 0 : i32
    return %c0_i32, %c0_i32_0 : i32, i32
  }
  func.func @transform_4(%arg0: i32) -> (i32, i32) {
    %c0_i32 = arith.constant 0 : i32
    %c0_i32_0 = arith.constant 0 : i32
    %c0_i32_1 = arith.constant 0 : i32
    return %c0_i32, %c0_i32_0 : i32, i32
  }
  func.func @transform_5(%arg0: i32) -> (i32, i32) {
    %c0_i32 = arith.constant 0 : i32
    %c0_i32_0 = arith.constant 0 : i32
    %c0_i32_1 = arith.constant 0 : i32
    return %c0_i32, %c0_i32_0 : i32, i32
  }
  func.func @transform_6(%arg0: i32) -> (i32, i32) {
    %c0_i32 = arith.constant 0 : i32
    %c0_i32_0 = arith.constant 0 : i32
    %c0_i32_1 = arith.constant 0 : i32
    return %c0_i32, %c0_i32_0 : i32, i32
  }
  func.func @transform_7(%arg0: i32) -> (i32, i32) {
    %c0_i32 = arith.constant 0 : i32
    %c0_i32_0 = arith.constant 0 : i32
    return %arg0, %c0_i32 : i32, i32
  }
}

</mosaic_0001>

<llo_original>
// kernel: _fourier_expansion_impl.1
$region0: #{_fourier_expansion_impl.1}
  #allocation0 [shape = 'u32[]', space=smem, size = 0x4, offset = 0x4, fixed_abs, tag = 'smem constant byte address 0x4 - core index']
  #allocation1 [shape = 'u32[144,128]{1,0:T(1,128)}', space=vmem, size = 0x12000, scoped, tag = 'internal scratch']
  %s0 = inlined_call_operand.vmem [shape: f32[512,4], index: 0, kind: input, shape index: {}]
  %s1 = inlined_call_operand.vmem [shape: f32[4,64], index: 1, kind: input, shape index: {}]
  %s2 = inlined_call_operand.vmem [shape: f32[64,128], index: 2, kind: input, shape index: {}]
  %s3 = inlined_call_operand.vmem [shape: f32[64,128], index: 3, kind: input, shape index: {}]
  %s4 = inlined_call_operand.vmem [shape: f32[1,128], index: 4, kind: input, shape index: {}]
  %s5 = inlined_call_operand.vmem [shape: f32[128,128], index: 5, kind: input, shape index: {}]
  %s6 = inlined_call_operand.vmem [shape: f32[1,128], index: 6, kind: input, shape index: {}]
  %s7 = inlined_call_operand.vmem [shape: f32[512,128], index: 7, kind: output, shape index: {}]
  %s8 = sld [smem:[#allocation0]]
  $region61: #{_fourier_expansion_impl.1} parent=0
    _
  %s10 = ssub.s32 1, %s8
  %s11 = scalar_select 0, %s10, %s8
  loop: start=0, step=1, limit=6
  $region2: #{_fourier_expansion_impl.1} parent=0 // loop_pre_header
    _
  $region3: #{_fourier_expansion_impl.1} parent=0 // loop_header
    %s13 = sphi 0, %s17
    %p14 = scmp.ge.s32.totalorder %s13, 6
    %s23 = sphi 0, %s25
    %s26 = sphi 0, %s23
    %s27 = sphi 0, %s26
    %s43 = sphi 0, %s27
    %s47 = sphi 0, %s47
    %s49 = sphi 0, %s47
    %s50 = sphi 0, %s49
    %s64 = sphi 0, %s50
    %s68 = sphi 0, %s68
    %s70 = sphi 0, %s68
    %s71 = sphi 0, %s70
    %s85 = sphi 0, %s71
    %s89 = sphi 0, %s89
    %s91 = sphi 0, %s89
    %s92 = sphi 0, %s91
    %s106 = sphi 0, %s92
    %s110 = sphi 0, %s110
    %s112 = sphi 0, %s110
    %s113 = sphi 0, %s112
    %s127 = sphi 0, %s113
    %s131 = sphi 0, %s131
    %s133 = sphi 0, %s131
    %s134 = sphi 0, %s133
    %s148 = sphi 0, %s134
    %s152 = sphi 0, %s152
    %s154 = sphi 0, %s152
    %s155 = sphi 0, %s154
    %s169 = sphi 0, %s155
    %s175 = sphi 0, %s177
    %s178 = sphi 0, %s175
    %s179 = sphi 0, %s178
    %s195 = sphi 0, %s179
  $region4: #{_fourier_expansion_impl.1} parent=0 // loop_header_branch
    %16 = sbr.rel (%p14) target = $region8
  $region5: #{_fourier_expansion_impl.1} parent=0 // loop_body
    %s18 = ssub.s32 %s13, 1
    %s19 = ssub.s32 %s13, 2
    %s20 = sadd.s32 %s13, 1
    %s21 = ssub.s32 %s13, %s20
    %p22 = scmp.eq.s32.totalorder %s21, 0
    %s24 = sadd.s32 %s23, 1
    %s25 = scalar_select %p22, %s23, %s24
    %p28 = pneg %p22
    %p29 = scmp.eq.s32.totalorder %s13, 3
    %p30 = por %p28, %p29
    %p31 = scmp.ne.s32.totalorder %s23, %s26
    %p32 = scmp.eq.s32.totalorder %s13, 0
    %p33 = por %p31, %p32
    %p34 = scmp.ne.s32.totalorder %s23, %s26
    %p35 = scmp.eq.s32.totalorder %s18, 3
    %p36 = por %p34, %p35
    %p37 = scmp.ne.s32.totalorder %s26, %s27
    %p38 = scmp.eq.s32.totalorder %s18, 0
    %p39 = por %p37, %p38
    %p40 = scmp.ne.s32.totalorder %s26, %s27
    %p41 = scmp.eq.s32.totalorder %s19, 3
    %p42 = por %p40, %p41
    %p44 = scmp.ne.s32.totalorder %s27, %s43
    %p45 = scmp.eq.s32.totalorder %s19, 0
    %p46 = por %p44, %p45
    %s48 = sadd.s32 %s47, 1
    %p51 = scmp.eq.s32.totalorder %s13, 3
    %p52 = scmp.ne.s32.totalorder %s47, %s49
    %p53 = scmp.eq.s32.totalorder %s13, 0
    %p54 = por %p52, %p53
    %p55 = scmp.ne.s32.totalorder %s47, %s49
    %p56 = scmp.eq.s32.totalorder %s18, 3
    %p57 = por %p55, %p56
    %p58 = scmp.ne.s32.totalorder %s49, %s50
    %p59 = scmp.eq.s32.totalorder %s18, 0
    %p60 = por %p58, %p59
    %p61 = scmp.ne.s32.totalorder %s49, %s50
    %p62 = scmp.eq.s32.totalorder %s19, 3
    %p63 = por %p61, %p62
    %p65 = scmp.ne.s32.totalorder %s50, %s64
    %p66 = scmp.eq.s32.totalorder %s19, 0
    %p67 = por %p65, %p66
    %s69 = sadd.s32 %s68, 1
    %p72 = scmp.eq.s32.totalorder %s13, 3
    %p73 = scmp.ne.s32.totalorder %s68, %s70
    %p74 = scmp.eq.s32.totalorder %s13, 0
    %p75 = por %p73, %p74
    %p76 = scmp.ne.s32.totalorder %s68, %s70
    %p77 = scmp.eq.s32.totalorder %s18, 3
    %p78 = por %p76, %p77
    %p79 = scmp.ne.s32.totalorder %s70, %s71
    %p80 = scmp.eq.s32.totalorder %s18, 0
    %p81 = por %p79, %p80
    %p82 = scmp.ne.s32.totalorder %s70, %s71
    %p83 = scmp.eq.s32.totalorder %s19, 3
    %p84 = por %p82, %p83
    %p86 = scmp.ne.s32.totalorder %s71, %s85
    %p87 = scmp.eq.s32.totalorder %s19, 0
    %p88 = por %p86, %p87
    %s90 = sadd.s32 %s89, 1
    %p93 = scmp.eq.s32.totalorder %s13, 3
    %p94 = scmp.ne.s32.totalorder %s89, %s91
    %p95 = scmp.eq.s32.totalorder %s13, 0
    %p96 = por %p94, %p95
    %p97 = scmp.ne.s32.totalorder %s89, %s91
    %p98 = scmp.eq.s32.totalorder %s18, 3
    %p99 = por %p97, %p98
    %p100 = scmp.ne.s32.totalorder %s91, %s92
    %p101 = scmp.eq.s32.totalorder %s18, 0
    %p102 = por %p100, %p101
    %p103 = scmp.ne.s32.totalorder %s91, %s92
    %p104 = scmp.eq.s32.totalorder %s19, 3
    %p105 = por %p103, %p104
    %p107 = scmp.ne.s32.totalorder %s92, %s106
    %p108 = scmp.eq.s32.totalorder %s19, 0
    %p109 = por %p107, %p108
    %s111 = sadd.s32 %s110, 1
    %p114 = scmp.eq.s32.totalorder %s13, 3
    %p115 = scmp.ne.s32.totalorder %s110, %s112
    %p116 = scmp.eq.s32.totalorder %s13, 0
    %p117 = por %p115, %p116
    %p118 = scmp.ne.s32.totalorder %s110, %s112
    %p119 = scmp.eq.s32.totalorder %s18, 3
    %p120 = por %p118, %p119
    %p121 = scmp.ne.s32.totalorder %s112, %s113
    %p122 = scmp.eq.s32.totalorder %s18, 0
    %p123 = por %p121, %p122
    %p124 = scmp.ne.s32.totalorder %s112, %s113
    %p125 = scmp.eq.s32.totalorder %s19, 3
    %p126 = por %p124, %p125
    %p128 = scmp.ne.s32.totalorder %s113, %s127
    %p129 = scmp.eq.s32.totalorder %s19, 0
    %p130 = por %p128, %p129
    %s132 = sadd.s32 %s131, 1
    %p135 = scmp.eq.s32.totalorder %s13, 3
    %p136 = scmp.ne.s32.totalorder %s131, %s133
    %p137 = scmp.eq.s32.totalorder %s13, 0
    %p138 = por %p136, %p137
    %p139 = scmp.ne.s32.totalorder %s131, %s133
    %p140 = scmp.eq.s32.totalorder %s18, 3
    %p141 = por %p139, %p140
    %p142 = scmp.ne.s32.totalorder %s133, %s134
    %p143 = scmp.eq.s32.totalorder %s18, 0
    %p144 = por %p142, %p143
    %p145 = scmp.ne.s32.totalorder %s133, %s134
    %p146 = scmp.eq.s32.totalorder %s19, 3
    %p147 = por %p145, %p146
    %p149 = scmp.ne.s32.totalorder %s134, %s148
    %p150 = scmp.eq.s32.totalorder %s19, 0
    %p151 = por %p149, %p150
    %s153 = sadd.s32 %s152, 1
    %p156 = scmp.eq.s32.totalorder %s13, 3
    %p157 = scmp.ne.s32.totalorder %s152, %s154
    %p158 = scmp.eq.s32.totalorder %s13, 0
    %p159 = por %p157, %p158
    %p160 = scmp.ne.s32.totalorder %s152, %s154
    %p161 = scmp.eq.s32.totalorder %s18, 3
    %p162 = por %p160, %p161
    %p163 = scmp.ne.s32.totalorder %s154, %s155
    %p164 = scmp.eq.s32.totalorder %s18, 0
    %p165 = por %p163, %p164
    %p166 = scmp.ne.s32.totalorder %s154, %s155
    %p167 = scmp.eq.s32.totalorder %s19, 3
    %p168 = por %p166, %p167
    %p170 = scmp.ne.s32.totalorder %s155, %s169
    %p171 = scmp.eq.s32.totalorder %s19, 0
    %p172 = por %p170, %p171
    %s173 = ssub.s32 %s13, %s20
    %p174 = scmp.eq.s32.totalorder %s173, 0
    %s176 = sadd.s32 %s175, 1
    %s177 = scalar_select %p174, %s175, %s176
    %p180 = pneg %p174
    %p181 = scmp.eq.s32.totalorder %s13, 3
    %p182 = por %p180, %p181
    %p183 = scmp.ne.s32.totalorder %s175, %s178
    %p184 = scmp.eq.s32.totalorder %s13, 0
    %p185 = por %p183, %p184
    %p186 = scmp.ne.s32.totalorder %s175, %s178
    %p187 = scmp.eq.s32.totalorder %s18, 3
    %p188 = por %p186, %p187
    %p189 = scmp.ne.s32.totalorder %s178, %s179
    %p190 = scmp.eq.s32.totalorder %s18, 0
    %p191 = por %p189, %p190
    %p192 = scmp.ne.s32.totalorder %s178, %s179
    %p193 = scmp.eq.s32.totalorder %s19, 3
    %p194 = por %p192, %p193
    %p196 = scmp.ne.s32.totalorder %s179, %s195
    %p197 = scmp.eq.s32.totalorder %s19, 0
    %p198 = por %p196, %p197
    %p199 = scmp.le.s32.totalorder 1, %s13
    %p200 = scmp.lt.s32.totalorder %s13, 5
    %p201 = pnand %p199, %p200
    %p202 = pneg %p201
    // Predicated region
    $region9: #{_fourier_expansion_impl.1} parent=5 // pred_check
      _
    $region10: #{_fourier_expansion_impl.1} parent=5 // pred_check_branch
      %204 = sbr.rel (%p201) target = $region12
    $region11: #{_fourier_expansion_impl.1} parent=5 // pred_region
      %s205 = ssub.s32 %s13, 1
      // Predicated region
      $region13: #{_fourier_expansion_impl.1} parent=11 // pred_check
        %p206 = pneg %p60
      $region14: #{_fourier_expansion_impl.1} parent=11 // pred_check_branch
        %208 = sbr.rel (%p206) target = $region16
      $region15: #{_fourier_expansion_impl.1} parent=11 // pred_region
        _
      $region16: #{_fourier_expansion_impl.1} parent=11 // pred_fallthru
        _
      // Predicated region
      $region17: #{_fourier_expansion_impl.1} parent=11 // pred_check
        %p209 = pneg %p81
      $region18: #{_fourier_expansion_impl.1} parent=11 // pred_check_branch
        %211 = sbr.rel (%p209) target = $region20
      $region19: #{_fourier_expansion_impl.1} parent=11 // pred_region
        _
      $region20: #{_fourier_expansion_impl.1} parent=11 // pred_fallthru
        _
      // Predicated region
      $region21: #{_fourier_expansion_impl.1} parent=11 // pred_check
        %p212 = pneg %p102
      $region22: #{_fourier_expansion_impl.1} parent=11 // pred_check_branch
        %214 = sbr.rel (%p212) target = $region24
      $region23: #{_fourier_expansion_impl.1} parent=11 // pred_region
        _
      $region24: #{_fourier_expansion_impl.1} parent=11 // pred_fallthru
        _
      // Predicated region
      $region25: #{_fourier_expansion_impl.1} parent=11 // pred_check
        %p215 = pneg %p123
      $region26: #{_fourier_expansion_impl.1} parent=11 // pred_check_branch
        %217 = sbr.rel (%p215) target = $region28
      $region27: #{_fourier_expansion_impl.1} parent=11 // pred_region
        _
      $region28: #{_fourier_expansion_impl.1} parent=11 // pred_fallthru
        _
      // Predicated region
      $region29: #{_fourier_expansion_impl.1} parent=11 // pred_check
        %p218 = pneg %p144
      $region30: #{_fourier_expansion_impl.1} parent=11 // pred_check_branch
        %220 = sbr.rel (%p218) target = $region32
      $region31: #{_fourier_expansion_impl.1} parent=11 // pred_region
        _
      $region32: #{_fourier_expansion_impl.1} parent=11 // pred_fallthru
        _
      // Predicated region
      $region33: #{_fourier_expansion_impl.1} parent=11 // pred_check
        %p221 = pneg %p165
      $region34: #{_fourier_expansion_impl.1} parent=11 // pred_check_branch
        %223 = sbr.rel (%p221) target = $region36
      $region35: #{_fourier_expansion_impl.1} parent=11 // pred_region
        _
      $region36: #{_fourier_expansion_impl.1} parent=11 // pred_fallthru
        _
    $region12: #{_fourier_expansion_impl.1} parent=5 // pred_fallthru
      _
    %p224 = scmp.lt.s32.totalorder %s13, 4
    // Predicated region
    $region37: #{_fourier_expansion_impl.1} parent=5 // pred_check
      %p225 = pneg %p224
    $region38: #{_fourier_expansion_impl.1} parent=5 // pred_check_branch
      %227 = sbr.rel (%p225) target = $region40
    $region39: #{_fourier_expansion_impl.1} parent=5 // pred_region
      // Predicated region
      $region41: #{_fourier_expansion_impl.1} parent=39 // pred_check
        %p228 = pneg %p33
      $region42: #{_fourier_expansion_impl.1} parent=39 // pred_check_branch
        %230 = sbr.rel (%p228) target = $region44
      $region43: #{_fourier_expansion_impl.1} parent=39 // pred_region
        %s231 = smul.u32 16, %s13
        %p232 = scmp.lt.s32.totalorder %s231, 63
        %s233 = scalar_select %p232, %s231, 63
        %s234 = smul.addr %s233, 8
        %s235 = scalar_lea.vmem %s0, %s234
        %s236 = smul.u32 16, %s13
      $region44: #{_fourier_expansion_impl.1} parent=39 // pred_fallthru
        _
    $region40: #{_fourier_expansion_impl.1} parent=5 // pred_fallthru
      _
    %p237 = scmp.le.s32.totalorder 1, %s13
    %p238 = scmp.lt.s32.totalorder %s13, 5
    %p239 = pnand %p237, %p238
    %p240 = pneg %p239
    // Predicated region
    $region45: #{_fourier_expansion_impl.1} parent=5 // pred_check
      _
    $region46: #{_fourier_expansion_impl.1} parent=5 // pred_check_branch
      %242 = sbr.rel (%p239) target = $region48
    $region47: #{_fourier_expansion_impl.1} parent=5 // pred_region
      %s243 = ssub.s32 %s13, 1
      %s244 = smul.u32 16, %s18
      %p245 = scmp.lt.s32.totalorder %s244, 63
      %s246 = scalar_select %p245, %s244, 63
      %s247 = smul.addr %s246, 8
      %s248 = scalar_lea.vmem %s0, %s247
      %p249 = pneg %p39
      %p250 = pneg %p36
      %p251 = pneg %p60
      %p252 = pneg %p57
      %p253 = pneg %p81
      %p254 = pneg %p78
      %p255 = pneg %p102
      %p256 = pneg %p99
      %p257 = pneg %p123
      %p258 = pneg %p120
      %p259 = pneg %p144
      %p260 = pneg %p141
      %p261 = pneg %p165
      %p262 = pneg %p162
      %p263 = pneg %p191
      %p264 = pneg %p188
      %s265 = smul.u32 16, %s18
      %p266 = scmp.lt.s32.totalorder %s265, 63
      %s267 = scalar_select %p266, %s265, 63
      %s268 = smul.addr %s267, 8
      %s269 = scalar_lea.vmem %s7, %s268
      %s270 = smul.u32 16, %s18
      %p271 = scmp.lt.s32.totalorder %s270, 63
      %s272 = scalar_select %p271, %s270, 63
      %s273 = smul.addr %s272, 8
      %s274 = scalar_lea.vmem %s0, %s273
      %s275 = smul.u32 16, %s18
      %s276 = smul.u32 16, %s18
      %p277 = scmp.lt.s32.totalorder %s276, 63
      %s278 = scalar_select %p277, %s276, 63
      %s279 = smul.addr %s278, 8
      %s280 = scalar_lea.vmem %s7, %s279
      %s281 = smul.u32 16, %s18
      %v282 = vld [vmem:[%s274] sm:$0xff]
      %v283 = vld [vmem:[%s274 + $0x8] sm:$0xff]
      %v284 = vld [vmem:[%s274 + $0x10] sm:$0xff]
      %v285 = vld [vmem:[%s274 + $0x18] sm:$0xff]
      %v286 = vld [vmem:[%s274 + $0x20] sm:$0xff]
      %v287 = vld [vmem:[%s274 + $0x28] sm:$0xff]
      %v288 = vld [vmem:[%s274 + $0x30] sm:$0xff]
      %v289 = vld [vmem:[%s274 + $0x38] sm:$0xff]
      %v290 = vld [vmem:[%s274 + $0x40] sm:$0xff]
      %v291 = vld [vmem:[%s274 + $0x48] sm:$0xff]
      %v292 = vld [vmem:[%s274 + $0x50] sm:$0xff]
      %v293 = vld [vmem:[%s274 + $0x58] sm:$0xff]
      %v294 = vld [vmem:[%s274 + $0x60] sm:$0xff]
      %v295 = vld [vmem:[%s274 + $0x68] sm:$0xff]
      %v296 = vld [vmem:[%s274 + $0x70] sm:$0xff]
      %v297 = vld [vmem:[%s274 + $0x78] sm:$0xff]
      %v298 = vld [vmem:[%s1] sm:$0xf]
      %vm299 = vcmask 31744
      %v301 = vsel %vm299, %v282, 0
      %v304 = vsel %vm299, %v283, 0
      %v307 = vsel %vm299, %v284, 0
      %v310 = vsel %vm299, %v285, 0
      %v313 = vsel %vm299, %v286, 0
      %v316 = vsel %vm299, %v287, 0
      %v319 = vsel %vm299, %v288, 0
      %v322 = vsel %vm299, %v289, 0
      %v325 = vsel %vm299, %v290, 0
      %v328 = vsel %vm299, %v291, 0
      %v331 = vsel %vm299, %v292, 0
      %v334 = vsel %vm299, %v293, 0
      %v337 = vsel %vm299, %v294, 0
      %v340 = vsel %vm299, %v295, 0
      %v343 = vsel %vm299, %v296, 0
      %v346 = vsel %vm299, %v297, 0
      %vm348 = vcmask 1043456
      %v350 = vsel %vm348, %v298, 0
      %352 = vmatprep.subr.mxu0 0.0
      %353 = vmatpush1.msra.mxu0 %v350
      %354 = vmatprep.subr.mxu0 0.0
      %355 = vmatpush1.msra.mxu0 0.0
      %356 = vmatprep.subr.mxu0 0.0
      %357 = vmatpush1.msra.mxu0 0.0
      %358 = vmatprep.subr.mxu0 0.0
      %359 = vmatpush1.msra.mxu0 0.0
      %360 = vmatprep.subr.mxu0 0.0
      %361 = vmatpush1.msra.mxu0 0.0
      %362 = vmatprep.subr.mxu0 0.0
      %363 = vmatpush1.msra.mxu0 0.0
      %364 = vmatprep.subr.mxu0 0.0
      %365 = vmatpush1.msra.mxu0 0.0
      %366 = vmatprep.subr.mxu0 0.0
      %367 = vmatpush1.msra.mxu0 0.0
      %368 = vmatprep.subr.mxu0 0.0
      %369 = vmatpush1.msra.mxu0 0.0
      %370 = vmatprep.subr.mxu0 0.0
      %371 = vmatpush1.msra.mxu0 0.0
      %372 = vmatprep.subr.mxu0 0.0
      %373 = vmatpush1.msra.mxu0 0.0
      %374 = vmatprep.subr.mxu0 0.0
      %375 = vmatpush1.msra.mxu0 0.0
      %376 = vmatprep.subr.mxu0 0.0
      %377 = vmatpush1.msra.mxu0 0.0
      %378 = vmatprep.subr.mxu0 0.0
      %379 = vmatpush1.msra.mxu0 0.0
      %380 = vmatprep.subr.mxu0 0.0
      %381 = vmatpush1.msra.mxu0 0.0
      %382 = vmatprep.subr.mxu0 0.0
      %383 = vmatpush1.msra.mxu0 0.0
      %384 = vmatprep.subr.mxu0 0.0
      %385 = vmatpush1.msra.mxu0 0.0
      %386 = vmatprep.subr.mxu0 0.0
      %387 = vmatpush1.msra.mxu0 0.0
      %388 = vmatprep.subr.mxu0 0.0
      %389 = vmatpush1.msra.mxu0 0.0
      %390 = vmatprep.subr.mxu0 0.0
      %391 = vmatpush1.msra.mxu0 0.0
      %392 = vmatprep.subr.mxu0 0.0
      %393 = vmatpush1.msra.mxu0 0.0
      %394 = vmatprep.subr.mxu0 0.0
      %395 = vmatpush1.msra.mxu0 0.0
      %396 = vmatprep.subr.mxu0 0.0
      %397 = vmatpush1.msra.mxu0 0.0
      %398 = vmatprep.subr.mxu0 0.0
      %399 = vmatpush1.msra.mxu0 0.0
      %400 = vmatprep.subr.mxu0 0.0
      %401 = vmatpush1.msra.mxu0 0.0
      %402 = vmatprep.subr.mxu0 0.0
      %403 = vmatpush1.msra.mxu0 0.0
      %404 = vmatprep.subr.mxu0 0.0
      %405 = vmatpush1.msra.mxu0 0.0
      %406 = vmatprep.subr.mxu0 0.0
      %407 = vmatpush1.msra.mxu0 0.0
      %408 = vmatprep.subr.mxu0 0.0
      %409 = vmatpush1.msra.mxu0 0.0
      %410 = vmatprep.subr.mxu0 0.0
      %411 = vmatpush1.msra.mxu0 0.0
      %412 = vmatprep.subr.mxu0 0.0
      %413 = vmatpush1.msra.mxu0 0.0
      %414 = vmatprep.subr.mxu0 0.0
      %415 = vmatpush1.msra.mxu0 0.0
      %416 = vmatprep.mubr.f32.mxu0 0.0
      %417 = vmatmul.mubr.f32.gmra.mrb[0].mxu0 %v301
      %v418 = vpop.f32.mrb[0].mxu0
      %v419 = vadd.f32 0.0, %v418
      %v420 = vpop.f32.mrb[0].mxu0
      %421 = vmatprep.mubr.f32.mxu0 0.0
      %422 = vmatmul.mubr.f32.gmra.mrb[0].mxu0 %v304
      %v423 = vpop.f32.mrb[0].mxu0
      %v424 = vadd.f32 0.0, %v423
      %v425 = vpop.f32.mrb[0].mxu0
      %426 = vmatprep.mubr.f32.mxu0 0.0
      %427 = vmatmul.mubr.f32.gmra.mrb[0].mxu0 %v307
      %v428 = vpop.f32.mrb[0].mxu0
      %v429 = vadd.f32 0.0, %v428
      %v430 = vpop.f32.mrb[0].mxu0
      %431 = vmatprep.mubr.f32.mxu0 0.0
      %432 = vmatmul.mubr.f32.gmra.mrb[0].mxu0 %v310
      %v433 = vpop.f32.mrb[0].mxu0
      %v434 = vadd.f32 0.0, %v433
      %v435 = vpop.f32.mrb[0].mxu0
      %436 = vmatprep.mubr.f32.mxu0 0.0
      %437 = vmatmul.mubr.f32.gmra.mrb[0].mxu0 %v313
      %v438 = vpop.f32.mrb[0].mxu0
      %v439 = vadd.f32 0.0, %v438
      %v440 = vpop.f32.mrb[0].mxu0
      %441 = vmatprep.mubr.f32.mxu0 0.0
      %442 = vmatmul.mubr.f32.gmra.mrb[0].mxu0 %v316
      %v443 = vpop.f32.mrb[0].mxu0
      %v444 = vadd.f32 0.0, %v443
      %v445 = vpop.f32.mrb[0].mxu0
      %446 = vmatprep.mubr.f32.mxu0 0.0
      %447 = vmatmul.mubr.f32.gmra.mrb[0].mxu0 %v319
      %v448 = vpop.f32.mrb[0].mxu0
      %v449 = vadd.f32 0.0, %v448
      %v450 = vpop.f32.mrb[0].mxu0
      %451 = vmatprep.mubr.f32.mxu0 0.0
      %452 = vmatmul.mubr.f32.gmra.mrb[0].mxu0 %v322
      %v453 = vpop.f32.mrb[0].mxu0
      %v454 = vadd.f32 0.0, %v453
      %v455 = vpop.f32.mrb[0].mxu0
      %456 = vmatprep.mubr.f32.mxu0 0.0
      %457 = vmatmul.mubr.f32.gmra.mrb[0].mxu0 %v325
      %v458 = vpop.f32.mrb[0].mxu0
      %v459 = vadd.f32 0.0, %v458
      %v460 = vpop.f32.mrb[0].mxu0
      %461 = vmatprep.mubr.f32.mxu0 0.0
      %462 = vmatmul.mubr.f32.gmra.mrb[0].mxu0 %v328
      %v463 = vpop.f32.mrb[0].mxu0
      %v464 = vadd.f32 0.0, %v463
      %v465 = vpop.f32.mrb[0].mxu0
      %466 = vmatprep.mubr.f32.mxu0 0.0
      %467 = vmatmul.mubr.f32.gmra.mrb[0].mxu0 %v331
      %v468 = vpop.f32.mrb[0].mxu0
      %v469 = vadd.f32 0.0, %v468
      %v470 = vpop.f32.mrb[0].mxu0
      %471 = vmatprep.mubr.f32.mxu0 0.0
      %472 = vmatmul.mubr.f32.gmra.mrb[0].mxu0 %v334
      %v473 = vpop.f32.mrb[0].mxu0
      %v474 = vadd.f32 0.0, %v473
      %v475 = vpop.f32.mrb[0].mxu0
      %476 = vmatprep.mubr.f32.mxu0 0.0
      %477 = vmatmul.mubr.f32.gmra.mrb[0].mxu0 %v337
      %v478 = vpop.f32.mrb[0].mxu0
      %v479 = vadd.f32 0.0, %v478
      %v480 = vpop.f32.mrb[0].mxu0
      %481 = vmatprep.mubr.f32.mxu0 0.0
      %482 = vmatmul.mubr.f32.gmra.mrb[0].mxu0 %v340
      %v483 = vpop.f32.mrb[0].mxu0
      %v484 = vadd.f32 0.0, %v483
      %v485 = vpop.f32.mrb[0].mxu0
      %486 = vmatprep.mubr.f32.mxu0 0.0
      %487 = vmatmul.mubr.f32.gmra.mrb[0].mxu0 %v343
      %v488 = vpop.f32.mrb[0].mxu0
      %v489 = vadd.f32 0.0, %v488
      %v490 = vpop.f32.mrb[0].mxu0
      %491 = vmatprep.mubr.f32.mxu0 0.0
      %492 = vmatmul.mubr.f32.gmra.mrb[0].mxu0 %v346
      %v493 = vpop.f32.mrb[0].mxu0
      %v494 = vadd.f32 0.0, %v493
      %v495 = vpop.f32.mrb[0].mxu0
      %496 = vdwg.mxu0
      %v497 = vand.u32 2147483647, %v419
      %vm498 = vcmp.le.f32.partialorder %v497, 0.7853982
      %vm499 = vcmp.lt.s32.totalorder %v419, 0
      %v500 = vand.u32 %v419, 2139095040
      %v501 = vshrl.u32 %v500, 23
      %v502 = vsub.s32 %v501, 127
      %v503 = vand.u32 2147483647, %v419
      %v504 = vand.u32 %v503, 8388607
      %v505 = vor.u32 %v504, 8388608
      %v506 = vsub.s32 0, %v505
      %v507 = vadd.s32 %v502, 1
      %vm508 = vcmp.gt.s32.totalorder %v507, 0
      %v509 = vsel %vm508, %v507, 0
      %v510 = vshrl.u32 %v509, 5
      %v511 = vand.u32 %v509, 31
      %v512 = vsub.s32 32, %v511
      %v513 = vshrl.u32 683565275, %v512
      %v514 = vshll.u32 683565275, %v511
      %v515 = vshrl.u32 2475754826, %v512
      %v516 = vor.u32 %v514, %v515
      %v517 = vshll.u32 2475754826, %v511
      %v518 = vshrl.u32 2131351028, %v512
      %v519 = vor.u32 %v517, %v518
      %v520 = vshll.u32 2131351028, %v511
      %v521 = vshrl.u32 2102212464, %v512
      %v522 = vor.u32 %v520, %v521
      %v523 = vshll.u32 2102212464, %v511
      %v524 = vshrl.u32 920167782, %v512
      %v525 = vor.u32 %v523, %v524
      %v526 = vshll.u32 920167782, %v511
      %v527 = vshrl.u32 1326507024, %v512
      %v528 = vor.u32 %v526, %v527
      %vm529 = vcmp.lt.s32.totalorder %v510, 1
      %vm530 = vcmp.lt.s32.totalorder %v510, 2
      %vm531 = vcmp.lt.s32.totalorder %v510, 3
      %vm532 = vcmp.lt.s32.totalorder %v510, 4
      %v533 = vsel %vm529, %v513, %v516
      %v534 = vsel %vm532, %v522, 2102212464
      %v535 = vsel %vm531, %v519, %v534
      %v536 = vsel %vm530, %v533, %v535
      %v537 = vsel %vm529, %v516, %v519
      %v538 = vsel %vm532, %v525, 920167782
      %v539 = vsel %vm531, %v522, %v538
      %v540 = vsel %vm530, %v537, %v539
      %v541 = vsel %vm529, %v519, %v522
      %v542 = vsel %vm532, %v528, 1326507024
      %v543 = vsel %vm531, %v525, %v542
      %v544 = vsel %vm530, %v541, %v543
      %v545 = vshll.u32 %v505, 8
      %v546 = vmul.u32.u64.compose %v545, %v544
      %v547 = vextract.low.u32 %v546
      %v548 = vextract.high.u32 %v546
      %v549 = vmul.u32.u64.compose %v545, %v540
      %v550 = vextract.low.u32 %v549
      %v551 = vextract.high.u32 %v549
      %v552 = vmul.u32 %v545, %v536
      %v553 = vadd.s32 %v548, %v550
      %vm554 = vc.u32 %v548, %v550
      %v555 = vadd.s32 %v551, 1
      %v556 = vsel %vm554, %v555, %v551
      %v557 = vadd.s32 %v552, %v556
      %v558 = vadd.s32 %v557, 536870912
      %v559 = vshrl.u32 %v558, 30
      %v560 = vshll.u32 %v559, 30
      %v561 = vsub.s32 %v557, %v560
      %vm562 = vcmp.lt.s32.totalorder %v561, 0
      %v563 = vsub.s32 0, %v561
      %v564 = vsel %vm562, %v563, %v561
      %v565 = vclz %v564
      %v566 = vsub.s32 %v565, 2
      %vm567 = vcmp.gt.s32.totalorder 0, %v566
      %v568 = vsel %vm567, 0, %v566
      %v569 = vsub.s32 32, %v568
      %v570 = vshll.u32 %v561, %v568
      %v571 = vshrl.u32 %v553, %v569
      %v572 = vor.u32 %v570, %v571
      %v573 = vsub.s32 4294967266, %v568
      %v574 = vadd.s32 %v573, 127
      %v575 = vshll.u32 %v574, 23
      %v576 = vor.u32 4788187, %v575
      %v577 = vand.u32 2147483647, %v576
      %v579 = vcvt.s32.f32 %v572
      %v580 = vmul.f32 %v579, %v577
      %v581 = vxor.u32 %v580, 2147483648
      %v582 = vsel %vm499, %v581, %v580
      %v583 = vsub.s32 4, %v559
      %v584 = vsel %vm499, %v583, %v559
      %v585 = vsel %vm498, %v419, %v582
      %v586 = vsel %vm498, 0, %v584
      %v587 = vcosq.f32.pop %v585
      %v588 = vsinq.f32.pop %v585
      %vm589 = vweird.f32 %v419
      %v590 = vadd.s32 %v586, 3
      %v591 = vand.u32 %v590, 3
      %vm592 = vcmp.lt.s32.totalorder %v591, 2
      %vm593 = vcmp.eq.s32.totalorder %v591, 0
      %v594 = vxor.u32 %v588, 2147483648
      %v595 = vsel %vm593, %v587, %v594
      %vm596 = vcmp.eq.s32.totalorder %v591, 2
      %v597 = vxor.u32 %v587, 2147483648
      %v598 = vsel %vm596, %v597, %v588
      %v599 = vsel %vm592, %v595, %v598
      %v600 = vsel %vm589, nan, %v599
      %v601 = vand.u32 2147483647, %v424
      %vm602 = vcmp.le.f32.partialorder %v601, 0.7853982
      %vm603 = vcmp.lt.s32.totalorder %v424, 0
      %v604 = vand.u32 %v424, 2139095040
      %v605 = vshrl.u32 %v604, 23
      %v606 = vsub.s32 %v605, 127
      %v607 = vand.u32 2147483647, %v424
      %v608 = vand.u32 %v607, 8388607
      %v609 = vor.u32 %v608, 8388608
      %v610 = vsub.s32 0, %v609
      %v611 = vadd.s32 %v606, 1
      %vm612 = vcmp.gt.s32.totalorder %v611, 0
      %v613 = vsel %vm612, %v611, 0
      %v614 = vshrl.u32 %v613, 5
      %v615 = vand.u32 %v613, 31
      %v616 = vsub.s32 32, %v615
      %v617 = vshrl.u32 683565275, %v616
      %v618 = vshll.u32 683565275, %v615
      %v619 = vshrl.u32 2475754826, %v616
      %v620 = vor.u32 %v618, %v619
      %v621 = vshll.u32 2475754826, %v615
      %v622 = vshrl.u32 2131351028, %v616
      %v623 = vor.u32 %v621, %v622
      %v624 = vshll.u32 2131351028, %v615
      %v625 = vshrl.u32 2102212464, %v616
      %v626 = vor.u32 %v624, %v625
      %v627 = vshll.u32 2102212464, %v615
      %v628 = vshrl.u32 920167782, %v616
      %v629 = vor.u32 %v627, %v628
      %v630 = vshll.u32 920167782, %v615
      %v631 = vshrl.u32 1326507024, %v616
      %v632 = vor.u32 %v630, %v631
      %vm633 = vcmp.lt.s32.totalorder %v614, 1
      %vm634 = vcmp.lt.s32.totalorder %v614, 2
      %vm635 = vcmp.lt.s32.totalorder %v614, 3
      %vm636 = vcmp.lt.s32.totalorder %v614, 4
      %v637 = vsel %vm633, %v617, %v620
      %v638 = vsel %vm636, %v626, 2102212464
      %v639 = vsel %vm635, %v623, %v638
      %v640 = vsel %vm634, %v637, %v639
      %v641 = vsel %vm633, %v620, %v623
      %v642 = vsel %vm636, %v629, 920167782
      %v643 = vsel %vm635, %v626, %v642
      %v644 = vsel %vm634, %v641, %v643
      %v645 = vsel %vm633, %v623, %v626
      %v646 = vsel %vm636, %v632, 1326507024
      %v647 = vsel %vm635, %v629, %v646
      %v648 = vsel %vm634, %v645, %v647
      %v649 = vshll.u32 %v609, 8
      %v650 = vmul.u32.u64.compose %v649, %v648
      %v651 = vextract.low.u32 %v650
      %v652 = vextract.high.u32 %v650
      %v653 = vmul.u32.u64.compose %v649, %v644
      %v654 = vextract.low.u32 %v653
      %v655 = vextract.high.u32 %v653
      %v656 = vmul.u32 %v649, %v640
      %v657 = vadd.s32 %v652, %v654
      %vm658 = vc.u32 %v652, %v654
      %v659 = vadd.s32 %v655, 1
      %v660 = vsel %vm658, %v659, %v655
      %v661 = vadd.s32 %v656, %v660
      %v662 = vadd.s32 %v661, 536870912
      %v663 = vshrl.u32 %v662, 30
      %v664 = vshll.u32 %v663, 30
      %v665 = vsub.s32 %v661, %v664
      %vm666 = vcmp.lt.s32.totalorder %v665, 0
      %v667 = vsub.s32 0, %v665
      %v668 = vsel %vm666, %v667, %v665
      %v669 = vclz %v668
      %v670 = vsub.s32 %v669, 2
      %vm671 = vcmp.gt.s32.totalorder 0, %v670
      %v672 = vsel %vm671, 0, %v670
      %v673 = vsub.s32 32, %v672
      %v674 = vshll.u32 %v665, %v672
      %v675 = vshrl.u32 %v657, %v673
      %v676 = vor.u32 %v674, %v675
      %v677 = vsub.s32 4294967266, %v672
      %v678 = vadd.s32 %v677, 127
      %v679 = vshll.u32 %v678, 23
      %v680 = vor.u32 4788187, %v679
      %v681 = vand.u32 2147483647, %v680
      %v683 = vcvt.s32.f32 %v676
      %v684 = vmul.f32 %v683, %v681
      %v685 = vxor.u32 %v684, 2147483648
      %v686 = vsel %vm603, %v685, %v684
      %v687 = vsub.s32 4, %v663
      %v688 = vsel %vm603, %v687, %v663
      %v689 = vsel %vm602, %v424, %v686
      %v690 = vsel %vm602, 0, %v688
      %v691 = vcosq.f32.pop %v689
      %v692 = vsinq.f32.pop %v689
      %vm693 = vweird.f32 %v424
      %v694 = vadd.s32 %v690, 3
      %v695 = vand.u32 %v694, 3
      %vm696 = vcmp.lt.s32.totalorder %v695, 2
      %vm697 = vcmp.eq.s32.totalorder %v695, 0
      %v698 = vxor.u32 %v692, 2147483648
      %v699 = vsel %vm697, %v691, %v698
      %vm700 = vcmp.eq.s32.totalorder %v695, 2
      %v701 = vxor.u32 %v691, 2147483648
      %v702 = vsel %vm700, %v701, %v692
      %v703 = vsel %vm696, %v699, %v702
      %v704 = vsel %vm693, nan, %v703
      %v705 = vand.u32 2147483647, %v429
      %vm706 = vcmp.le.f32.partialorder %v705, 0.7853982
      %vm707 = vcmp.lt.s32.totalorder %v429, 0
      %v708 = vand.u32 %v429, 2139095040
      %v709 = vshrl.u32 %v708, 23
      %v710 = vsub.s32 %v709, 127
      %v711 = vand.u32 2147483647, %v429
      %v712 = vand.u32 %v711, 8388607
      %v713 = vor.u32 %v712, 8388608
      %v714 = vsub.s32 0, %v713
      %v715 = vadd.s32 %v710, 1
      %vm716 = vcmp.gt.s32.totalorder %v715, 0
      %v717 = vsel %vm716, %v715, 0
      %v718 = vshrl.u32 %v717, 5
      %v719 = vand.u32 %v717, 31
      %v720 = vsub.s32 32, %v719
      %v721 = vshrl.u32 683565275, %v720
      %v722 = vshll.u32 683565275, %v719
      %v723 = vshrl.u32 2475754826, %v720
      %v724 = vor.u32 %v722, %v723
      %v725 = vshll.u32 2475754826, %v719
      %v726 = vshrl.u32 2131351028, %v720
      %v727 = vor.u32 %v725, %v726
      %v728 = vshll.u32 2131351028, %v719
      %v729 = vshrl.u32 2102212464, %v720
      %v730 = vor.u32 %v728, %v729
      %v731 = vshll.u32 2102212464, %v719
      %v732 = vshrl.u32 920167782, %v720
      %v733 = vor.u32 %v731, %v732
      %v734 = vshll.u32 920167782, %v719
      %v735 = vshrl.u32 1326507024, %v720
      %v736 = vor.u32 %v734, %v735
      %vm737 = vcmp.lt.s32.totalorder %v718, 1
      %vm738 = vcmp.lt.s32.totalorder %v718, 2
      %vm739 = vcmp.lt.s32.totalorder %v718, 3
      %vm740 = vcmp.lt.s32.totalorder %v718, 4
      %v741 = vsel %vm737, %v721, %v724
      %v742 = vsel %vm740, %v730, 2102212464
      %v743 = vsel %vm739, %v727, %v742
      %v744 = vsel %vm738, %v741, %v743
      %v745 = vsel %vm737, %v724, %v727
      %v746 = vsel %vm740, %v733, 920167782
      %v747 = vsel %vm739, %v730, %v746
      %v748 = vsel %vm738, %v745, %v747
      %v749 = vsel %vm737, %v727, %v730
      %v750 = vsel %vm740, %v736, 1326507024
      %v751 = vsel %vm739, %v733, %v750
      %v752 = vsel %vm738, %v749, %v751
      %v753 = vshll.u32 %v713, 8
      %v754 = vmul.u32.u64.compose %v753, %v752
      %v755 = vextract.low.u32 %v754
      %v756 = vextract.high.u32 %v754
      %v757 = vmul.u32.u64.compose %v753, %v748
      %v758 = vextract.low.u32 %v757
      %v759 = vextract.high.u32 %v757
      %v760 = vmul.u32 %v753, %v744
      %v761 = vadd.s32 %v756, %v758
      %vm762 = vc.u32 %v756, %v758
      %v763 = vadd.s32 %v759, 1
      %v764 = vsel %vm762, %v763, %v759
      %v765 = vadd.s32 %v760, %v764
      %v766 = vadd.s32 %v765, 536870912
      %v767 = vshrl.u32 %v766, 30
      %v768 = vshll.u32 %v767, 30
      %v769 = vsub.s32 %v765, %v768
      %vm770 = vcmp.lt.s32.totalorder %v769, 0
      %v771 = vsub.s32 0, %v769
      %v772 = vsel %vm770, %v771, %v769
      %v773 = vclz %v772
      %v774 = vsub.s32 %v773, 2
      %vm775 = vcmp.gt.s32.totalorder 0, %v774
      %v776 = vsel %vm775, 0, %v774
      %v777 = vsub.s32 32, %v776
      %v778 = vshll.u32 %v769, %v776
      %v779 = vshrl.u32 %v761, %v777
      %v780 = vor.u32 %v778, %v779
      %v781 = vsub.s32 4294967266, %v776
      %v782 = vadd.s32 %v781, 127
      %v783 = vshll.u32 %v782, 23
      %v784 = vor.u32 4788187, %v783
      %v785 = vand.u32 2147483647, %v784
      %v787 = vcvt.s32.f32 %v780
      %v788 = vmul.f32 %v787, %v785
      %v789 = vxor.u32 %v788, 2147483648
      %v790 = vsel %vm707, %v789, %v788
      %v791 = vsub.s32 4, %v767
      %v792 = vsel %vm707, %v791, %v767
      %v793 = vsel %vm706, %v429, %v790
      %v794 = vsel %vm706, 0, %v792
      %v795 = vcosq.f32.pop %v793
      %v796 = vsinq.f32.pop %v793
      %vm797 = vweird.f32 %v429
      %v798 = vadd.s32 %v794, 3
      %v799 = vand.u32 %v798, 3
      %vm800 = vcmp.lt.s32.totalorder %v799, 2
      %vm801 = vcmp.eq.s32.totalorder %v799, 0
      %v802 = vxor.u32 %v796, 2147483648
      %v803 = vsel %vm801, %v795, %v802
      %vm804 = vcmp.eq.s32.totalorder %v799, 2
      %v805 = vxor.u32 %v795, 2147483648
      %v806 = vsel %vm804, %v805, %v796
      %v807 = vsel %vm800, %v803, %v806
      %v808 = vsel %vm797, nan, %v807
      %v809 = vand.u32 2147483647, %v434
      %vm810 = vcmp.le.f32.partialorder %v809, 0.7853982
      %vm811 = vcmp.lt.s32.totalorder %v434, 0
      %v812 = vand.u32 %v434, 2139095040
      %v813 = vshrl.u32 %v812, 23
      %v814 = vsub.s32 %v813, 127
      %v815 = vand.u32 2147483647, %v434
      %v816 = vand.u32 %v815, 8388607
      %v817 = vor.u32 %v816, 8388608
      %v818 = vsub.s32 0, %v817
      %v819 = vadd.s32 %v814, 1
      %vm820 = vcmp.gt.s32.totalorder %v819, 0
      %v821 = vsel %vm820, %v819, 0
      %v822 = vshrl.u32 %v821, 5
      %v823 = vand.u32 %v821, 31
      %v824 = vsub.s32 32, %v823
      %v825 = vshrl.u32 683565275, %v824
      %v826 = vshll.u32 683565275, %v823
      %v827 = vshrl.u32 2475754826, %v824
      %v828 = vor.u32 %v826, %v827
      %v829 = vshll.u32 2475754826, %v823
      %v830 = vshrl.u32 2131351028, %v824
      %v831 = vor.u32 %v829, %v830
      %v832 = vshll.u32 2131351028, %v823
      %v833 = vshrl.u32 2102212464, %v824
      %v834 = vor.u32 %v832, %v833
      %v835 = vshll.u32 2102212464, %v823
      %v836 = vshrl.u32 920167782, %v824
      %v837 = vor.u32 %v835, %v836
      %v838 = vshll.u32 920167782, %v823
      %v839 = vshrl.u32 1326507024, %v824
      %v840 = vor.u32 %v838, %v839
      %vm841 = vcmp.lt.s32.totalorder %v822, 1
      %vm842 = vcmp.lt.s32.totalorder %v822, 2
      %vm843 = vcmp.lt.s32.totalorder %v822, 3
      %vm844 = vcmp.lt.s32.totalorder %v822, 4
      %v845 = vsel %vm841, %v825, %v828
      %v846 = vsel %vm844, %v834, 2102212464
      %v847 = vsel %vm843, %v831, %v846
      %v848 = vsel %vm842, %v845, %v847
      %v849 = vsel %vm841, %v828, %v831
      %v850 = vsel %vm844, %v837, 920167782
      %v851 = vsel %vm843, %v834, %v850
      %v852 = vsel %vm842, %v849, %v851
      %v853 = vsel %vm841, %v831, %v834
      %v854 = vsel %vm844, %v840, 1326507024
      %v855 = vsel %vm843, %v837, %v854
      %v856 = vsel %vm842, %v853, %v855
      %v857 = vshll.u32 %v817, 8
      %v858 = vmul.u32.u64.compose %v857, %v856
      %v859 = vextract.low.u32 %v858
      %v860 = vextract.high.u32 %v858
      %v861 = vmul.u32.u64.compose %v857, %v852
      %v862 = vextract.low.u32 %v861
      %v863 = vextract.high.u32 %v861
      %v864 = vmul.u32 %v857, %v848
      %v865 = vadd.s32 %v860, %v862
      %vm866 = vc.u32 %v860, %v862
      %v867 = vadd.s32 %v863, 1
      %v868 = vsel %vm866, %v867, %v863
      %v869 = vadd.s32 %v864, %v868
      %v870 = vadd.s32 %v869, 536870912
      %v871 = vshrl.u32 %v870, 30
      %v872 = vshll.u32 %v871, 30
      %v873 = vsub.s32 %v869, %v872
      %vm874 = vcmp.lt.s32.totalorder %v873, 0
      %v875 = vsub.s32 0, %v873
      %v876 = vsel %vm874, %v875, %v873
      %v877 = vclz %v876
      %v878 = vsub.s32 %v877, 2
      %vm879 = vcmp.gt.s32.totalorder 0, %v878
      %v880 = vsel %vm879, 0, %v878
      %v881 = vsub.s32 32, %v880
      %v882 = vshll.u32 %v873, %v880
      %v883 = vshrl.u32 %v865, %v881
      %v884 = vor.u32 %v882, %v883
      %v885 = vsub.s32 4294967266, %v880
      %v886 = vadd.s32 %v885, 127
      %v887 = vshll.u32 %v886, 23
      %v888 = vor.u32 4788187, %v887
      %v889 = vand.u32 2147483647, %v888
      %v891 = vcvt.s32.f32 %v884
      %v892 = vmul.f32 %v891, %v889
      %v893 = vxor.u32 %v892, 2147483648
      %v894 = vsel %vm811, %v893, %v892
      %v895 = vsub.s32 4, %v871
      %v896 = vsel %vm811, %v895, %v871
      %v897 = vsel %vm810, %v434, %v894
      %v898 = vsel %vm810, 0, %v896
      %v899 = vcosq.f32.pop %v897
      %v900 = vsinq.f32.pop %v897
      %vm901 = vweird.f32 %v434
      %v902 = vadd.s32 %v898, 3
      %v903 = vand.u32 %v902, 3
      %vm904 = vcmp.lt.s32.totalorder %v903, 2
      %vm905 = vcmp.eq.s32.totalorder %v903, 0
      %v906 = vxor.u32 %v900, 2147483648
      %v907 = vsel %vm905, %v899, %v906
      %vm908 = vcmp.eq.s32.totalorder %v903, 2
      %v909 = vxor.u32 %v899, 2147483648
      %v910 = vsel %vm908, %v909, %v900
      %v911 = vsel %vm904, %v907, %v910
      %v912 = vsel %vm901, nan, %v911
      %v913 = vand.u32 2147483647, %v439
      %vm914 = vcmp.le.f32.partialorder %v913, 0.7853982
      %vm915 = vcmp.lt.s32.totalorder %v439, 0
      %v916 = vand.u32 %v439, 2139095040
      %v917 = vshrl.u32 %v916, 23
      %v918 = vsub.s32 %v917, 127
      %v919 = vand.u32 2147483647, %v439
      %v920 = vand.u32 %v919, 8388607
      %v921 = vor.u32 %v920, 8388608
      %v922 = vsub.s32 0, %v921
      %v923 = vadd.s32 %v918, 1
      %vm924 = vcmp.gt.s32.totalorder %v923, 0
      %v925 = vsel %vm924, %v923, 0
      %v926 = vshrl.u32 %v925, 5
      %v927 = vand.u32 %v925, 31
      %v928 = vsub.s32 32, %v927
      %v929 = vshrl.u32 683565275, %v928
      %v930 = vshll.u32 683565275, %v927
      %v931 = vshrl.u32 2475754826, %v928
      %v932 = vor.u32 %v930, %v931
      %v933 = vshll.u32 2475754826, %v927
      %v934 = vshrl.u32 2131351028, %v928
      %v935 = vor.u32 %v933, %v934
      %v936 = vshll.u32 2131351028, %v927
      %v937 = vshrl.u32 2102212464, %v928
      %v938 = vor.u32 %v936, %v937
      %v939 = vshll.u32 2102212464, %v927
      %v940 = vshrl.u32 920167782, %v928
      %v941 = vor.u32 %v939, %v940
      %v942 = vshll.u32 920167782, %v927
      %v943 = vshrl.u32 1326507024, %v928
      %v944 = vor.u32 %v942, %v943
      %vm945 = vcmp.lt.s32.totalorder %v926, 1
      %vm946 = vcmp.lt.s32.totalorder %v926, 2
      %vm947 = vcmp.lt.s32.totalorder %v926, 3
      %vm948 = vcmp.lt.s32.totalorder %v926, 4
      %v949 = vsel %vm945, %v929, %v932
      %v950 = vsel %vm948, %v938, 2102212464
      %v951 = vsel %vm947, %v935, %v950
      %v952 = vsel %vm946, %v949, %v951
      %v953 = vsel %vm945, %v932, %v935
      %v954 = vsel %vm948, %v941, 920167782
      %v955 = vsel %vm947, %v938, %v954
      %v956 = vsel %vm946, %v953, %v955
      %v957 = vsel %vm945, %v935, %v938
      %v958 = vsel %vm948, %v944, 1326507024
      %v959 = vsel %vm947, %v941, %v958
      %v960 = vsel %vm946, %v957, %v959
      %v961 = vshll.u32 %v921, 8
      %v962 = vmul.u32.u64.compose %v961, %v960
      %v963 = vextract.low.u32 %v962
      %v964 = vextract.high.u32 %v962
      %v965 = vmul.u32.u64.compose %v961, %v956
      %v966 = vextract.low.u32 %v965
      %v967 = vextract.high.u32 %v965
      %v968 = vmul.u32 %v961, %v952
      %v969 = vadd.s32 %v964, %v966
      %vm970 = vc.u32 %v964, %v966
      %v971 = vadd.s32 %v967, 1
      %v972 = vsel %vm970, %v971, %v967
      %v973 = vadd.s32 %v968, %v972
      %v974 = vadd.s32 %v973, 536870912
      %v975 = vshrl.u32 %v974, 30
      %v976 = vshll.u32 %v975, 30
      %v977 = vsub.s32 %v973, %v976
      %vm978 = vcmp.lt.s32.totalorder %v977, 0
      %v979 = vsub.s32 0, %v977
      %v980 = vsel %vm978, %v979, %v977
      %v981 = vclz %v980
      %v982 = vsub.s32 %v981, 2
      %vm983 = vcmp.gt.s32.totalorder 0, %v982
      %v984 = vsel %vm983, 0, %v982
      %v985 = vsub.s32 32, %v984
      %v986 = vshll.u32 %v977, %v984
      %v987 = vshrl.u32 %v969, %v985
      %v988 = vor.u32 %v986, %v987
      %v989 = vsub.s32 4294967266, %v984
      %v990 = vadd.s32 %v989, 127
      %v991 = vshll.u32 %v990, 23
      %v992 = vor.u32 4788187, %v991
      %v993 = vand.u32 2147483647, %v992
      %v995 = vcvt.s32.f32 %v988
      %v996 = vmul.f32 %v995, %v993
      %v997 = vxor.u32 %v996, 2147483648
      %v998 = vsel %vm915, %v997, %v996
      %v999 = vsub.s32 4, %v975
      %v1000 = vsel %vm915, %v999, %v975
      %v1001 = vsel %vm914, %v439, %v998
      %v1002 = vsel %vm914, 0, %v1000
      %v1003 = vcosq.f32.pop %v1001
      %v1004 = vsinq.f32.pop %v1001
      %vm1005 = vweird.f32 %v439
      %v1006 = vadd.s32 %v1002, 3
      %v1007 = vand.u32 %v1006, 3
      %vm1008 = vcmp.lt.s32.totalorder %v1007, 2
      %vm1009 = vcmp.eq.s32.totalorder %v1007, 0
      %v1010 = vxor.u32 %v1004, 2147483648
      %v1011 = vsel %vm1009, %v1003, %v1010
      %vm1012 = vcmp.eq.s32.totalorder %v1007, 2
      %v1013 = vxor.u32 %v1003, 2147483648
      %v1014 = vsel %vm1012, %v1013, %v1004
      %v1015 = vsel %vm1008, %v1011, %v1014
      %v1016 = vsel %vm1005, nan, %v1015
      %v1017 = vand.u32 2147483647, %v444
      %vm1018 = vcmp.le.f32.partialorder %v1017, 0.7853982
      %vm1019 = vcmp.lt.s32.totalorder %v444, 0
      %v1020 = vand.u32 %v444, 2139095040
      %v1021 = vshrl.u32 %v1020, 23
      %v1022 = vsub.s32 %v1021, 127
      %v1023 = vand.u32 2147483647, %v444
      %v1024 = vand.u32 %v1023, 8388607
      %v1025 = vor.u32 %v1024, 8388608
      %v1026 = vsub.s32 0, %v1025
      %v1027 = vadd.s32 %v1022, 1
      %vm1028 = vcmp.gt.s32.totalorder %v1027, 0
      %v1029 = vsel %vm1028, %v1027, 0
      %v1030 = vshrl.u32 %v1029, 5
      %v1031 = vand.u32 %v1029, 31
      %v1032 = vsub.s32 32, %v1031
      %v1033 = vshrl.u32 683565275, %v1032
      %v1034 = vshll.u32 683565275, %v1031
      %v1035 = vshrl.u32 2475754826, %v1032
      %v1036 = vor.u32 %v1034, %v1035
      %v1037 = vshll.u32 2475754826, %v1031
      %v1038 = vshrl.u32 2131351028, %v1032
      %v1039 = vor.u32 %v1037, %v1038
      %v1040 = vshll.u32 2131351028, %v1031
      %v1041 = vshrl.u32 2102212464, %v1032
      %v1042 = vor.u32 %v1040, %v1041
      %v1043 = vshll.u32 2102212464, %v1031
      %v1044 = vshrl.u32 920167782, %v1032
      %v1045 = vor.u32 %v1043, %v1044
      %v1046 = vshll.u32 920167782, %v1031
      %v1047 = vshrl.u32 1326507024, %v1032
      %v1048 = vor.u32 %v1046, %v1047
      %vm1049 = vcmp.lt.s32.totalorder %v1030, 1
      %vm1050 = vcmp.lt.s32.totalorder %v1030, 2
      %vm1051 = vcmp.lt.s32.totalorder %v1030, 3
      %vm1052 = vcmp.lt.s32.totalorder %v1030, 4
      %v1053 = vsel %vm1049, %v1033, %v1036
      %v1054 = vsel %vm1052, %v1042, 2102212464
      %v1055 = vsel %vm1051, %v1039, %v1054
      %v1056 = vsel %vm1050, %v1053, %v1055
      %v1057 = vsel %vm1049, %v1036, %v1039
      %v1058 = vsel %vm1052, %v1045, 920167782
      %v1059 = vsel %vm1051, %v1042, %v1058
      %v1060 = vsel %vm1050, %v1057, %v1059
      %v1061 = vsel %vm1049, %v1039, %v1042
      %v1062 = vsel %vm1052, %v1048, 1326507024
      %v1063 = vsel %vm1051, %v1045, %v1062
      %v1064 = vsel %vm1050, %v1061, %v1063
      %v1065 = vshll.u32 %v1025, 8
      %v1066 = vmul.u32.u64.compose %v1065, %v1064
      %v1067 = vextract.low.u32 %v1066
      %v1068 = vextract.high.u32 %v1066
      %v1069 = vmul.u32.u64.compose %v1065, %v1060
      %v1070 = vextract.low.u32 %v1069
      %v1071 = vextract.high.u32 %v1069
      %v1072 = vmul.u32 %v1065, %v1056
      %v1073 = vadd.s32 %v1068, %v1070
      %vm1074 = vc.u32 %v1068, %v1070
      %v1075 = vadd.s32 %v1071, 1
      %v1076 = vsel %vm1074, %v1075, %v1071
      %v1077 = vadd.s32 %v1072, %v1076
      %v1078 = vadd.s32 %v1077, 536870912
      %v1079 = vshrl.u32 %v1078, 30
      %v1080 = vshll.u32 %v1079, 30
      %v1081 = vsub.s32 %v1077, %v1080
      %vm1082 = vcmp.lt.s32.totalorder %v1081, 0
      %v1083 = vsub.s32 0, %v1081
      %v1084 = vsel %vm1082, %v1083, %v1081
      %v1085 = vclz %v1084
      %v1086 = vsub.s32 %v1085, 2
      %vm1087 = vcmp.gt.s32.totalorder 0, %v1086
      %v1088 = vsel %vm1087, 0, %v1086
      %v1089 = vsub.s32 32, %v1088
      %v1090 = vshll.u32 %v1081, %v1088
      %v1091 = vshrl.u32 %v1073, %v1089
      %v1092 = vor.u32 %v1090, %v1091
      %v1093 = vsub.s32 4294967266, %v1088
      %v1094 = vadd.s32 %v1093, 127
      %v1095 = vshll.u32 %v1094, 23
      %v1096 = vor.u32 4788187, %v1095
      %v1097 = vand.u32 2147483647, %v1096
      %v1099 = vcvt.s32.f32 %v1092
      %v1100 = vmul.f32 %v1099, %v1097
      %v1101 = vxor.u32 %v1100, 2147483648
      %v1102 = vsel %vm1019, %v1101, %v1100
      %v1103 = vsub.s32 4, %v1079
      %v1104 = vsel %vm1019, %v1103, %v1079
      %v1105 = vsel %vm1018, %v444, %v1102
      %v1106 = vsel %vm1018, 0, %v1104
      %v1107 = vcosq.f32.pop %v1105
      %v1108 = vsinq.f32.pop %v1105
      %vm1109 = vweird.f32 %v444
      %v1110 = vadd.s32 %v1106, 3
      %v1111 = vand.u32 %v1110, 3
      %vm1112 = vcmp.lt.s32.totalorder %v1111, 2
      %vm1113 = vcmp.eq.s32.totalorder %v1111, 0
      %v1114 = vxor.u32 %v1108, 2147483648
      %v1115 = vsel %vm1113, %v1107, %v1114
      %vm1116 = vcmp.eq.s32.totalorder %v1111, 2
      %v1117 = vxor.u32 %v1107, 2147483648
      %v1118 = vsel %vm1116, %v1117, %v1108
      %v1119 = vsel %vm1112, %v1115, %v1118
      %v1120 = vsel %vm1109, nan, %v1119
      %v1121 = vand.u32 2147483647, %v449
      %vm1122 = vcmp.le.f32.partialorder %v1121, 0.7853982
      %vm1123 = vcmp.lt.s32.totalorder %v449, 0
      %v1124 = vand.u32 %v449, 2139095040
      %v1125 = vshrl.u32 %v1124, 23
      %v1126 = vsub.s32 %v1125, 127
      %v1127 = vand.u32 2147483647, %v449
      %v1128 = vand.u32 %v1127, 8388607
      %v1129 = vor.u32 %v1128, 8388608
      %v1130 = vsub.s32 0, %v1129
      %v1131 = vadd.s32 %v1126, 1
      %vm1132 = vcmp.gt.s32.totalorder %v1131, 0
      %v1133 = vsel %vm1132, %v1131, 0
      %v1134 = vshrl.u32 %v1133, 5
      %v1135 = vand.u32 %v1133, 31
      %v1136 = vsub.s32 32, %v1135
      %v1137 = vshrl.u32 683565275, %v1136
      %v1138 = vshll.u32 683565275, %v1135
      %v1139 = vshrl.u32 2475754826, %v1136
      %v1140 = vor.u32 %v1138, %v1139
      %v1141 = vshll.u32 2475754826, %v1135
      %v1142 = vshrl.u32 2131351028, %v1136
      %v1143 = vor.u32 %v1141, %v1142
      %v1144 = vshll.u32 2131351028, %v1135
      %v1145 = vshrl.u32 2102212464, %v1136
      %v1146 = vor.u32 %v1144, %v1145
      %v1147 = vshll.u32 2102212464, %v1135
      %v1148 = vshrl.u32 920167782, %v1136
      %v1149 = vor.u32 %v1147, %v1148
      %v1150 = vshll.u32 920167782, %v1135
      %v1151 = vshrl.u32 1326507024, %v1136
      %v1152 = vor.u32 %v1150, %v1151
      %vm1153 = vcmp.lt.s32.totalorder %v1134, 1
      %vm1154 = vcmp.lt.s32.totalorder %v1134, 2
      %vm1155 = vcmp.lt.s32.totalorder %v1134, 3
      %vm1156 = vcmp.lt.s32.totalorder %v1134, 4
      %v1157 = vsel %vm1153, %v1137, %v1140
      %v1158 = vsel %vm1156, %v1146, 2102212464
      %v1159 = vsel %vm1155, %v1143, %v1158
      %v1160 = vsel %vm1154, %v1157, %v1159
      %v1161 = vsel %vm1153, %v1140, %v1143
      %v1162 = vsel %vm1156, %v1149, 920167782
      %v1163 = vsel %vm1155, %v1146, %v1162
      %v1164 = vsel %vm1154, %v1161, %v1163
      %v1165 = vsel %vm1153, %v1143, %v1146
      %v1166 = vsel %vm1156, %v1152, 1326507024
      %v1167 = vsel %vm1155, %v1149, %v1166
      %v1168 = vsel %vm1154, %v1165, %v1167
      %v1169 = vshll.u32 %v1129, 8
      %v1170 = vmul.u32.u64.compose %v1169, %v1168
      %v1171 = vextract.low.u32 %v1170
      %v1172 = vextract.high.u32 %v1170
      %v1173 = vmul.u32.u64.compose %v1169, %v1164
      %v1174 = vextract.low.u32 %v1173
      %v1175 = vextract.high.u32 %v1173
      %v1176 = vmul.u32 %v1169, %v1160
      %v1177 = vadd.s32 %v1172, %v1174
      %vm1178 = vc.u32 %v1172, %v1174
      %v1179 = vadd.s32 %v1175, 1
      %v1180 = vsel %vm1178, %v1179, %v1175
      %v1181 = vadd.s32 %v1176, %v1180
      %v1182 = vadd.s32 %v1181, 536870912
      %v1183 = vshrl.u32 %v1182, 30
      %v1184 = vshll.u32 %v1183, 30
      %v1185 = vsub.s32 %v1181, %v1184
      %vm1186 = vcmp.lt.s32.totalorder %v1185, 0
      %v1187 = vsub.s32 0, %v1185
      %v1188 = vsel %vm1186, %v1187, %v1185
      %v1189 = vclz %v1188
      %v1190 = vsub.s32 %v1189, 2
      %vm1191 = vcmp.gt.s32.totalorder 0, %v1190
      %v1192 = vsel %vm1191, 0, %v1190
      %v1193 = vsub.s32 32, %v1192
      %v1194 = vshll.u32 %v1185, %v1192
      %v1195 = vshrl.u32 %v1177, %v1193
      %v1196 = vor.u32 %v1194, %v1195
      %v1197 = vsub.s32 4294967266, %v1192
      %v1198 = vadd.s32 %v1197, 127
      %v1199 = vshll.u32 %v1198, 23
      %v1200 = vor.u32 4788187, %v1199
      %v1201 = vand.u32 2147483647, %v1200
      %v1203 = vcvt.s32.f32 %v1196
      %v1204 = vmul.f32 %v1203, %v1201
      %v1205 = vxor.u32 %v1204, 2147483648
      %v1206 = vsel %vm1123, %v1205, %v1204
      %v1207 = vsub.s32 4, %v1183
      %v1208 = vsel %vm1123, %v1207, %v1183
      %v1209 = vsel %vm1122, %v449, %v1206
      %v1210 = vsel %vm1122, 0, %v1208
      %v1211 = vcosq.f32.pop %v1209
      %v1212 = vsinq.f32.pop %v1209
      %vm1213 = vweird.f32 %v449
      %v1214 = vadd.s32 %v1210, 3
      %v1215 = vand.u32 %v1214, 3
      %vm1216 = vcmp.lt.s32.totalorder %v1215, 2
      %vm1217 = vcmp.eq.s32.totalorder %v1215, 0
      %v1218 = vxor.u32 %v1212, 2147483648
      %v1219 = vsel %vm1217, %v1211, %v1218
      %vm1220 = vcmp.eq.s32.totalorder %v1215, 2
      %v1221 = vxor.u32 %v1211, 2147483648
      %v1222 = vsel %vm1220, %v1221, %v1212
      %v1223 = vsel %vm1216, %v1219, %v1222
      %v1224 = vsel %vm1213, nan, %v1223
      %v1225 = vand.u32 2147483647, %v454
      %vm1226 = vcmp.le.f32.partialorder %v1225, 0.7853982
      %vm1227 = vcmp.lt.s32.totalorder %v454, 0
      %v1228 = vand.u32 %v454, 2139095040
      %v1229 = vshrl.u32 %v1228, 23
      %v1230 = vsub.s32 %v1229, 127
      %v1231 = vand.u32 2147483647, %v454
      %v1232 = vand.u32 %v1231, 8388607
      %v1233 = vor.u32 %v1232, 8388608
      %v1234 = vsub.s32 0, %v1233
      %v1235 = vadd.s32 %v1230, 1
      %vm1236 = vcmp.gt.s32.totalorder %v1235, 0
      %v1237 = vsel %vm1236, %v1235, 0
      %v1238 = vshrl.u32 %v1237, 5
      %v1239 = vand.u32 %v1237, 31
      %v1240 = vsub.s32 32, %v1239
      %v1241 = vshrl.u32 683565275, %v1240
      %v1242 = vshll.u32 683565275, %v1239
      %v1243 = vshrl.u32 2475754826, %v1240
      %v1244 = vor.u32 %v1242, %v1243
      %v1245 = vshll.u32 2475754826, %v1239
      %v1246 = vshrl.u32 2131351028, %v1240
      %v1247 = vor.u32 %v1245, %v1246
      %v1248 = vshll.u32 2131351028, %v1239
      %v1249 = vshrl.u32 2102212464, %v1240
      %v1250 = vor.u32 %v1248, %v1249
      %v1251 = vshll.u32 2102212464, %v1239
      %v1252 = vshrl.u32 920167782, %v1240
      %v1253 = vor.u32 %v1251, %v1252
      %v1254 = vshll.u32 920167782, %v1239
      %v1255 = vshrl.u32 1326507024, %v1240
      %v1256 = vor.u32 %v1254, %v1255
      %vm1257 = vcmp.lt.s32.totalorder %v1238, 1
      %vm1258 = vcmp.lt.s32.totalorder %v1238, 2
      %vm1259 = vcmp.lt.s32.totalorder %v1238, 3
      %vm1260 = vcmp.lt.s32.totalorder %v1238, 4
      %v1261 = vsel %vm1257, %v1241, %v1244
      %v1262 = vsel %vm1260, %v1250, 2102212464
      %v1263 = vsel %vm1259, %v1247, %v1262
      %v1264 = vsel %vm1258, %v1261, %v1263
      %v1265 = vsel %vm1257, %v1244, %v1247
      %v1266 = vsel %vm1260, %v1253, 920167782
      %v1267 = vsel %vm1259, %v1250, %v1266
      %v1268 = vsel %vm1258, %v1265, %v1267
      %v1269 = vsel %vm1257, %v1247, %v1250
      %v1270 = vsel %vm1260, %v1256, 1326507024
      %v1271 = vsel %vm1259, %v1253, %v1270
      %v1272 = vsel %vm1258, %v1269, %v1271
      %v1273 = vshll.u32 %v1233, 8
      %v1274 = vmul.u32.u64.compose %v1273, %v1272
      %v1275 = vextract.low.u32 %v1274
      %v1276 = vextract.high.u32 %v1274
      %v1277 = vmul.u32.u64.compose %v1273, %v1268
      %v1278 = vextract.low.u32 %v1277
      %v1279 = vextract.high.u32 %v1277
      %v1280 = vmul.u32 %v1273, %v1264
      %v1281 = vadd.s32 %v1276, %v1278
      %vm1282 = vc.u32 %v1276, %v1278
      %v1283 = vadd.s32 %v1279, 1
      %v1284 = vsel %vm1282, %v1283, %v1279
      %v1285 = vadd.s32 %v1280, %v1284
      %v1286 = vadd.s32 %v1285, 536870912
      %v1287 = vshrl.u32 %v1286, 30
      %v1288 = vshll.u32 %v1287, 30
      %v1289 = vsub.s32 %v1285, %v1288
      %vm1290 = vcmp.lt.s32.totalorder %v1289, 0
      %v1291 = vsub.s32 0, %v1289
      %v1292 = vsel %vm1290, %v1291, %v1289
      %v1293 = vclz %v1292
      %v1294 = vsub.s32 %v1293, 2
      %vm1295 = vcmp.gt.s32.totalorder 0, %v1294
      %v1296 = vsel %vm1295, 0, %v1294
      %v1297 = vsub.s32 32, %v1296
      %v1298 = vshll.u32 %v1289, %v1296
      %v1299 = vshrl.u32 %v1281, %v1297
      %v1300 = vor.u32 %v1298, %v1299
      %v1301 = vsub.s32 4294967266, %v1296
      %v1302 = vadd.s32 %v1301, 127
      %v1303 = vshll.u32 %v1302, 23
      %v1304 = vor.u32 4788187, %v1303
      %v1305 = vand.u32 2147483647, %v1304
      %v1307 = vcvt.s32.f32 %v1300
      %v1308 = vmul.f32 %v1307, %v1305
      %v1309 = vxor.u32 %v1308, 2147483648
      %v1310 = vsel %vm1227, %v1309, %v1308
      %v1311 = vsub.s32 4, %v1287
      %v1312 = vsel %vm1227, %v1311, %v1287
      %v1313 = vsel %vm1226, %v454, %v1310
      %v1314 = vsel %vm1226, 0, %v1312
      %v1315 = vcosq.f32.pop %v1313
      %v1316 = vsinq.f32.pop %v1313
      %vm1317 = vweird.f32 %v454
      %v1318 = vadd.s32 %v1314, 3
      %v1319 = vand.u32 %v1318, 3
      %vm1320 = vcmp.lt.s32.totalorder %v1319, 2
      %vm1321 = vcmp.eq.s32.totalorder %v1319, 0
      %v1322 = vxor.u32 %v1316, 2147483648
      %v1323 = vsel %vm1321, %v1315, %v1322
      %vm1324 = vcmp.eq.s32.totalorder %v1319, 2
      %v1325 = vxor.u32 %v1315, 2147483648
      %v1326 = vsel %vm1324, %v1325, %v1316
      %v1327 = vsel %vm1320, %v1323, %v1326
      %v1328 = vsel %vm1317, nan, %v1327
      %v1329 = vand.u32 2147483647, %v459
      %vm1330 = vcmp.le.f32.partialorder %v1329, 0.7853982
      %vm1331 = vcmp.lt.s32.totalorder %v459, 0
      %v1332 = vand.u32 %v459, 2139095040
      %v1333 = vshrl.u32 %v1332, 23
      %v1334 = vsub.s32 %v1333, 127
      %v1335 = vand.u32 2147483647, %v459
      %v1336 = vand.u32 %v1335, 8388607
      %v1337 = vor.u32 %v1336, 8388608
      %v1338 = vsub.s32 0, %v1337
      %v1339 = vadd.s32 %v1334, 1
      %vm1340 = vcmp.gt.s32.totalorder %v1339, 0
      %v1341 = vsel %vm1340, %v1339, 0
      %v1342 = vshrl.u32 %v1341, 5
      %v1343 = vand.u32 %v1341, 31
      %v1344 = vsub.s32 32, %v1343
      %v1345 = vshrl.u32 683565275, %v1344
      %v1346 = vshll.u32 683565275, %v1343
      %v1347 = vshrl.u32 2475754826, %v1344
      %v1348 = vor.u32 %v1346, %v1347
      %v1349 = vshll.u32 2475754826, %v1343
      %v1350 = vshrl.u32 2131351028, %v1344
      %v1351 = vor.u32 %v1349, %v1350
      %v1352 = vshll.u32 2131351028, %v1343
      %v1353 = vshrl.u32 2102212464, %v1344
      %v1354 = vor.u32 %v1352, %v1353
      %v1355 = vshll.u32 2102212464, %v1343
      %v1356 = vshrl.u32 920167782, %v1344
      %v1357 = vor.u32 %v1355, %v1356
      %v1358 = vshll.u32 920167782, %v1343
      %v1359 = vshrl.u32 1326507024, %v1344
      %v1360 = vor.u32 %v1358, %v1359
      %vm1361 = vcmp.lt.s32.totalorder %v1342, 1
      %vm1362 = vcmp.lt.s32.totalorder %v1342, 2
      %vm1363 = vcmp.lt.s32.totalorder %v1342, 3
      %vm1364 = vcmp.lt.s32.totalorder %v1342, 4
      %v1365 = vsel %vm1361, %v1345, %v1348
      %v1366 = vsel %vm1364, %v1354, 2102212464
      %v1367 = vsel %vm1363, %v1351, %v1366
      %v1368 = vsel %vm1362, %v1365, %v1367
      %v1369 = vsel %vm1361, %v1348, %v1351
      %v1370 = vsel %vm1364, %v1357, 920167782
      %v1371 = vsel %vm1363, %v1354, %v1370
      %v1372 = vsel %vm1362, %v1369, %v1371
      %v1373 = vsel %vm1361, %v1351, %v1354
      %v1374 = vsel %vm1364, %v1360, 1326507024
      %v1375 = vsel %vm1363, %v1357, %v1374
      %v1376 = vsel %vm1362, %v1373, %v1375
      %v1377 = vshll.u32 %v1337, 8
      %v1378 = vmul.u32.u64.compose %v1377, %v1376
      %v1379 = vextract.low.u32 %v1378
      %v1380 = vextract.high.u32 %v1378
      %v1381 = vmul.u32.u64.compose %v1377, %v1372
      %v1382 = vextract.low.u32 %v1381
      %v1383 = vextract.high.u32 %v1381
      %v1384 = vmul.u32 %v1377, %v1368
      %v1385 = vadd.s32 %v1380, %v1382
      %vm1386 = vc.u32 %v1380, %v1382
      %v1387 = vadd.s32 %v1383, 1
      %v1388 = vsel %vm1386, %v1387, %v1383
      %v1389 = vadd.s32 %v1384, %v1388
      %v1390 = vadd.s32 %v1389, 536870912
      %v1391 = vshrl.u32 %v1390, 30
      %v1392 = vshll.u32 %v1391, 30
      %v1393 = vsub.s32 %v1389, %v1392
      %vm1394 = vcmp.lt.s32.totalorder %v1393, 0
      %v1395 = vsub.s32 0, %v1393
      %v1396 = vsel %vm1394, %v1395, %v1393
      %v1397 = vclz %v1396
      %v1398 = vsub.s32 %v1397, 2
      %vm1399 = vcmp.gt.s32.totalorder 0, %v1398
      %v1400 = vsel %vm1399, 0, %v1398
      %v1401 = vsub.s32 32, %v1400
      %v1402 = vshll.u32 %v1393, %v1400
      %v1403 = vshrl.u32 %v1385, %v1401
      %v1404 = vor.u32 %v1402, %v1403
      %v1405 = vsub.s32 4294967266, %v1400
      %v1406 = vadd.s32 %v1405, 127
      %v1407 = vshll.u32 %v1406, 23
      %v1408 = vor.u32 4788187, %v1407
      %v1409 = vand.u32 2147483647, %v1408
      %v1411 = vcvt.s32.f32 %v1404
      %v1412 = vmul.f32 %v1411, %v1409
      %v1413 = vxor.u32 %v1412, 2147483648
      %v1414 = vsel %vm1331, %v1413, %v1412
      %v1415 = vsub.s32 4, %v1391
      %v1416 = vsel %vm1331, %v1415, %v1391
      %v1417 = vsel %vm1330, %v459, %v1414
      %v1418 = vsel %vm1330, 0, %v1416
      %v1419 = vcosq.f32.pop %v1417
      %v1420 = vsinq.f32.pop %v1417
      %vm1421 = vweird.f32 %v459
      %v1422 = vadd.s32 %v1418, 3
      %v1423 = vand.u32 %v1422, 3
      %vm1424 = vcmp.lt.s32.totalorder %v1423, 2
      %vm1425 = vcmp.eq.s32.totalorder %v1423, 0
      %v1426 = vxor.u32 %v1420, 2147483648
      %v1427 = vsel %vm1425, %v1419, %v1426
      %vm1428 = vcmp.eq.s32.totalorder %v1423, 2
      %v1429 = vxor.u32 %v1419, 2147483648
      %v1430 = vsel %vm1428, %v1429, %v1420
      %v1431 = vsel %vm1424, %v1427, %v1430
      %v1432 = vsel %vm1421, nan, %v1431
      %v1433 = vand.u32 2147483647, %v464
      %vm1434 = vcmp.le.f32.partialorder %v1433, 0.7853982
      %vm1435 = vcmp.lt.s32.totalorder %v464, 0
      %v1436 = vand.u32 %v464, 2139095040
      %v1437 = vshrl.u32 %v1436, 23
      %v1438 = vsub.s32 %v1437, 127
      %v1439 = vand.u32 2147483647, %v464
      %v1440 = vand.u32 %v1439, 8388607
      %v1441 = vor.u32 %v1440, 8388608
      %v1442 = vsub.s32 0, %v1441
      %v1443 = vadd.s32 %v1438, 1
      %vm1444 = vcmp.gt.s32.totalorder %v1443, 0
      %v1445 = vsel %vm1444, %v1443, 0
      %v1446 = vshrl.u32 %v1445, 5
      %v1447 = vand.u32 %v1445, 31
      %v1448 = vsub.s32 32, %v1447
      %v1449 = vshrl.u32 683565275, %v1448
      %v1450 = vshll.u32 683565275, %v1447
      %v1451 = vshrl.u32 2475754826, %v1448
      %v1452 = vor.u32 %v1450, %v1451
      %v1453 = vshll.u32 2475754826, %v1447
      %v1454 = vshrl.u32 2131351028, %v1448
      %v1455 = vor.u32 %v1453, %v1454
      %v1456 = vshll.u32 2131351028, %v1447
      %v1457 = vshrl.u32 2102212464, %v1448
      %v1458 = vor.u32 %v1456, %v1457
      %v1459 = vshll.u32 2102212464, %v1447
      %v1460 = vshrl.u32 920167782, %v1448
      %v1461 = vor.u32 %v1459, %v1460
      %v1462 = vshll.u32 920167782, %v1447
      %v1463 = vshrl.u32 1326507024, %v1448
      %v1464 = vor.u32 %v1462, %v1463
      %vm1465 = vcmp.lt.s32.totalorder %v1446, 1
      %vm1466 = vcmp.lt.s32.totalorder %v1446, 2
      %vm1467 = vcmp.lt.s32.totalorder %v1446, 3
      %vm1468 = vcmp.lt.s32.totalorder %v1446, 4
      %v1469 = vsel %vm1465, %v1449, %v1452
      %v1470 = vsel %vm1468, %v1458, 2102212464
      %v1471 = vsel %vm1467, %v1455, %v1470
      %v1472 = vsel %vm1466, %v1469, %v1471
      %v1473 = vsel %vm1465, %v1452, %v1455
      %v1474 = vsel %vm1468, %v1461, 920167782
      %v1475 = vsel %vm1467, %v1458, %v1474
      %v1476 = vsel %vm1466, %v1473, %v1475
      %v1477 = vsel %vm1465, %v1455, %v1458
      %v1478 = vsel %vm1468, %v1464, 1326507024
      %v1479 = vsel %vm1467, %v1461, %v1478
      %v1480 = vsel %vm1466, %v1477, %v1479
      %v1481 = vshll.u32 %v1441, 8
      %v1482 = vmul.u32.u64.compose %v1481, %v1480
      %v1483 = vextract.low.u32 %v1482
      %v1484 = vextract.high.u32 %v1482
      %v1485 = vmul.u32.u64.compose %v1481, %v1476
      %v1486 = vextract.low.u32 %v1485
      %v1487 = vextract.high.u32 %v1485
      %v1488 = vmul.u32 %v1481, %v1472
      %v1489 = vadd.s32 %v1484, %v1486
      %vm1490 = vc.u32 %v1484, %v1486
      %v1491 = vadd.s32 %v1487, 1
      %v1492 = vsel %vm1490, %v1491, %v1487
      %v1493 = vadd.s32 %v1488, %v1492
      %v1494 = vadd.s32 %v1493, 536870912
      %v1495 = vshrl.u32 %v1494, 30
      %v1496 = vshll.u32 %v1495, 30
      %v1497 = vsub.s32 %v1493, %v1496
      %vm1498 = vcmp.lt.s32.totalorder %v1497, 0
      %v1499 = vsub.s32 0, %v1497
      %v1500 = vsel %vm1498, %v1499, %v1497
      %v1501 = vclz %v1500
      %v1502 = vsub.s32 %v1501, 2
      %vm1503 = vcmp.gt.s32.totalorder 0, %v1502
      %v1504 = vsel %vm1503, 0, %v1502
      %v1505 = vsub.s32 32, %v1504
      %v1506 = vshll.u32 %v1497, %v1504
      %v1507 = vshrl.u32 %v1489, %v1505
      %v1508 = vor.u32 %v1506, %v1507
      %v1509 = vsub.s32 4294967266, %v1504
      %v1510 = vadd.s32 %v1509, 127
      %v1511 = vshll.u32 %v1510, 23
      %v1512 = vor.u32 4788187, %v1511
      %v1513 = vand.u32 2147483647, %v1512
      %v1515 = vcvt.s32.f32 %v1508
      %v1516 = vmul.f32 %v1515, %v1513
      %v1517 = vxor.u32 %v1516, 2147483648
      %v1518 = vsel %vm1435, %v1517, %v1516
      %v1519 = vsub.s32 4, %v1495
      %v1520 = vsel %vm1435, %v1519, %v1495
      %v1521 = vsel %vm1434, %v464, %v1518
      %v1522 = vsel %vm1434, 0, %v1520
      %v1523 = vcosq.f32.pop %v1521
      %v1524 = vsinq.f32.pop %v1521
      %vm1525 = vweird.f32 %v464
      %v1526 = vadd.s32 %v1522, 3
      %v1527 = vand.u32 %v1526, 3
      %vm1528 = vcmp.lt.s32.totalorder %v1527, 2
      %vm1529 = vcmp.eq.s32.totalorder %v1527, 0
      %v1530 = vxor.u32 %v1524, 2147483648
      %v1531 = vsel %vm1529, %v1523, %v1530
      %vm1532 = vcmp.eq.s32.totalorder %v1527, 2
      %v1533 = vxor.u32 %v1523, 2147483648
      %v1534 = vsel %vm1532, %v1533, %v1524
      %v1535 = vsel %vm1528, %v1531, %v1534
      %v1536 = vsel %vm1525, nan, %v1535
      %v1537 = vand.u32 2147483647, %v469
      %vm1538 = vcmp.le.f32.partialorder %v1537, 0.7853982
      %vm1539 = vcmp.lt.s32.totalorder %v469, 0
      %v1540 = vand.u32 %v469, 2139095040
      %v1541 = vshrl.u32 %v1540, 23
      %v1542 = vsub.s32 %v1541, 127
      %v1543 = vand.u32 2147483647, %v469
      %v1544 = vand.u32 %v1543, 8388607
      %v1545 = vor.u32 %v1544, 8388608
      %v1546 = vsub.s32 0, %v1545
      %v1547 = vadd.s32 %v1542, 1
      %vm1548 = vcmp.gt.s32.totalorder %v1547, 0
      %v1549 = vsel %vm1548, %v1547, 0
      %v1550 = vshrl.u32 %v1549, 5
      %v1551 = vand.u32 %v1549, 31
      %v1552 = vsub.s32 32, %v1551
      %v1553 = vshrl.u32 683565275, %v1552
      %v1554 = vshll.u32 683565275, %v1551
      %v1555 = vshrl.u32 2475754826, %v1552
      %v1556 = vor.u32 %v1554, %v1555
      %v1557 = vshll.u32 2475754826, %v1551
      %v1558 = vshrl.u32 2131351028, %v1552
      %v1559 = vor.u32 %v1557, %v1558
      %v1560 = vshll.u32 2131351028, %v1551
      %v1561 = vshrl.u32 2102212464, %v1552
      %v1562 = vor.u32 %v1560, %v1561
      %v1563 = vshll.u32 2102212464, %v1551
      %v1564 = vshrl.u32 920167782, %v1552
      %v1565 = vor.u32 %v1563, %v1564
      %v1566 = vshll.u32 920167782, %v1551
      %v1567 = vshrl.u32 1326507024, %v1552
      %v1568 = vor.u32 %v1566, %v1567
      %vm1569 = vcmp.lt.s32.totalorder %v1550, 1
      %vm1570 = vcmp.lt.s32.totalorder %v1550, 2
      %vm1571 = vcmp.lt.s32.totalorder %v1550, 3
      %vm1572 = vcmp.lt.s32.totalorder %v1550, 4
      %v1573 = vsel %vm1569, %v1553, %v1556
      %v1574 = vsel %vm1572, %v1562, 2102212464
      %v1575 = vsel %vm1571, %v1559, %v1574
      %v1576 = vsel %vm1570, %v1573, %v1575
      %v1577 = vsel %vm1569, %v1556, %v1559
      %v1578 = vsel %vm1572, %v1565, 920167782
      %v1579 = vsel %vm1571, %v1562, %v1578
      %v1580 = vsel %vm1570, %v1577, %v1579
      %v1581 = vsel %vm1569, %v1559, %v1562
      %v1582 = vsel %vm1572, %v1568, 1326507024
      %v1583 = vsel %vm1571, %v1565, %v1582
      %v1584 = vsel %vm1570, %v1581, %v1583
      %v1585 = vshll.u32 %v1545, 8
      %v1586 = vmul.u32.u64.compose %v1585, %v1584
      %v1587 = vextract.low.u32 %v1586
      %v1588 = vextract.high.u32 %v1586
      %v1589 = vmul.u32.u64.compose %v1585, %v1580
      %v1590 = vextract.low.u32 %v1589
      %v1591 = vextract.high.u32 %v1589
      %v1592 = vmul.u32 %v1585, %v1576
      %v1593 = vadd.s32 %v1588, %v1590
      %vm1594 = vc.u32 %v1588, %v1590
      %v1595 = vadd.s32 %v1591, 1
      %v1596 = vsel %vm1594, %v1595, %v1591
      %v1597 = vadd.s32 %v1592, %v1596
      %v1598 = vadd.s32 %v1597, 536870912
      %v1599 = vshrl.u32 %v1598, 30
      %v1600 = vshll.u32 %v1599, 30
      %v1601 = vsub.s32 %v1597, %v1600
      %vm1602 = vcmp.lt.s32.totalorder %v1601, 0
      %v1603 = vsub.s32 0, %v1601
      %v1604 = vsel %vm1602, %v1603, %v1601
      %v1605 = vclz %v1604
      %v1606 = vsub.s32 %v1605, 2
      %vm1607 = vcmp.gt.s32.totalorder 0, %v1606
      %v1608 = vsel %vm1607, 0, %v1606
      %v1609 = vsub.s32 32, %v1608
      %v1610 = vshll.u32 %v1601, %v1608
      %v1611 = vshrl.u32 %v1593, %v1609
      %v1612 = vor.u32 %v1610, %v1611
      %v1613 = vsub.s32 4294967266, %v1608
      %v1614 = vadd.s32 %v1613, 127
      %v1615 = vshll.u32 %v1614, 23
      %v1616 = vor.u32 4788187, %v1615
      %v1617 = vand.u32 2147483647, %v1616
      %v1619 = vcvt.s32.f32 %v1612
      %v1620 = vmul.f32 %v1619, %v1617
      %v1621 = vxor.u32 %v1620, 2147483648
      %v1622 = vsel %vm1539, %v1621, %v1620
      %v1623 = vsub.s32 4, %v1599
      %v1624 = vsel %vm1539, %v1623, %v1599
      %v1625 = vsel %vm1538, %v469, %v1622
      %v1626 = vsel %vm1538, 0, %v1624
      %v1627 = vcosq.f32.pop %v1625
      %v1628 = vsinq.f32.pop %v1625
      %vm1629 = vweird.f32 %v469
      %v1630 = vadd.s32 %v1626, 3
      %v1631 = vand.u32 %v1630, 3
      %vm1632 = vcmp.lt.s32.totalorder %v1631, 2
      %vm1633 = vcmp.eq.s32.totalorder %v1631, 0
      %v1634 = vxor.u32 %v1628, 2147483648
      %v1635 = vsel %vm1633, %v1627, %v1634
      %vm1636 = vcmp.eq.s32.totalorder %v1631, 2
      %v1637 = vxor.u32 %v1627, 2147483648
      %v1638 = vsel %vm1636, %v1637, %v1628
      %v1639 = vsel %vm1632, %v1635, %v1638
      %v1640 = vsel %vm1629, nan, %v1639
      %v1641 = vand.u32 2147483647, %v474
      %vm1642 = vcmp.le.f32.partialorder %v1641, 0.7853982
      %vm1643 = vcmp.lt.s32.totalorder %v474, 0
      %v1644 = vand.u32 %v474, 2139095040
      %v1645 = vshrl.u32 %v1644, 23
      %v1646 = vsub.s32 %v1645, 127
      %v1647 = vand.u32 2147483647, %v474
      %v1648 = vand.u32 %v1647, 8388607
      %v1649 = vor.u32 %v1648, 8388608
      %v1650 = vsub.s32 0, %v1649
      %v1651 = vadd.s32 %v1646, 1
      %vm1652 = vcmp.gt.s32.totalorder %v1651, 0
      %v1653 = vsel %vm1652, %v1651, 0
      %v1654 = vshrl.u32 %v1653, 5
      %v1655 = vand.u32 %v1653, 31
      %v1656 = vsub.s32 32, %v1655
      %v1657 = vshrl.u32 683565275, %v1656
      %v1658 = vshll.u32 683565275, %v1655
      %v1659 = vshrl.u32 2475754826, %v1656
      %v1660 = vor.u32 %v1658, %v1659
      %v1661 = vshll.u32 2475754826, %v1655
      %v1662 = vshrl.u32 2131351028, %v1656
      %v1663 = vor.u32 %v1661, %v1662
      %v1664 = vshll.u32 2131351028, %v1655
      %v1665 = vshrl.u32 2102212464, %v1656
      %v1666 = vor.u32 %v1664, %v1665
      %v1667 = vshll.u32 2102212464, %v1655
      %v1668 = vshrl.u32 920167782, %v1656
      %v1669 = vor.u32 %v1667, %v1668
      %v1670 = vshll.u32 920167782, %v1655
      %v1671 = vshrl.u32 1326507024, %v1656
      %v1672 = vor.u32 %v1670, %v1671
      %vm1673 = vcmp.lt.s32.totalorder %v1654, 1
      %vm1674 = vcmp.lt.s32.totalorder %v1654, 2
      %vm1675 = vcmp.lt.s32.totalorder %v1654, 3
      %vm1676 = vcmp.lt.s32.totalorder %v1654, 4
      %v1677 = vsel %vm1673, %v1657, %v1660
      %v1678 = vsel %vm1676, %v1666, 2102212464
      %v1679 = vsel %vm1675, %v1663, %v1678
      %v1680 = vsel %vm1674, %v1677, %v1679
      %v1681 = vsel %vm1673, %v1660, %v1663
      %v1682 = vsel %vm1676, %v1669, 920167782
      %v1683 = vsel %vm1675, %v1666, %v1682
      %v1684 = vsel %vm1674, %v1681, %v1683
      %v1685 = vsel %vm1673, %v1663, %v1666
      %v1686 = vsel %vm1676, %v1672, 1326507024
      %v1687 = vsel %vm1675, %v1669, %v1686
      %v1688 = vsel %vm1674, %v1685, %v1687
      %v1689 = vshll.u32 %v1649, 8
      %v1690 = vmul.u32.u64.compose %v1689, %v1688
      %v1691 = vextract.low.u32 %v1690
      %v1692 = vextract.high.u32 %v1690
      %v1693 = vmul.u32.u64.compose %v1689, %v1684
      %v1694 = vextract.low.u32 %v1693
      %v1695 = vextract.high.u32 %v1693
      %v1696 = vmul.u32 %v1689, %v1680
      %v1697 = vadd.s32 %v1692, %v1694
      %vm1698 = vc.u32 %v1692, %v1694
      %v1699 = vadd.s32 %v1695, 1
      %v1700 = vsel %vm1698, %v1699, %v1695
      %v1701 = vadd.s32 %v1696, %v1700
      %v1702 = vadd.s32 %v1701, 536870912
      %v1703 = vshrl.u32 %v1702, 30
      %v1704 = vshll.u32 %v1703, 30
      %v1705 = vsub.s32 %v1701, %v1704
      %vm1706 = vcmp.lt.s32.totalorder %v1705, 0
      %v1707 = vsub.s32 0, %v1705
      %v1708 = vsel %vm1706, %v1707, %v1705
      %v1709 = vclz %v1708
      %v1710 = vsub.s32 %v1709, 2
      %vm1711 = vcmp.gt.s32.totalorder 0, %v1710
      %v1712 = vsel %vm1711, 0, %v1710
      %v1713 = vsub.s32 32, %v1712
      %v1714 = vshll.u32 %v1705, %v1712
      %v1715 = vshrl.u32 %v1697, %v1713
      %v1716 = vor.u32 %v1714, %v1715
      %v1717 = vsub.s32 4294967266, %v1712
      %v1718 = vadd.s32 %v1717, 127
      %v1719 = vshll.u32 %v1718, 23
      %v1720 = vor.u32 4788187, %v1719
      %v1721 = vand.u32 2147483647, %v1720
      %v1723 = vcvt.s32.f32 %v1716
      %v1724 = vmul.f32 %v1723, %v1721
      %v1725 = vxor.u32 %v1724, 2147483648
      %v1726 = vsel %vm1643, %v1725, %v1724
      %v1727 = vsub.s32 4, %v1703
      %v1728 = vsel %vm1643, %v1727, %v1703
      %v1729 = vsel %vm1642, %v474, %v1726
      %v1730 = vsel %vm1642, 0, %v1728
      %v1731 = vcosq.f32.pop %v1729
      %v1732 = vsinq.f32.pop %v1729
      %vm1733 = vweird.f32 %v474
      %v1734 = vadd.s32 %v1730, 3
      %v1735 = vand.u32 %v1734, 3
      %vm1736 = vcmp.lt.s32.totalorder %v1735, 2
      %vm1737 = vcmp.eq.s32.totalorder %v1735, 0
      %v1738 = vxor.u32 %v1732, 2147483648
      %v1739 = vsel %vm1737, %v1731, %v1738
      %vm1740 = vcmp.eq.s32.totalorder %v1735, 2
      %v1741 = vxor.u32 %v1731, 2147483648
      %v1742 = vsel %vm1740, %v1741, %v1732
      %v1743 = vsel %vm1736, %v1739, %v1742
      %v1744 = vsel %vm1733, nan, %v1743
      %v1745 = vand.u32 2147483647, %v479
      %vm1746 = vcmp.le.f32.partialorder %v1745, 0.7853982
      %vm1747 = vcmp.lt.s32.totalorder %v479, 0
      %v1748 = vand.u32 %v479, 2139095040
      %v1749 = vshrl.u32 %v1748, 23
      %v1750 = vsub.s32 %v1749, 127
      %v1751 = vand.u32 2147483647, %v479
      %v1752 = vand.u32 %v1751, 8388607
      %v1753 = vor.u32 %v1752, 8388608
      %v1754 = vsub.s32 0, %v1753
      %v1755 = vadd.s32 %v1750, 1
      %vm1756 = vcmp.gt.s32.totalorder %v1755, 0
      %v1757 = vsel %vm1756, %v1755, 0
      %v1758 = vshrl.u32 %v1757, 5
      %v1759 = vand.u32 %v1757, 31
      %v1760 = vsub.s32 32, %v1759
      %v1761 = vshrl.u32 683565275, %v1760
      %v1762 = vshll.u32 683565275, %v1759
      %v1763 = vshrl.u32 2475754826, %v1760
      %v1764 = vor.u32 %v1762, %v1763
      %v1765 = vshll.u32 2475754826, %v1759
      %v1766 = vshrl.u32 2131351028, %v1760
      %v1767 = vor.u32 %v1765, %v1766
      %v1768 = vshll.u32 2131351028, %v1759
      %v1769 = vshrl.u32 2102212464, %v1760
      %v1770 = vor.u32 %v1768, %v1769
      %v1771 = vshll.u32 2102212464, %v1759
      %v1772 = vshrl.u32 920167782, %v1760
      %v1773 = vor.u32 %v1771, %v1772
      %v1774 = vshll.u32 920167782, %v1759
      %v1775 = vshrl.u32 1326507024, %v1760
      %v1776 = vor.u32 %v1774, %v1775
      %vm1777 = vcmp.lt.s32.totalorder %v1758, 1
      %vm1778 = vcmp.lt.s32.totalorder %v1758, 2
      %vm1779 = vcmp.lt.s32.totalorder %v1758, 3
      %vm1780 = vcmp.lt.s32.totalorder %v1758, 4
      %v1781 = vsel %vm1777, %v1761, %v1764
      %v1782 = vsel %vm1780, %v1770, 2102212464
      %v1783 = vsel %vm1779, %v1767, %v1782
      %v1784 = vsel %vm1778, %v1781, %v1783
      %v1785 = vsel %vm1777, %v1764, %v1767
      %v1786 = vsel %vm1780, %v1773, 920167782
      %v1787 = vsel %vm1779, %v1770, %v1786
      %v1788 = vsel %vm1778, %v1785, %v1787
      %v1789 = vsel %vm1777, %v1767, %v1770
      %v1790 = vsel %vm1780, %v1776, 1326507024
      %v1791 = vsel %vm1779, %v1773, %v1790
      %v1792 = vsel %vm1778, %v1789, %v1791
      %v1793 = vshll.u32 %v1753, 8
      %v1794 = vmul.u32.u64.compose %v1793, %v1792
      %v1795 = vextract.low.u32 %v1794
      %v1796 = vextract.high.u32 %v1794
      %v1797 = vmul.u32.u64.compose %v1793, %v1788
      %v1798 = vextract.low.u32 %v1797
      %v1799 = vextract.high.u32 %v1797
      %v1800 = vmul.u32 %v1793, %v1784
      %v1801 = vadd.s32 %v1796, %v1798
      %vm1802 = vc.u32 %v1796, %v1798
      %v1803 = vadd.s32 %v1799, 1
      %v1804 = vsel %vm1802, %v1803, %v1799
      %v1805 = vadd.s32 %v1800, %v1804
      %v1806 = vadd.s32 %v1805, 536870912
      %v1807 = vshrl.u32 %v1806, 30
      %v1808 = vshll.u32 %v1807, 30
      %v1809 = vsub.s32 %v1805, %v1808
      %vm1810 = vcmp.lt.s32.totalorder %v1809, 0
      %v1811 = vsub.s32 0, %v1809
      %v1812 = vsel %vm1810, %v1811, %v1809
      %v1813 = vclz %v1812
      %v1814 = vsub.s32 %v1813, 2
      %vm1815 = vcmp.gt.s32.totalorder 0, %v1814
      %v1816 = vsel %vm1815, 0, %v1814
      %v1817 = vsub.s32 32, %v1816
      %v1818 = vshll.u32 %v1809, %v1816
      %v1819 = vshrl.u32 %v1801, %v1817
      %v1820 = vor.u32 %v1818, %v1819
      %v1821 = vsub.s32 4294967266, %v1816
      %v1822 = vadd.s32 %v1821, 127
      %v1823 = vshll.u32 %v1822, 23
      %v1824 = vor.u32 4788187, %v1823
      %v1825 = vand.u32 2147483647, %v1824
      %v1827 = vcvt.s32.f32 %v1820
      %v1828 = vmul.f32 %v1827, %v1825
      %v1829 = vxor.u32 %v1828, 2147483648
      %v1830 = vsel %vm1747, %v1829, %v1828
      %v1831 = vsub.s32 4, %v1807
      %v1832 = vsel %vm1747, %v1831, %v1807
      %v1833 = vsel %vm1746, %v479, %v1830
      %v1834 = vsel %vm1746, 0, %v1832
      %v1835 = vcosq.f32.pop %v1833
      %v1836 = vsinq.f32.pop %v1833
      %vm1837 = vweird.f32 %v479
      %v1838 = vadd.s32 %v1834, 3
      %v1839 = vand.u32 %v1838, 3
      %vm1840 = vcmp.lt.s32.totalorder %v1839, 2
      %vm1841 = vcmp.eq.s32.totalorder %v1839, 0
      %v1842 = vxor.u32 %v1836, 2147483648
      %v1843 = vsel %vm1841, %v1835, %v1842
      %vm1844 = vcmp.eq.s32.totalorder %v1839, 2
      %v1845 = vxor.u32 %v1835, 2147483648
      %v1846 = vsel %vm1844, %v1845, %v1836
      %v1847 = vsel %vm1840, %v1843, %v1846
      %v1848 = vsel %vm1837, nan, %v1847
      %v1849 = vand.u32 2147483647, %v484
      %vm1850 = vcmp.le.f32.partialorder %v1849, 0.7853982
      %vm1851 = vcmp.lt.s32.totalorder %v484, 0
      %v1852 = vand.u32 %v484, 2139095040
      %v1853 = vshrl.u32 %v1852, 23
      %v1854 = vsub.s32 %v1853, 127
      %v1855 = vand.u32 2147483647, %v484
      %v1856 = vand.u32 %v1855, 8388607
      %v1857 = vor.u32 %v1856, 8388608
      %v1858 = vsub.s32 0, %v1857
      %v1859 = vadd.s32 %v1854, 1
      %vm1860 = vcmp.gt.s32.totalorder %v1859, 0
      %v1861 = vsel %vm1860, %v1859, 0
      %v1862 = vshrl.u32 %v1861, 5
      %v1863 = vand.u32 %v1861, 31
      %v1864 = vsub.s32 32, %v1863
      %v1865 = vshrl.u32 683565275, %v1864
      %v1866 = vshll.u32 683565275, %v1863
      %v1867 = vshrl.u32 2475754826, %v1864
      %v1868 = vor.u32 %v1866, %v1867
      %v1869 = vshll.u32 2475754826, %v1863
      %v1870 = vshrl.u32 2131351028, %v1864
      %v1871 = vor.u32 %v1869, %v1870
      %v1872 = vshll.u32 2131351028, %v1863
      %v1873 = vshrl.u32 2102212464, %v1864
      %v1874 = vor.u32 %v1872, %v1873
      %v1875 = vshll.u32 2102212464, %v1863
      %v1876 = vshrl.u32 920167782, %v1864
      %v1877 = vor.u32 %v1875, %v1876
      %v1878 = vshll.u32 920167782, %v1863
      %v1879 = vshrl.u32 1326507024, %v1864
      %v1880 = vor.u32 %v1878, %v1879
      %vm1881 = vcmp.lt.s32.totalorder %v1862, 1
      %vm1882 = vcmp.lt.s32.totalorder %v1862, 2
      %vm1883 = vcmp.lt.s32.totalorder %v1862, 3
      %vm1884 = vcmp.lt.s32.totalorder %v1862, 4
      %v1885 = vsel %vm1881, %v1865, %v1868
      %v1886 = vsel %vm1884, %v1874, 2102212464
      %v1887 = vsel %vm1883, %v1871, %v1886
      %v1888 = vsel %vm1882, %v1885, %v1887
      %v1889 = vsel %vm1881, %v1868, %v1871
      %v1890 = vsel %vm1884, %v1877, 920167782
      %v1891 = vsel %vm1883, %v1874, %v1890
      %v1892 = vsel %vm1882, %v1889, %v1891
      %v1893 = vsel %vm1881, %v1871, %v1874
      %v1894 = vsel %vm1884, %v1880, 1326507024
      %v1895 = vsel %vm1883, %v1877, %v1894
      %v1896 = vsel %vm1882, %v1893, %v1895
      %v1897 = vshll.u32 %v1857, 8
      %v1898 = vmul.u32.u64.compose %v1897, %v1896
      %v1899 = vextract.low.u32 %v1898
      %v1900 = vextract.high.u32 %v1898
      %v1901 = vmul.u32.u64.compose %v1897, %v1892
      %v1902 = vextract.low.u32 %v1901
      %v1903 = vextract.high.u32 %v1901
      %v1904 = vmul.u32 %v1897, %v1888
      %v1905 = vadd.s32 %v1900, %v1902
      %vm1906 = vc.u32 %v1900, %v1902
      %v1907 = vadd.s32 %v1903, 1
      %v1908 = vsel %vm1906, %v1907, %v1903
      %v1909 = vadd.s32 %v1904, %v1908
      %v1910 = vadd.s32 %v1909, 536870912
      %v1911 = vshrl.u32 %v1910, 30
      %v1912 = vshll.u32 %v1911, 30
      %v1913 = vsub.s32 %v1909, %v1912
      %vm1914 = vcmp.lt.s32.totalorder %v1913, 0
      %v1915 = vsub.s32 0, %v1913
      %v1916 = vsel %vm1914, %v1915, %v1913
      %v1917 = vclz %v1916
      %v1918 = vsub.s32 %v1917, 2
      %vm1919 = vcmp.gt.s32.totalorder 0, %v1918
      %v1920 = vsel %vm1919, 0, %v1918
      %v1921 = vsub.s32 32, %v1920
      %v1922 = vshll.u32 %v1913, %v1920
      %v1923 = vshrl.u32 %v1905, %v1921
      %v1924 = vor.u32 %v1922, %v1923
      %v1925 = vsub.s32 4294967266, %v1920
      %v1926 = vadd.s32 %v1925, 127
      %v1927 = vshll.u32 %v1926, 23
      %v1928 = vor.u32 4788187, %v1927
      %v1929 = vand.u32 2147483647, %v1928
      %v1931 = vcvt.s32.f32 %v1924
      %v1932 = vmul.f32 %v1931, %v1929
      %v1933 = vxor.u32 %v1932, 2147483648
      %v1934 = vsel %vm1851, %v1933, %v1932
      %v1935 = vsub.s32 4, %v1911
      %v1936 = vsel %vm1851, %v1935, %v1911
      %v1937 = vsel %vm1850, %v484, %v1934
      %v1938 = vsel %vm1850, 0, %v1936
      %v1939 = vcosq.f32.pop %v1937
      %v1940 = vsinq.f32.pop %v1937
      %vm1941 = vweird.f32 %v484
      %v1942 = vadd.s32 %v1938, 3
      %v1943 = vand.u32 %v1942, 3
      %vm1944 = vcmp.lt.s32.totalorder %v1943, 2
      %vm1945 = vcmp.eq.s32.totalorder %v1943, 0
      %v1946 = vxor.u32 %v1940, 2147483648
      %v1947 = vsel %vm1945, %v1939, %v1946
      %vm1948 = vcmp.eq.s32.totalorder %v1943, 2
      %v1949 = vxor.u32 %v1939, 2147483648
      %v1950 = vsel %vm1948, %v1949, %v1940
      %v1951 = vsel %vm1944, %v1947, %v1950
      %v1952 = vsel %vm1941, nan, %v1951
      %v1953 = vand.u32 2147483647, %v489
      %vm1954 = vcmp.le.f32.partialorder %v1953, 0.7853982
      %vm1955 = vcmp.lt.s32.totalorder %v489, 0
      %v1956 = vand.u32 %v489, 2139095040
      %v1957 = vshrl.u32 %v1956, 23
      %v1958 = vsub.s32 %v1957, 127
      %v1959 = vand.u32 2147483647, %v489
      %v1960 = vand.u32 %v1959, 8388607
      %v1961 = vor.u32 %v1960, 8388608
      %v1962 = vsub.s32 0, %v1961
      %v1963 = vadd.s32 %v1958, 1
      %vm1964 = vcmp.gt.s32.totalorder %v1963, 0
      %v1965 = vsel %vm1964, %v1963, 0
      %v1966 = vshrl.u32 %v1965, 5
      %v1967 = vand.u32 %v1965, 31
      %v1968 = vsub.s32 32, %v1967
      %v1969 = vshrl.u32 683565275, %v1968
      %v1970 = vshll.u32 683565275, %v1967
      %v1971 = vshrl.u32 2475754826, %v1968
      %v1972 = vor.u32 %v1970, %v1971
      %v1973 = vshll.u32 2475754826, %v1967
      %v1974 = vshrl.u32 2131351028, %v1968
      %v1975 = vor.u32 %v1973, %v1974
      %v1976 = vshll.u32 2131351028, %v1967
      %v1977 = vshrl.u32 2102212464, %v1968
      %v1978 = vor.u32 %v1976, %v1977
      %v1979 = vshll.u32 2102212464, %v1967
      %v1980 = vshrl.u32 920167782, %v1968
      %v1981 = vor.u32 %v1979, %v1980
      %v1982 = vshll.u32 920167782, %v1967
      %v1983 = vshrl.u32 1326507024, %v1968
      %v1984 = vor.u32 %v1982, %v1983
      %vm1985 = vcmp.lt.s32.totalorder %v1966, 1
      %vm1986 = vcmp.lt.s32.totalorder %v1966, 2
      %vm1987 = vcmp.lt.s32.totalorder %v1966, 3
      %vm1988 = vcmp.lt.s32.totalorder %v1966, 4
      %v1989 = vsel %vm1985, %v1969, %v1972
      %v1990 = vsel %vm1988, %v1978, 2102212464
      %v1991 = vsel %vm1987, %v1975, %v1990
      %v1992 = vsel %vm1986, %v1989, %v1991
      %v1993 = vsel %vm1985, %v1972, %v1975
      %v1994 = vsel %vm1988, %v1981, 920167782
      %v1995 = vsel %vm1987, %v1978, %v1994
      %v1996 = vsel %vm1986, %v1993, %v1995
      %v1997 = vsel %vm1985, %v1975, %v1978
      %v1998 = vsel %vm1988, %v1984, 1326507024
      %v1999 = vsel %vm1987, %v1981, %v1998
      %v2000 = vsel %vm1986, %v1997, %v1999
      %v2001 = vshll.u32 %v1961, 8
      %v2002 = vmul.u32.u64.compose %v2001, %v2000
      %v2003 = vextract.low.u32 %v2002
      %v2004 = vextract.high.u32 %v2002
      %v2005 = vmul.u32.u64.compose %v2001, %v1996
      %v2006 = vextract.low.u32 %v2005
      %v2007 = vextract.high.u32 %v2005
      %v2008 = vmul.u32 %v2001, %v1992
      %v2009 = vadd.s32 %v2004, %v2006
      %vm2010 = vc.u32 %v2004, %v2006
      %v2011 = vadd.s32 %v2007, 1
      %v2012 = vsel %vm2010, %v2011, %v2007
      %v2013 = vadd.s32 %v2008, %v2012
      %v2014 = vadd.s32 %v2013, 536870912
      %v2015 = vshrl.u32 %v2014, 30
      %v2016 = vshll.u32 %v2015, 30
      %v2017 = vsub.s32 %v2013, %v2016
      %vm2018 = vcmp.lt.s32.totalorder %v2017, 0
      %v2019 = vsub.s32 0, %v2017
      %v2020 = vsel %vm2018, %v2019, %v2017
      %v2021 = vclz %v2020
      %v2022 = vsub.s32 %v2021, 2
      %vm2023 = vcmp.gt.s32.totalorder 0, %v2022
      %v2024 = vsel %vm2023, 0, %v2022
      %v2025 = vsub.s32 32, %v2024
      %v2026 = vshll.u32 %v2017, %v2024
      %v2027 = vshrl.u32 %v2009, %v2025
      %v2028 = vor.u32 %v2026, %v2027
      %v2029 = vsub.s32 4294967266, %v2024
      %v2030 = vadd.s32 %v2029, 127
      %v2031 = vshll.u32 %v2030, 23
      %v2032 = vor.u32 4788187, %v2031
      %v2033 = vand.u32 2147483647, %v2032
      %v2035 = vcvt.s32.f32 %v2028
      %v2036 = vmul.f32 %v2035, %v2033
      %v2037 = vxor.u32 %v2036, 2147483648
      %v2038 = vsel %vm1955, %v2037, %v2036
      %v2039 = vsub.s32 4, %v2015
      %v2040 = vsel %vm1955, %v2039, %v2015
      %v2041 = vsel %vm1954, %v489, %v2038
      %v2042 = vsel %vm1954, 0, %v2040
      %v2043 = vcosq.f32.pop %v2041
      %v2044 = vsinq.f32.pop %v2041
      %vm2045 = vweird.f32 %v489
      %v2046 = vadd.s32 %v2042, 3
      %v2047 = vand.u32 %v2046, 3
      %vm2048 = vcmp.lt.s32.totalorder %v2047, 2
      %vm2049 = vcmp.eq.s32.totalorder %v2047, 0
      %v2050 = vxor.u32 %v2044, 2147483648
      %v2051 = vsel %vm2049, %v2043, %v2050
      %vm2052 = vcmp.eq.s32.totalorder %v2047, 2
      %v2053 = vxor.u32 %v2043, 2147483648
      %v2054 = vsel %vm2052, %v2053, %v2044
      %v2055 = vsel %vm2048, %v2051, %v2054
      %v2056 = vsel %vm2045, nan, %v2055
      %v2057 = vand.u32 2147483647, %v494
      %vm2058 = vcmp.le.f32.partialorder %v2057, 0.7853982
      %vm2059 = vcmp.lt.s32.totalorder %v494, 0
      %v2060 = vand.u32 %v494, 2139095040
      %v2061 = vshrl.u32 %v2060, 23
      %v2062 = vsub.s32 %v2061, 127
      %v2063 = vand.u32 2147483647, %v494
      %v2064 = vand.u32 %v2063, 8388607
      %v2065 = vor.u32 %v2064, 8388608
      %v2066 = vsub.s32 0, %v2065
      %v2067 = vadd.s32 %v2062, 1
      %vm2068 = vcmp.gt.s32.totalorder %v2067, 0
      %v2069 = vsel %vm2068, %v2067, 0
      %v2070 = vshrl.u32 %v2069, 5
      %v2071 = vand.u32 %v2069, 31
      %v2072 = vsub.s32 32, %v2071
      %v2073 = vshrl.u32 683565275, %v2072
      %v2074 = vshll.u32 683565275, %v2071
      %v2075 = vshrl.u32 2475754826, %v2072
      %v2076 = vor.u32 %v2074, %v2075
      %v2077 = vshll.u32 2475754826, %v2071
      %v2078 = vshrl.u32 2131351028, %v2072
      %v2079 = vor.u32 %v2077, %v2078
      %v2080 = vshll.u32 2131351028, %v2071
      %v2081 = vshrl.u32 2102212464, %v2072
      %v2082 = vor.u32 %v2080, %v2081
      %v2083 = vshll.u32 2102212464, %v2071
      %v2084 = vshrl.u32 920167782, %v2072
      %v2085 = vor.u32 %v2083, %v2084
      %v2086 = vshll.u32 920167782, %v2071
      %v2087 = vshrl.u32 1326507024, %v2072
      %v2088 = vor.u32 %v2086, %v2087
      %vm2089 = vcmp.lt.s32.totalorder %v2070, 1
      %vm2090 = vcmp.lt.s32.totalorder %v2070, 2
      %vm2091 = vcmp.lt.s32.totalorder %v2070, 3
      %vm2092 = vcmp.lt.s32.totalorder %v2070, 4
      %v2093 = vsel %vm2089, %v2073, %v2076
      %v2094 = vsel %vm2092, %v2082, 2102212464
      %v2095 = vsel %vm2091, %v2079, %v2094
      %v2096 = vsel %vm2090, %v2093, %v2095
      %v2097 = vsel %vm2089, %v2076, %v2079
      %v2098 = vsel %vm2092, %v2085, 920167782
      %v2099 = vsel %vm2091, %v2082, %v2098
      %v2100 = vsel %vm2090, %v2097, %v2099
      %v2101 = vsel %vm2089, %v2079, %v2082
      %v2102 = vsel %vm2092, %v2088, 1326507024
      %v2103 = vsel %vm2091, %v2085, %v2102
      %v2104 = vsel %vm2090, %v2101, %v2103
      %v2105 = vshll.u32 %v2065, 8
      %v2106 = vmul.u32.u64.compose %v2105, %v2104
      %v2107 = vextract.low.u32 %v2106
      %v2108 = vextract.high.u32 %v2106
      %v2109 = vmul.u32.u64.compose %v2105, %v2100
      %v2110 = vextract.low.u32 %v2109
      %v2111 = vextract.high.u32 %v2109
      %v2112 = vmul.u32 %v2105, %v2096
      %v2113 = vadd.s32 %v2108, %v2110
      %vm2114 = vc.u32 %v2108, %v2110
      %v2115 = vadd.s32 %v2111, 1
      %v2116 = vsel %vm2114, %v2115, %v2111
      %v2117 = vadd.s32 %v2112, %v2116
      %v2118 = vadd.s32 %v2117, 536870912
      %v2119 = vshrl.u32 %v2118, 30
      %v2120 = vshll.u32 %v2119, 30
      %v2121 = vsub.s32 %v2117, %v2120
      %vm2122 = vcmp.lt.s32.totalorder %v2121, 0
      %v2123 = vsub.s32 0, %v2121
      %v2124 = vsel %vm2122, %v2123, %v2121
      %v2125 = vclz %v2124
      %v2126 = vsub.s32 %v2125, 2
      %vm2127 = vcmp.gt.s32.totalorder 0, %v2126
      %v2128 = vsel %vm2127, 0, %v2126
      %v2129 = vsub.s32 32, %v2128
      %v2130 = vshll.u32 %v2121, %v2128
      %v2131 = vshrl.u32 %v2113, %v2129
      %v2132 = vor.u32 %v2130, %v2131
      %v2133 = vsub.s32 4294967266, %v2128
      %v2134 = vadd.s32 %v2133, 127
      %v2135 = vshll.u32 %v2134, 23
      %v2136 = vor.u32 4788187, %v2135
      %v2137 = vand.u32 2147483647, %v2136
      %v2139 = vcvt.s32.f32 %v2132
      %v2140 = vmul.f32 %v2139, %v2137
      %v2141 = vxor.u32 %v2140, 2147483648
      %v2142 = vsel %vm2059, %v2141, %v2140
      %v2143 = vsub.s32 4, %v2119
      %v2144 = vsel %vm2059, %v2143, %v2119
      %v2145 = vsel %vm2058, %v494, %v2142
      %v2146 = vsel %vm2058, 0, %v2144
      %v2147 = vcosq.f32.pop %v2145
      %v2148 = vsinq.f32.pop %v2145
      %vm2149 = vweird.f32 %v494
      %v2150 = vadd.s32 %v2146, 3
      %v2151 = vand.u32 %v2150, 3
      %vm2152 = vcmp.lt.s32.totalorder %v2151, 2
      %vm2153 = vcmp.eq.s32.totalorder %v2151, 0
      %v2154 = vxor.u32 %v2148, 2147483648
      %v2155 = vsel %vm2153, %v2147, %v2154
      %vm2156 = vcmp.eq.s32.totalorder %v2151, 2
      %v2157 = vxor.u32 %v2147, 2147483648
      %v2158 = vsel %vm2156, %v2157, %v2148
      %v2159 = vsel %vm2152, %v2155, %v2158
      %v2160 = vsel %vm2149, nan, %v2159
      %v2161 = vand.u32 2147483647, %v419
      %vm2162 = vcmp.le.f32.partialorder %v2161, 0.7853982
      %vm2163 = vcmp.lt.s32.totalorder %v419, 0
      %v2164 = vand.u32 %v419, 2139095040
      %v2165 = vshrl.u32 %v2164, 23
      %v2166 = vsub.s32 %v2165, 127
      %v2167 = vand.u32 2147483647, %v419
      %v2168 = vand.u32 %v2167, 8388607
      %v2169 = vor.u32 %v2168, 8388608
      %v2170 = vsub.s32 0, %v2169
      %v2171 = vadd.s32 %v2166, 1
      %vm2172 = vcmp.gt.s32.totalorder %v2171, 0
      %v2173 = vsel %vm2172, %v2171, 0
      %v2174 = vshrl.u32 %v2173, 5
      %v2175 = vand.u32 %v2173, 31
      %v2176 = vsub.s32 32, %v2175
      %v2177 = vshrl.u32 683565275, %v2176
      %v2178 = vshll.u32 683565275, %v2175
      %v2179 = vshrl.u32 2475754826, %v2176
      %v2180 = vor.u32 %v2178, %v2179
      %v2181 = vshll.u32 2475754826, %v2175
      %v2182 = vshrl.u32 2131351028, %v2176
      %v2183 = vor.u32 %v2181, %v2182
      %v2184 = vshll.u32 2131351028, %v2175
      %v2185 = vshrl.u32 2102212464, %v2176
      %v2186 = vor.u32 %v2184, %v2185
      %v2187 = vshll.u32 2102212464, %v2175
      %v2188 = vshrl.u32 920167782, %v2176
      %v2189 = vor.u32 %v2187, %v2188
      %v2190 = vshll.u32 920167782, %v2175
      %v2191 = vshrl.u32 1326507024, %v2176
      %v2192 = vor.u32 %v2190, %v2191
      %vm2193 = vcmp.lt.s32.totalorder %v2174, 1
      %vm2194 = vcmp.lt.s32.totalorder %v2174, 2
      %vm2195 = vcmp.lt.s32.totalorder %v2174, 3
      %vm2196 = vcmp.lt.s32.totalorder %v2174, 4
      %v2197 = vsel %vm2193, %v2177, %v2180
      %v2198 = vsel %vm2196, %v2186, 2102212464
      %v2199 = vsel %vm2195, %v2183, %v2198
      %v2200 = vsel %vm2194, %v2197, %v2199
      %v2201 = vsel %vm2193, %v2180, %v2183
      %v2202 = vsel %vm2196, %v2189, 920167782
      %v2203 = vsel %vm2195, %v2186, %v2202
      %v2204 = vsel %vm2194, %v2201, %v2203
      %v2205 = vsel %vm2193, %v2183, %v2186
      %v2206 = vsel %vm2196, %v2192, 1326507024
      %v2207 = vsel %vm2195, %v2189, %v2206
      %v2208 = vsel %vm2194, %v2205, %v2207
      %v2209 = vshll.u32 %v2169, 8
      %v2210 = vmul.u32.u64.compose %v2209, %v2208
      %v2211 = vextract.low.u32 %v2210
      %v2212 = vextract.high.u32 %v2210
      %v2213 = vmul.u32.u64.compose %v2209, %v2204
      %v2214 = vextract.low.u32 %v2213
      %v2215 = vextract.high.u32 %v2213
      %v2216 = vmul.u32 %v2209, %v2200
      %v2217 = vadd.s32 %v2212, %v2214
      %vm2218 = vc.u32 %v2212, %v2214
      %v2219 = vadd.s32 %v2215, 1
      %v2220 = vsel %vm2218, %v2219, %v2215
      %v2221 = vadd.s32 %v2216, %v2220
      %v2222 = vadd.s32 %v2221, 536870912
      %v2223 = vshrl.u32 %v2222, 30
      %v2224 = vshll.u32 %v2223, 30
      %v2225 = vsub.s32 %v2221, %v2224
      %vm2226 = vcmp.lt.s32.totalorder %v2225, 0
      %v2227 = vsub.s32 0, %v2225
      %v2228 = vsel %vm2226, %v2227, %v2225
      %v2229 = vclz %v2228
      %v2230 = vsub.s32 %v2229, 2
      %vm2231 = vcmp.gt.s32.totalorder 0, %v2230
      %v2232 = vsel %vm2231, 0, %v2230
      %v2233 = vsub.s32 32, %v2232
      %v2234 = vshll.u32 %v2225, %v2232
      %v2235 = vshrl.u32 %v2217, %v2233
      %v2236 = vor.u32 %v2234, %v2235
      %v2237 = vsub.s32 4294967266, %v2232
      %v2238 = vadd.s32 %v2237, 127
      %v2239 = vshll.u32 %v2238, 23
      %v2240 = vor.u32 4788187, %v2239
      %v2241 = vand.u32 2147483647, %v2240
      %v2243 = vcvt.s32.f32 %v2236
      %v2244 = vmul.f32 %v2243, %v2241
      %v2245 = vxor.u32 %v2244, 2147483648
      %v2246 = vsel %vm2163, %v2245, %v2244
      %v2247 = vsub.s32 4, %v2223
      %v2248 = vsel %vm2163, %v2247, %v2223
      %v2249 = vsel %vm2162, %v419, %v2246
      %v2250 = vsel %vm2162, 0, %v2248
      %v2251 = vcosq.f32.pop %v2249
      %v2252 = vsinq.f32.pop %v2249
      %vm2253 = vweird.f32 %v419
      %v2254 = vand.u32 %v2250, 3
      %vm2255 = vcmp.lt.s32.totalorder %v2254, 2
      %vm2256 = vcmp.eq.s32.totalorder %v2254, 0
      %v2257 = vxor.u32 %v2252, 2147483648
      %v2258 = vsel %vm2256, %v2251, %v2257
      %vm2259 = vcmp.eq.s32.totalorder %v2254, 2
      %v2260 = vxor.u32 %v2251, 2147483648
      %v2261 = vsel %vm2259, %v2260, %v2252
      %v2262 = vsel %vm2255, %v2258, %v2261
      %v2263 = vsel %vm2253, nan, %v2262
      %v2264 = vand.u32 2147483647, %v424
      %vm2265 = vcmp.le.f32.partialorder %v2264, 0.7853982
      %vm2266 = vcmp.lt.s32.totalorder %v424, 0
      %v2267 = vand.u32 %v424, 2139095040
      %v2268 = vshrl.u32 %v2267, 23
      %v2269 = vsub.s32 %v2268, 127
      %v2270 = vand.u32 2147483647, %v424
      %v2271 = vand.u32 %v2270, 8388607
      %v2272 = vor.u32 %v2271, 8388608
      %v2273 = vsub.s32 0, %v2272
      %v2274 = vadd.s32 %v2269, 1
      %vm2275 = vcmp.gt.s32.totalorder %v2274, 0
      %v2276 = vsel %vm2275, %v2274, 0
      %v2277 = vshrl.u32 %v2276, 5
      %v2278 = vand.u32 %v2276, 31
      %v2279 = vsub.s32 32, %v2278
      %v2280 = vshrl.u32 683565275, %v2279
      %v2281 = vshll.u32 683565275, %v2278
      %v2282 = vshrl.u32 2475754826, %v2279
      %v2283 = vor.u32 %v2281, %v2282
      %v2284 = vshll.u32 2475754826, %v2278
      %v2285 = vshrl.u32 2131351028, %v2279
      %v2286 = vor.u32 %v2284, %v2285
      %v2287 = vshll.u32 2131351028, %v2278
      %v2288 = vshrl.u32 2102212464, %v2279
      %v2289 = vor.u32 %v2287, %v2288
      %v2290 = vshll.u32 2102212464, %v2278
      %v2291 = vshrl.u32 920167782, %v2279
      %v2292 = vor.u32 %v2290, %v2291
      %v2293 = vshll.u32 920167782, %v2278
      %v2294 = vshrl.u32 1326507024, %v2279
      %v2295 = vor.u32 %v2293, %v2294
      %vm2296 = vcmp.lt.s32.totalorder %v2277, 1
      %vm2297 = vcmp.lt.s32.totalorder %v2277, 2
      %vm2298 = vcmp.lt.s32.totalorder %v2277, 3
      %vm2299 = vcmp.lt.s32.totalorder %v2277, 4
      %v2300 = vsel %vm2296, %v2280, %v2283
      %v2301 = vsel %vm2299, %v2289, 2102212464
      %v2302 = vsel %vm2298, %v2286, %v2301
      %v2303 = vsel %vm2297, %v2300, %v2302
      %v2304 = vsel %vm2296, %v2283, %v2286
      %v2305 = vsel %vm2299, %v2292, 920167782
      %v2306 = vsel %vm2298, %v2289, %v2305
      %v2307 = vsel %vm2297, %v2304, %v2306
      %v2308 = vsel %vm2296, %v2286, %v2289
      %v2309 = vsel %vm2299, %v2295, 1326507024
      %v2310 = vsel %vm2298, %v2292, %v2309
      %v2311 = vsel %vm2297, %v2308, %v2310
      %v2312 = vshll.u32 %v2272, 8
      %v2313 = vmul.u32.u64.compose %v2312, %v2311
      %v2314 = vextract.low.u32 %v2313
      %v2315 = vextract.high.u32 %v2313
      %v2316 = vmul.u32.u64.compose %v2312, %v2307
      %v2317 = vextract.low.u32 %v2316
      %v2318 = vextract.high.u32 %v2316
      %v2319 = vmul.u32 %v2312, %v2303
      %v2320 = vadd.s32 %v2315, %v2317
      %vm2321 = vc.u32 %v2315, %v2317
      %v2322 = vadd.s32 %v2318, 1
      %v2323 = vsel %vm2321, %v2322, %v2318
      %v2324 = vadd.s32 %v2319, %v2323
      %v2325 = vadd.s32 %v2324, 536870912
      %v2326 = vshrl.u32 %v2325, 30
      %v2327 = vshll.u32 %v2326, 30
      %v2328 = vsub.s32 %v2324, %v2327
      %vm2329 = vcmp.lt.s32.totalorder %v2328, 0
      %v2330 = vsub.s32 0, %v2328
      %v2331 = vsel %vm2329, %v2330, %v2328
      %v2332 = vclz %v2331
      %v2333 = vsub.s32 %v2332, 2
      %vm2334 = vcmp.gt.s32.totalorder 0, %v2333
      %v2335 = vsel %vm2334, 0, %v2333
      %v2336 = vsub.s32 32, %v2335
      %v2337 = vshll.u32 %v2328, %v2335
      %v2338 = vshrl.u32 %v2320, %v2336
      %v2339 = vor.u32 %v2337, %v2338
      %v2340 = vsub.s32 4294967266, %v2335
      %v2341 = vadd.s32 %v2340, 127
      %v2342 = vshll.u32 %v2341, 23
      %v2343 = vor.u32 4788187, %v2342
      %v2344 = vand.u32 2147483647, %v2343
      %v2346 = vcvt.s32.f32 %v2339
      %v2347 = vmul.f32 %v2346, %v2344
      %v2348 = vxor.u32 %v2347, 2147483648
      %v2349 = vsel %vm2266, %v2348, %v2347
      %v2350 = vsub.s32 4, %v2326
      %v2351 = vsel %vm2266, %v2350, %v2326
      %v2352 = vsel %vm2265, %v424, %v2349
      %v2353 = vsel %vm2265, 0, %v2351
      %v2354 = vcosq.f32.pop %v2352
      %v2355 = vsinq.f32.pop %v2352
      %vm2356 = vweird.f32 %v424
      %v2357 = vand.u32 %v2353, 3
      %vm2358 = vcmp.lt.s32.totalorder %v2357, 2
      %vm2359 = vcmp.eq.s32.totalorder %v2357, 0
      %v2360 = vxor.u32 %v2355, 2147483648
      %v2361 = vsel %vm2359, %v2354, %v2360
      %vm2362 = vcmp.eq.s32.totalorder %v2357, 2
      %v2363 = vxor.u32 %v2354, 2147483648
      %v2364 = vsel %vm2362, %v2363, %v2355
      %v2365 = vsel %vm2358, %v2361, %v2364
      %v2366 = vsel %vm2356, nan, %v2365
      %v2367 = vand.u32 2147483647, %v429
      %vm2368 = vcmp.le.f32.partialorder %v2367, 0.7853982
      %vm2369 = vcmp.lt.s32.totalorder %v429, 0
      %v2370 = vand.u32 %v429, 2139095040
      %v2371 = vshrl.u32 %v2370, 23
      %v2372 = vsub.s32 %v2371, 127
      %v2373 = vand.u32 2147483647, %v429
      %v2374 = vand.u32 %v2373, 8388607
      %v2375 = vor.u32 %v2374, 8388608
      %v2376 = vsub.s32 0, %v2375
      %v2377 = vadd.s32 %v2372, 1
      %vm2378 = vcmp.gt.s32.totalorder %v2377, 0
      %v2379 = vsel %vm2378, %v2377, 0
      %v2380 = vshrl.u32 %v2379, 5
      %v2381 = vand.u32 %v2379, 31
      %v2382 = vsub.s32 32, %v2381
      %v2383 = vshrl.u32 683565275, %v2382
      %v2384 = vshll.u32 683565275, %v2381
      %v2385 = vshrl.u32 2475754826, %v2382
      %v2386 = vor.u32 %v2384, %v2385
      %v2387 = vshll.u32 2475754826, %v2381
      %v2388 = vshrl.u32 2131351028, %v2382
      %v2389 = vor.u32 %v2387, %v2388
      %v2390 = vshll.u32 2131351028, %v2381
      %v2391 = vshrl.u32 2102212464, %v2382
      %v2392 = vor.u32 %v2390, %v2391
      %v2393 = vshll.u32 2102212464, %v2381
      %v2394 = vshrl.u32 920167782, %v2382
      %v2395 = vor.u32 %v2393, %v2394
      %v2396 = vshll.u32 920167782, %v2381
      %v2397 = vshrl.u32 1326507024, %v2382
      %v2398 = vor.u32 %v2396, %v2397
      %vm2399 = vcmp.lt.s32.totalorder %v2380, 1
      %vm2400 = vcmp.lt.s32.totalorder %v2380, 2
      %vm2401 = vcmp.lt.s32.totalorder %v2380, 3
      %vm2402 = vcmp.lt.s32.totalorder %v2380, 4
      %v2403 = vsel %vm2399, %v2383, %v2386
      %v2404 = vsel %vm2402, %v2392, 2102212464
      %v2405 = vsel %vm2401, %v2389, %v2404
      %v2406 = vsel %vm2400, %v2403, %v2405
      %v2407 = vsel %vm2399, %v2386, %v2389
      %v2408 = vsel %vm2402, %v2395, 920167782
      %v2409 = vsel %vm2401, %v2392, %v2408
      %v2410 = vsel %vm2400, %v2407, %v2409
      %v2411 = vsel %vm2399, %v2389, %v2392
      %v2412 = vsel %vm2402, %v2398, 1326507024
      %v2413 = vsel %vm2401, %v2395, %v2412
      %v2414 = vsel %vm2400, %v2411, %v2413
      %v2415 = vshll.u32 %v2375, 8
      %v2416 = vmul.u32.u64.compose %v2415, %v2414
      %v2417 = vextract.low.u32 %v2416
      %v2418 = vextract.high.u32 %v2416
      %v2419 = vmul.u32.u64.compose %v2415, %v2410
      %v2420 = vextract.low.u32 %v2419
      %v2421 = vextract.high.u32 %v2419
      %v2422 = vmul.u32 %v2415, %v2406
      %v2423 = vadd.s32 %v2418, %v2420
      %vm2424 = vc.u32 %v2418, %v2420
      %v2425 = vadd.s32 %v2421, 1
      %v2426 = vsel %vm2424, %v2425, %v2421
      %v2427 = vadd.s32 %v2422, %v2426
      %v2428 = vadd.s32 %v2427, 536870912
      %v2429 = vshrl.u32 %v2428, 30
      %v2430 = vshll.u32 %v2429, 30
      %v2431 = vsub.s32 %v2427, %v2430
      %vm2432 = vcmp.lt.s32.totalorder %v2431, 0
      %v2433 = vsub.s32 0, %v2431
      %v2434 = vsel %vm2432, %v2433, %v2431
      %v2435 = vclz %v2434
      %v2436 = vsub.s32 %v2435, 2
      %vm2437 = vcmp.gt.s32.totalorder 0, %v2436
      %v2438 = vsel %vm2437, 0, %v2436
      %v2439 = vsub.s32 32, %v2438
      %v2440 = vshll.u32 %v2431, %v2438
      %v2441 = vshrl.u32 %v2423, %v2439
      %v2442 = vor.u32 %v2440, %v2441
      %v2443 = vsub.s32 4294967266, %v2438
      %v2444 = vadd.s32 %v2443, 127
      %v2445 = vshll.u32 %v2444, 23
      %v2446 = vor.u32 4788187, %v2445
      %v2447 = vand.u32 2147483647, %v2446
      %v2449 = vcvt.s32.f32 %v2442
      %v2450 = vmul.f32 %v2449, %v2447
      %v2451 = vxor.u32 %v2450, 2147483648
      %v2452 = vsel %vm2369, %v2451, %v2450
      %v2453 = vsub.s32 4, %v2429
      %v2454 = vsel %vm2369, %v2453, %v2429
      %v2455 = vsel %vm2368, %v429, %v2452
      %v2456 = vsel %vm2368, 0, %v2454
      %v2457 = vcosq.f32.pop %v2455
      %v2458 = vsinq.f32.pop %v2455
      %vm2459 = vweird.f32 %v429
      %v2460 = vand.u32 %v2456, 3
      %vm2461 = vcmp.lt.s32.totalorder %v2460, 2
      %vm2462 = vcmp.eq.s32.totalorder %v2460, 0
      %v2463 = vxor.u32 %v2458, 2147483648
      %v2464 = vsel %vm2462, %v2457, %v2463
      %vm2465 = vcmp.eq.s32.totalorder %v2460, 2
      %v2466 = vxor.u32 %v2457, 2147483648
      %v2467 = vsel %vm2465, %v2466, %v2458
      %v2468 = vsel %vm2461, %v2464, %v2467
      %v2469 = vsel %vm2459, nan, %v2468
      %v2470 = vand.u32 2147483647, %v434
      %vm2471 = vcmp.le.f32.partialorder %v2470, 0.7853982
      %vm2472 = vcmp.lt.s32.totalorder %v434, 0
      %v2473 = vand.u32 %v434, 2139095040
      %v2474 = vshrl.u32 %v2473, 23
      %v2475 = vsub.s32 %v2474, 127
      %v2476 = vand.u32 2147483647, %v434
      %v2477 = vand.u32 %v2476, 8388607
      %v2478 = vor.u32 %v2477, 8388608
      %v2479 = vsub.s32 0, %v2478
      %v2480 = vadd.s32 %v2475, 1
      %vm2481 = vcmp.gt.s32.totalorder %v2480, 0
      %v2482 = vsel %vm2481, %v2480, 0
      %v2483 = vshrl.u32 %v2482, 5
      %v2484 = vand.u32 %v2482, 31
      %v2485 = vsub.s32 32, %v2484
      %v2486 = vshrl.u32 683565275, %v2485
      %v2487 = vshll.u32 683565275, %v2484
      %v2488 = vshrl.u32 2475754826, %v2485
      %v2489 = vor.u32 %v2487, %v2488
      %v2490 = vshll.u32 2475754826, %v2484
      %v2491 = vshrl.u32 2131351028, %v2485
      %v2492 = vor.u32 %v2490, %v2491
      %v2493 = vshll.u32 2131351028, %v2484
      %v2494 = vshrl.u32 2102212464, %v2485
      %v2495 = vor.u32 %v2493, %v2494
      %v2496 = vshll.u32 2102212464, %v2484
      %v2497 = vshrl.u32 920167782, %v2485
      %v2498 = vor.u32 %v2496, %v2497
      %v2499 = vshll.u32 920167782, %v2484
      %v2500 = vshrl.u32 1326507024, %v2485
      %v2501 = vor.u32 %v2499, %v2500
      %vm2502 = vcmp.lt.s32.totalorder %v2483, 1
      %vm2503 = vcmp.lt.s32.totalorder %v2483, 2
      %vm2504 = vcmp.lt.s32.totalorder %v2483, 3
      %vm2505 = vcmp.lt.s32.totalorder %v2483, 4
      %v2506 = vsel %vm2502, %v2486, %v2489
      %v2507 = vsel %vm2505, %v2495, 2102212464
      %v2508 = vsel %vm2504, %v2492, %v2507
      %v2509 = vsel %vm2503, %v2506, %v2508
      %v2510 = vsel %vm2502, %v2489, %v2492
      %v2511 = vsel %vm2505, %v2498, 920167782
      %v2512 = vsel %vm2504, %v2495, %v2511
      %v2513 = vsel %vm2503, %v2510, %v2512
      %v2514 = vsel %vm2502, %v2492, %v2495
      %v2515 = vsel %vm2505, %v2501, 1326507024
      %v2516 = vsel %vm2504, %v2498, %v2515
      %v2517 = vsel %vm2503, %v2514, %v2516
      %v2518 = vshll.u32 %v2478, 8
      %v2519 = vmul.u32.u64.compose %v2518, %v2517
      %v2520 = vextract.low.u32 %v2519
      %v2521 = vextract.high.u32 %v2519
      %v2522 = vmul.u32.u64.compose %v2518, %v2513
      %v2523 = vextract.low.u32 %v2522
      %v2524 = vextract.high.u32 %v2522
      %v2525 = vmul.u32 %v2518, %v2509
      %v2526 = vadd.s32 %v2521, %v2523
      %vm2527 = vc.u32 %v2521, %v2523
      %v2528 = vadd.s32 %v2524, 1
      %v2529 = vsel %vm2527, %v2528, %v2524
      %v2530 = vadd.s32 %v2525, %v2529
      %v2531 = vadd.s32 %v2530, 536870912
      %v2532 = vshrl.u32 %v2531, 30
      %v2533 = vshll.u32 %v2532, 30
      %v2534 = vsub.s32 %v2530, %v2533
      %vm2535 = vcmp.lt.s32.totalorder %v2534, 0
      %v2536 = vsub.s32 0, %v2534
      %v2537 = vsel %vm2535, %v2536, %v2534
      %v2538 = vclz %v2537
      %v2539 = vsub.s32 %v2538, 2
      %vm2540 = vcmp.gt.s32.totalorder 0, %v2539
      %v2541 = vsel %vm2540, 0, %v2539
      %v2542 = vsub.s32 32, %v2541
      %v2543 = vshll.u32 %v2534, %v2541
      %v2544 = vshrl.u32 %v2526, %v2542
      %v2545 = vor.u32 %v2543, %v2544
      %v2546 = vsub.s32 4294967266, %v2541
      %v2547 = vadd.s32 %v2546, 127
      %v2548 = vshll.u32 %v2547, 23
      %v2549 = vor.u32 4788187, %v2548
      %v2550 = vand.u32 2147483647, %v2549
      %v2552 = vcvt.s32.f32 %v2545
      %v2553 = vmul.f32 %v2552, %v2550
      %v2554 = vxor.u32 %v2553, 2147483648
      %v2555 = vsel %vm2472, %v2554, %v2553
      %v2556 = vsub.s32 4, %v2532
      %v2557 = vsel %vm2472, %v2556, %v2532
      %v2558 = vsel %vm2471, %v434, %v2555
      %v2559 = vsel %vm2471, 0, %v2557
      %v2560 = vcosq.f32.pop %v2558
      %v2561 = vsinq.f32.pop %v2558
      %vm2562 = vweird.f32 %v434
      %v2563 = vand.u32 %v2559, 3
      %vm2564 = vcmp.lt.s32.totalorder %v2563, 2
      %vm2565 = vcmp.eq.s32.totalorder %v2563, 0
      %v2566 = vxor.u32 %v2561, 2147483648
      %v2567 = vsel %vm2565, %v2560, %v2566
      %vm2568 = vcmp.eq.s32.totalorder %v2563, 2
      %v2569 = vxor.u32 %v2560, 2147483648
      %v2570 = vsel %vm2568, %v2569, %v2561
      %v2571 = vsel %vm2564, %v2567, %v2570
      %v2572 = vsel %vm2562, nan, %v2571
      %v2573 = vand.u32 2147483647, %v439
      %vm2574 = vcmp.le.f32.partialorder %v2573, 0.7853982
      %vm2575 = vcmp.lt.s32.totalorder %v439, 0
      %v2576 = vand.u32 %v439, 2139095040
      %v2577 = vshrl.u32 %v2576, 23
      %v2578 = vsub.s32 %v2577, 127
      %v2579 = vand.u32 2147483647, %v439
      %v2580 = vand.u32 %v2579, 8388607
      %v2581 = vor.u32 %v2580, 8388608
      %v2582 = vsub.s32 0, %v2581
      %v2583 = vadd.s32 %v2578, 1
      %vm2584 = vcmp.gt.s32.totalorder %v2583, 0
      %v2585 = vsel %vm2584, %v2583, 0
      %v2586 = vshrl.u32 %v2585, 5
      %v2587 = vand.u32 %v2585, 31
      %v2588 = vsub.s32 32, %v2587
      %v2589 = vshrl.u32 683565275, %v2588
      %v2590 = vshll.u32 683565275, %v2587
      %v2591 = vshrl.u32 2475754826, %v2588
      %v2592 = vor.u32 %v2590, %v2591
      %v2593 = vshll.u32 2475754826, %v2587
      %v2594 = vshrl.u32 2131351028, %v2588
      %v2595 = vor.u32 %v2593, %v2594
      %v2596 = vshll.u32 2131351028, %v2587
      %v2597 = vshrl.u32 2102212464, %v2588
      %v2598 = vor.u32 %v2596, %v2597
      %v2599 = vshll.u32 2102212464, %v2587
      %v2600 = vshrl.u32 920167782, %v2588
      %v2601 = vor.u32 %v2599, %v2600
      %v2602 = vshll.u32 920167782, %v2587
      %v2603 = vshrl.u32 1326507024, %v2588
      %v2604 = vor.u32 %v2602, %v2603
      %vm2605 = vcmp.lt.s32.totalorder %v2586, 1
      %vm2606 = vcmp.lt.s32.totalorder %v2586, 2
      %vm2607 = vcmp.lt.s32.totalorder %v2586, 3
      %vm2608 = vcmp.lt.s32.totalorder %v2586, 4
      %v2609 = vsel %vm2605, %v2589, %v2592
      %v2610 = vsel %vm2608, %v2598, 2102212464
      %v2611 = vsel %vm2607, %v2595, %v2610
      %v2612 = vsel %vm2606, %v2609, %v2611
      %v2613 = vsel %vm2605, %v2592, %v2595
      %v2614 = vsel %vm2608, %v2601, 920167782
      %v2615 = vsel %vm2607, %v2598, %v2614
      %v2616 = vsel %vm2606, %v2613, %v2615
      %v2617 = vsel %vm2605, %v2595, %v2598
      %v2618 = vsel %vm2608, %v2604, 1326507024
      %v2619 = vsel %vm2607, %v2601, %v2618
      %v2620 = vsel %vm2606, %v2617, %v2619
      %v2621 = vshll.u32 %v2581, 8
      %v2622 = vmul.u32.u64.compose %v2621, %v2620
      %v2623 = vextract.low.u32 %v2622
      %v2624 = vextract.high.u32 %v2622
      %v2625 = vmul.u32.u64.compose %v2621, %v2616
      %v2626 = vextract.low.u32 %v2625
      %v2627 = vextract.high.u32 %v2625
      %v2628 = vmul.u32 %v2621, %v2612
      %v2629 = vadd.s32 %v2624, %v2626
      %vm2630 = vc.u32 %v2624, %v2626
      %v2631 = vadd.s32 %v2627, 1
      %v2632 = vsel %vm2630, %v2631, %v2627
      %v2633 = vadd.s32 %v2628, %v2632
      %v2634 = vadd.s32 %v2633, 536870912
      %v2635 = vshrl.u32 %v2634, 30
      %v2636 = vshll.u32 %v2635, 30
      %v2637 = vsub.s32 %v2633, %v2636
      %vm2638 = vcmp.lt.s32.totalorder %v2637, 0
      %v2639 = vsub.s32 0, %v2637
      %v2640 = vsel %vm2638, %v2639, %v2637
      %v2641 = vclz %v2640
      %v2642 = vsub.s32 %v2641, 2
      %vm2643 = vcmp.gt.s32.totalorder 0, %v2642
      %v2644 = vsel %vm2643, 0, %v2642
      %v2645 = vsub.s32 32, %v2644
      %v2646 = vshll.u32 %v2637, %v2644
      %v2647 = vshrl.u32 %v2629, %v2645
      %v2648 = vor.u32 %v2646, %v2647
      %v2649 = vsub.s32 4294967266, %v2644
      %v2650 = vadd.s32 %v2649, 127
      %v2651 = vshll.u32 %v2650, 23
      %v2652 = vor.u32 4788187, %v2651
      %v2653 = vand.u32 2147483647, %v2652
      %v2655 = vcvt.s32.f32 %v2648
      %v2656 = vmul.f32 %v2655, %v2653
      %v2657 = vxor.u32 %v2656, 2147483648
      %v2658 = vsel %vm2575, %v2657, %v2656
      %v2659 = vsub.s32 4, %v2635
      %v2660 = vsel %vm2575, %v2659, %v2635
      %v2661 = vsel %vm2574, %v439, %v2658
      %v2662 = vsel %vm2574, 0, %v2660
      %v2663 = vcosq.f32.pop %v2661
      %v2664 = vsinq.f32.pop %v2661
      %vm2665 = vweird.f32 %v439
      %v2666 = vand.u32 %v2662, 3
      %vm2667 = vcmp.lt.s32.totalorder %v2666, 2
      %vm2668 = vcmp.eq.s32.totalorder %v2666, 0
      %v2669 = vxor.u32 %v2664, 2147483648
      %v2670 = vsel %vm2668, %v2663, %v2669
      %vm2671 = vcmp.eq.s32.totalorder %v2666, 2
      %v2672 = vxor.u32 %v2663, 2147483648
      %v2673 = vsel %vm2671, %v2672, %v2664
      %v2674 = vsel %vm2667, %v2670, %v2673
      %v2675 = vsel %vm2665, nan, %v2674
      %v2676 = vand.u32 2147483647, %v444
      %vm2677 = vcmp.le.f32.partialorder %v2676, 0.7853982
      %vm2678 = vcmp.lt.s32.totalorder %v444, 0
      %v2679 = vand.u32 %v444, 2139095040
      %v2680 = vshrl.u32 %v2679, 23
      %v2681 = vsub.s32 %v2680, 127
      %v2682 = vand.u32 2147483647, %v444
      %v2683 = vand.u32 %v2682, 8388607
      %v2684 = vor.u32 %v2683, 8388608
      %v2685 = vsub.s32 0, %v2684
      %v2686 = vadd.s32 %v2681, 1
      %vm2687 = vcmp.gt.s32.totalorder %v2686, 0
      %v2688 = vsel %vm2687, %v2686, 0
      %v2689 = vshrl.u32 %v2688, 5
      %v2690 = vand.u32 %v2688, 31
      %v2691 = vsub.s32 32, %v2690
      %v2692 = vshrl.u32 683565275, %v2691
      %v2693 = vshll.u32 683565275, %v2690
      %v2694 = vshrl.u32 2475754826, %v2691
      %v2695 = vor.u32 %v2693, %v2694
      %v2696 = vshll.u32 2475754826, %v2690
      %v2697 = vshrl.u32 2131351028, %v2691
      %v2698 = vor.u32 %v2696, %v2697
      %v2699 = vshll.u32 2131351028, %v2690
      %v2700 = vshrl.u32 2102212464, %v2691
      %v2701 = vor.u32 %v2699, %v2700
      %v2702 = vshll.u32 2102212464, %v2690
      %v2703 = vshrl.u32 920167782, %v2691
      %v2704 = vor.u32 %v2702, %v2703
      %v2705 = vshll.u32 920167782, %v2690
      %v2706 = vshrl.u32 1326507024, %v2691
      %v2707 = vor.u32 %v2705, %v2706
      %vm2708 = vcmp.lt.s32.totalorder %v2689, 1
      %vm2709 = vcmp.lt.s32.totalorder %v2689, 2
      %vm2710 = vcmp.lt.s32.totalorder %v2689, 3
      %vm2711 = vcmp.lt.s32.totalorder %v2689, 4
      %v2712 = vsel %vm2708, %v2692, %v2695
      %v2713 = vsel %vm2711, %v2701, 2102212464
      %v2714 = vsel %vm2710, %v2698, %v2713
      %v2715 = vsel %vm2709, %v2712, %v2714
      %v2716 = vsel %vm2708, %v2695, %v2698
      %v2717 = vsel %vm2711, %v2704, 920167782
      %v2718 = vsel %vm2710, %v2701, %v2717
      %v2719 = vsel %vm2709, %v2716, %v2718
      %v2720 = vsel %vm2708, %v2698, %v2701
      %v2721 = vsel %vm2711, %v2707, 1326507024
      %v2722 = vsel %vm2710, %v2704, %v2721
      %v2723 = vsel %vm2709, %v2720, %v2722
      %v2724 = vshll.u32 %v2684, 8
      %v2725 = vmul.u32.u64.compose %v2724, %v2723
      %v2726 = vextract.low.u32 %v2725
      %v2727 = vextract.high.u32 %v2725
      %v2728 = vmul.u32.u64.compose %v2724, %v2719
      %v2729 = vextract.low.u32 %v2728
      %v2730 = vextract.high.u32 %v2728
      %v2731 = vmul.u32 %v2724, %v2715
      %v2732 = vadd.s32 %v2727, %v2729
      %vm2733 = vc.u32 %v2727, %v2729
      %v2734 = vadd.s32 %v2730, 1
      %v2735 = vsel %vm2733, %v2734, %v2730
      %v2736 = vadd.s32 %v2731, %v2735
      %v2737 = vadd.s32 %v2736, 536870912
      %v2738 = vshrl.u32 %v2737, 30
      %v2739 = vshll.u32 %v2738, 30
      %v2740 = vsub.s32 %v2736, %v2739
      %vm2741 = vcmp.lt.s32.totalorder %v2740, 0
      %v2742 = vsub.s32 0, %v2740
      %v2743 = vsel %vm2741, %v2742, %v2740
      %v2744 = vclz %v2743
      %v2745 = vsub.s32 %v2744, 2
      %vm2746 = vcmp.gt.s32.totalorder 0, %v2745
      %v2747 = vsel %vm2746, 0, %v2745
      %v2748 = vsub.s32 32, %v2747
      %v2749 = vshll.u32 %v2740, %v2747
      %v2750 = vshrl.u32 %v2732, %v2748
      %v2751 = vor.u32 %v2749, %v2750
      %v2752 = vsub.s32 4294967266, %v2747
      %v2753 = vadd.s32 %v2752, 127
      %v2754 = vshll.u32 %v2753, 23
      %v2755 = vor.u32 4788187, %v2754
      %v2756 = vand.u32 2147483647, %v2755
      %v2758 = vcvt.s32.f32 %v2751
      %v2759 = vmul.f32 %v2758, %v2756
      %v2760 = vxor.u32 %v2759, 2147483648
      %v2761 = vsel %vm2678, %v2760, %v2759
      %v2762 = vsub.s32 4, %v2738
      %v2763 = vsel %vm2678, %v2762, %v2738
      %v2764 = vsel %vm2677, %v444, %v2761
      %v2765 = vsel %vm2677, 0, %v2763
      %v2766 = vcosq.f32.pop %v2764
      %v2767 = vsinq.f32.pop %v2764
      %vm2768 = vweird.f32 %v444
      %v2769 = vand.u32 %v2765, 3
      %vm2770 = vcmp.lt.s32.totalorder %v2769, 2
      %vm2771 = vcmp.eq.s32.totalorder %v2769, 0
      %v2772 = vxor.u32 %v2767, 2147483648
      %v2773 = vsel %vm2771, %v2766, %v2772
      %vm2774 = vcmp.eq.s32.totalorder %v2769, 2
      %v2775 = vxor.u32 %v2766, 2147483648
      %v2776 = vsel %vm2774, %v2775, %v2767
      %v2777 = vsel %vm2770, %v2773, %v2776
      %v2778 = vsel %vm2768, nan, %v2777
      %v2779 = vand.u32 2147483647, %v449
      %vm2780 = vcmp.le.f32.partialorder %v2779, 0.7853982
      %vm2781 = vcmp.lt.s32.totalorder %v449, 0
      %v2782 = vand.u32 %v449, 2139095040
      %v2783 = vshrl.u32 %v2782, 23
      %v2784 = vsub.s32 %v2783, 127
      %v2785 = vand.u32 2147483647, %v449
      %v2786 = vand.u32 %v2785, 8388607
      %v2787 = vor.u32 %v2786, 8388608
      %v2788 = vsub.s32 0, %v2787
      %v2789 = vadd.s32 %v2784, 1
      %vm2790 = vcmp.gt.s32.totalorder %v2789, 0
      %v2791 = vsel %vm2790, %v2789, 0
      %v2792 = vshrl.u32 %v2791, 5
      %v2793 = vand.u32 %v2791, 31
      %v2794 = vsub.s32 32, %v2793
      %v2795 = vshrl.u32 683565275, %v2794
      %v2796 = vshll.u32 683565275, %v2793
      %v2797 = vshrl.u32 2475754826, %v2794
      %v2798 = vor.u32 %v2796, %v2797
      %v2799 = vshll.u32 2475754826, %v2793
      %v2800 = vshrl.u32 2131351028, %v2794
      %v2801 = vor.u32 %v2799, %v2800
      %v2802 = vshll.u32 2131351028, %v2793
      %v2803 = vshrl.u32 2102212464, %v2794
      %v2804 = vor.u32 %v2802, %v2803
      %v2805 = vshll.u32 2102212464, %v2793
      %v2806 = vshrl.u32 920167782, %v2794
      %v2807 = vor.u32 %v2805, %v2806
      %v2808 = vshll.u32 920167782, %v2793
      %v2809 = vshrl.u32 1326507024, %v2794
      %v2810 = vor.u32 %v2808, %v2809
      %vm2811 = vcmp.lt.s32.totalorder %v2792, 1
      %vm2812 = vcmp.lt.s32.totalorder %v2792, 2
      %vm2813 = vcmp.lt.s32.totalorder %v2792, 3
      %vm2814 = vcmp.lt.s32.totalorder %v2792, 4
      %v2815 = vsel %vm2811, %v2795, %v2798
      %v2816 = vsel %vm2814, %v2804, 2102212464
      %v2817 = vsel %vm2813, %v2801, %v2816
      %v2818 = vsel %vm2812, %v2815, %v2817
      %v2819 = vsel %vm2811, %v2798, %v2801
      %v2820 = vsel %vm2814, %v2807, 920167782
      %v2821 = vsel %vm2813, %v2804, %v2820
      %v2822 = vsel %vm2812, %v2819, %v2821
      %v2823 = vsel %vm2811, %v2801, %v2804
      %v2824 = vsel %vm2814, %v2810, 1326507024
      %v2825 = vsel %vm2813, %v2807, %v2824
      %v2826 = vsel %vm2812, %v2823, %v2825
      %v2827 = vshll.u32 %v2787, 8
      %v2828 = vmul.u32.u64.compose %v2827, %v2826
      %v2829 = vextract.low.u32 %v2828
      %v2830 = vextract.high.u32 %v2828
      %v2831 = vmul.u32.u64.compose %v2827, %v2822
      %v2832 = vextract.low.u32 %v2831
      %v2833 = vextract.high.u32 %v2831
      %v2834 = vmul.u32 %v2827, %v2818
      %v2835 = vadd.s32 %v2830, %v2832
      %vm2836 = vc.u32 %v2830, %v2832
      %v2837 = vadd.s32 %v2833, 1
      %v2838 = vsel %vm2836, %v2837, %v2833
      %v2839 = vadd.s32 %v2834, %v2838
      %v2840 = vadd.s32 %v2839, 536870912
      %v2841 = vshrl.u32 %v2840, 30
      %v2842 = vshll.u32 %v2841, 30
      %v2843 = vsub.s32 %v2839, %v2842
      %vm2844 = vcmp.lt.s32.totalorder %v2843, 0
      %v2845 = vsub.s32 0, %v2843
      %v2846 = vsel %vm2844, %v2845, %v2843
      %v2847 = vclz %v2846
      %v2848 = vsub.s32 %v2847, 2
      %vm2849 = vcmp.gt.s32.totalorder 0, %v2848
      %v2850 = vsel %vm2849, 0, %v2848
      %v2851 = vsub.s32 32, %v2850
      %v2852 = vshll.u32 %v2843, %v2850
      %v2853 = vshrl.u32 %v2835, %v2851
      %v2854 = vor.u32 %v2852, %v2853
      %v2855 = vsub.s32 4294967266, %v2850
      %v2856 = vadd.s32 %v2855, 127
      %v2857 = vshll.u32 %v2856, 23
      %v2858 = vor.u32 4788187, %v2857
      %v2859 = vand.u32 2147483647, %v2858
      %v2861 = vcvt.s32.f32 %v2854
      %v2862 = vmul.f32 %v2861, %v2859
      %v2863 = vxor.u32 %v2862, 2147483648
      %v2864 = vsel %vm2781, %v2863, %v2862
      %v2865 = vsub.s32 4, %v2841
      %v2866 = vsel %vm2781, %v2865, %v2841
      %v2867 = vsel %vm2780, %v449, %v2864
      %v2868 = vsel %vm2780, 0, %v2866
      %v2869 = vcosq.f32.pop %v2867
      %v2870 = vsinq.f32.pop %v2867
      %vm2871 = vweird.f32 %v449
      %v2872 = vand.u32 %v2868, 3
      %vm2873 = vcmp.lt.s32.totalorder %v2872, 2
      %vm2874 = vcmp.eq.s32.totalorder %v2872, 0
      %v2875 = vxor.u32 %v2870, 2147483648
      %v2876 = vsel %vm2874, %v2869, %v2875
      %vm2877 = vcmp.eq.s32.totalorder %v2872, 2
      %v2878 = vxor.u32 %v2869, 2147483648
      %v2879 = vsel %vm2877, %v2878, %v2870
      %v2880 = vsel %vm2873, %v2876, %v2879
      %v2881 = vsel %vm2871, nan, %v2880
      %v2882 = vand.u32 2147483647, %v454
      %vm2883 = vcmp.le.f32.partialorder %v2882, 0.7853982
      %vm2884 = vcmp.lt.s32.totalorder %v454, 0
      %v2885 = vand.u32 %v454, 2139095040
      %v2886 = vshrl.u32 %v2885, 23
      %v2887 = vsub.s32 %v2886, 127
      %v2888 = vand.u32 2147483647, %v454
      %v2889 = vand.u32 %v2888, 8388607
      %v2890 = vor.u32 %v2889, 8388608
      %v2891 = vsub.s32 0, %v2890
      %v2892 = vadd.s32 %v2887, 1
      %vm2893 = vcmp.gt.s32.totalorder %v2892, 0
      %v2894 = vsel %vm2893, %v2892, 0
      %v2895 = vshrl.u32 %v2894, 5
      %v2896 = vand.u32 %v2894, 31
      %v2897 = vsub.s32 32, %v2896
      %v2898 = vshrl.u32 683565275, %v2897
      %v2899 = vshll.u32 683565275, %v2896
      %v2900 = vshrl.u32 2475754826, %v2897
      %v2901 = vor.u32 %v2899, %v2900
      %v2902 = vshll.u32 2475754826, %v2896
      %v2903 = vshrl.u32 2131351028, %v2897
      %v2904 = vor.u32 %v2902, %v2903
      %v2905 = vshll.u32 2131351028, %v2896
      %v2906 = vshrl.u32 2102212464, %v2897
      %v2907 = vor.u32 %v2905, %v2906
      %v2908 = vshll.u32 2102212464, %v2896
      %v2909 = vshrl.u32 920167782, %v2897
      %v2910 = vor.u32 %v2908, %v2909
      %v2911 = vshll.u32 920167782, %v2896
      %v2912 = vshrl.u32 1326507024, %v2897
      %v2913 = vor.u32 %v2911, %v2912
      %vm2914 = vcmp.lt.s32.totalorder %v2895, 1
      %vm2915 = vcmp.lt.s32.totalorder %v2895, 2
      %vm2916 = vcmp.lt.s32.totalorder %v2895, 3
      %vm2917 = vcmp.lt.s32.totalorder %v2895, 4
      %v2918 = vsel %vm2914, %v2898, %v2901
      %v2919 = vsel %vm2917, %v2907, 2102212464
      %v2920 = vsel %vm2916, %v2904, %v2919
      %v2921 = vsel %vm2915, %v2918, %v2920
      %v2922 = vsel %vm2914, %v2901, %v2904
      %v2923 = vsel %vm2917, %v2910, 920167782
      %v2924 = vsel %vm2916, %v2907, %v2923
      %v2925 = vsel %vm2915, %v2922, %v2924
      %v2926 = vsel %vm2914, %v2904, %v2907
      %v2927 = vsel %vm2917, %v2913, 1326507024
      %v2928 = vsel %vm2916, %v2910, %v2927
      %v2929 = vsel %vm2915, %v2926, %v2928
      %v2930 = vshll.u32 %v2890, 8
      %v2931 = vmul.u32.u64.compose %v2930, %v2929
      %v2932 = vextract.low.u32 %v2931
      %v2933 = vextract.high.u32 %v2931
      %v2934 = vmul.u32.u64.compose %v2930, %v2925
      %v2935 = vextract.low.u32 %v2934
      %v2936 = vextract.high.u32 %v2934
      %v2937 = vmul.u32 %v2930, %v2921
      %v2938 = vadd.s32 %v2933, %v2935
      %vm2939 = vc.u32 %v2933, %v2935
      %v2940 = vadd.s32 %v2936, 1
      %v2941 = vsel %vm2939, %v2940, %v2936
      %v2942 = vadd.s32 %v2937, %v2941
      %v2943 = vadd.s32 %v2942, 536870912
      %v2944 = vshrl.u32 %v2943, 30
      %v2945 = vshll.u32 %v2944, 30
      %v2946 = vsub.s32 %v2942, %v2945
      %vm2947 = vcmp.lt.s32.totalorder %v2946, 0
      %v2948 = vsub.s32 0, %v2946
      %v2949 = vsel %vm2947, %v2948, %v2946
      %v2950 = vclz %v2949
      %v2951 = vsub.s32 %v2950, 2
      %vm2952 = vcmp.gt.s32.totalorder 0, %v2951
      %v2953 = vsel %vm2952, 0, %v2951
      %v2954 = vsub.s32 32, %v2953
      %v2955 = vshll.u32 %v2946, %v2953
      %v2956 = vshrl.u32 %v2938, %v2954
      %v2957 = vor.u32 %v2955, %v2956
      %v2958 = vsub.s32 4294967266, %v2953
      %v2959 = vadd.s32 %v2958, 127
      %v2960 = vshll.u32 %v2959, 23
      %v2961 = vor.u32 4788187, %v2960
      %v2962 = vand.u32 2147483647, %v2961
      %v2964 = vcvt.s32.f32 %v2957
      %v2965 = vmul.f32 %v2964, %v2962
      %v2966 = vxor.u32 %v2965, 2147483648
      %v2967 = vsel %vm2884, %v2966, %v2965
      %v2968 = vsub.s32 4, %v2944
      %v2969 = vsel %vm2884, %v2968, %v2944
      %v2970 = vsel %vm2883, %v454, %v2967
      %v2971 = vsel %vm2883, 0, %v2969
      %v2972 = vcosq.f32.pop %v2970
      %v2973 = vsinq.f32.pop %v2970
      %vm2974 = vweird.f32 %v454
      %v2975 = vand.u32 %v2971, 3
      %vm2976 = vcmp.lt.s32.totalorder %v2975, 2
      %vm2977 = vcmp.eq.s32.totalorder %v2975, 0
      %v2978 = vxor.u32 %v2973, 2147483648
      %v2979 = vsel %vm2977, %v2972, %v2978
      %vm2980 = vcmp.eq.s32.totalorder %v2975, 2
      %v2981 = vxor.u32 %v2972, 2147483648
      %v2982 = vsel %vm2980, %v2981, %v2973
      %v2983 = vsel %vm2976, %v2979, %v2982
      %v2984 = vsel %vm2974, nan, %v2983
      %v2985 = vand.u32 2147483647, %v459
      %vm2986 = vcmp.le.f32.partialorder %v2985, 0.7853982
      %vm2987 = vcmp.lt.s32.totalorder %v459, 0
      %v2988 = vand.u32 %v459, 2139095040
      %v2989 = vshrl.u32 %v2988, 23
      %v2990 = vsub.s32 %v2989, 127
      %v2991 = vand.u32 2147483647, %v459
      %v2992 = vand.u32 %v2991, 8388607
      %v2993 = vor.u32 %v2992, 8388608
      %v2994 = vsub.s32 0, %v2993
      %v2995 = vadd.s32 %v2990, 1
      %vm2996 = vcmp.gt.s32.totalorder %v2995, 0
      %v2997 = vsel %vm2996, %v2995, 0
      %v2998 = vshrl.u32 %v2997, 5
      %v2999 = vand.u32 %v2997, 31
      %v3000 = vsub.s32 32, %v2999
      %v3001 = vshrl.u32 683565275, %v3000
      %v3002 = vshll.u32 683565275, %v2999
      %v3003 = vshrl.u32 2475754826, %v3000
      %v3004 = vor.u32 %v3002, %v3003
      %v3005 = vshll.u32 2475754826, %v2999
      %v3006 = vshrl.u32 2131351028, %v3000
      %v3007 = vor.u32 %v3005, %v3006
      %v3008 = vshll.u32 2131351028, %v2999
      %v3009 = vshrl.u32 2102212464, %v3000
      %v3010 = vor.u32 %v3008, %v3009
      %v3011 = vshll.u32 2102212464, %v2999
      %v3012 = vshrl.u32 920167782, %v3000
      %v3013 = vor.u32 %v3011, %v3012
      %v3014 = vshll.u32 920167782, %v2999
      %v3015 = vshrl.u32 1326507024, %v3000
      %v3016 = vor.u32 %v3014, %v3015
      %vm3017 = vcmp.lt.s32.totalorder %v2998, 1
      %vm3018 = vcmp.lt.s32.totalorder %v2998, 2
      %vm3019 = vcmp.lt.s32.totalorder %v2998, 3
      %vm3020 = vcmp.lt.s32.totalorder %v2998, 4
      %v3021 = vsel %vm3017, %v3001, %v3004
      %v3022 = vsel %vm3020, %v3010, 2102212464
      %v3023 = vsel %vm3019, %v3007, %v3022
      %v3024 = vsel %vm3018, %v3021, %v3023
      %v3025 = vsel %vm3017, %v3004, %v3007
      %v3026 = vsel %vm3020, %v3013, 920167782
      %v3027 = vsel %vm3019, %v3010, %v3026
      %v3028 = vsel %vm3018, %v3025, %v3027
      %v3029 = vsel %vm3017, %v3007, %v3010
      %v3030 = vsel %vm3020, %v3016, 1326507024
      %v3031 = vsel %vm3019, %v3013, %v3030
      %v3032 = vsel %vm3018, %v3029, %v3031
      %v3033 = vshll.u32 %v2993, 8
      %v3034 = vmul.u32.u64.compose %v3033, %v3032
      %v3035 = vextract.low.u32 %v3034
      %v3036 = vextract.high.u32 %v3034
      %v3037 = vmul.u32.u64.compose %v3033, %v3028
      %v3038 = vextract.low.u32 %v3037
      %v3039 = vextract.high.u32 %v3037
      %v3040 = vmul.u32 %v3033, %v3024
      %v3041 = vadd.s32 %v3036, %v3038
      %vm3042 = vc.u32 %v3036, %v3038
      %v3043 = vadd.s32 %v3039, 1
      %v3044 = vsel %vm3042, %v3043, %v3039
      %v3045 = vadd.s32 %v3040, %v3044
      %v3046 = vadd.s32 %v3045, 536870912
      %v3047 = vshrl.u32 %v3046, 30
      %v3048 = vshll.u32 %v3047, 30
      %v3049 = vsub.s32 %v3045, %v3048
      %vm3050 = vcmp.lt.s32.totalorder %v3049, 0
      %v3051 = vsub.s32 0, %v3049
      %v3052 = vsel %vm3050, %v3051, %v3049
      %v3053 = vclz %v3052
      %v3054 = vsub.s32 %v3053, 2
      %vm3055 = vcmp.gt.s32.totalorder 0, %v3054
      %v3056 = vsel %vm3055, 0, %v3054
      %v3057 = vsub.s32 32, %v3056
      %v3058 = vshll.u32 %v3049, %v3056
      %v3059 = vshrl.u32 %v3041, %v3057
      %v3060 = vor.u32 %v3058, %v3059
      %v3061 = vsub.s32 4294967266, %v3056
      %v3062 = vadd.s32 %v3061, 127
      %v3063 = vshll.u32 %v3062, 23
      %v3064 = vor.u32 4788187, %v3063
      %v3065 = vand.u32 2147483647, %v3064
      %v3067 = vcvt.s32.f32 %v3060
      %v3068 = vmul.f32 %v3067, %v3065
      %v3069 = vxor.u32 %v3068, 2147483648
      %v3070 = vsel %vm2987, %v3069, %v3068
      %v3071 = vsub.s32 4, %v3047
      %v3072 = vsel %vm2987, %v3071, %v3047
      %v3073 = vsel %vm2986, %v459, %v3070
      %v3074 = vsel %vm2986, 0, %v3072
      %v3075 = vcosq.f32.pop %v3073
      %v3076 = vsinq.f32.pop %v3073
      %vm3077 = vweird.f32 %v459
      %v3078 = vand.u32 %v3074, 3
      %vm3079 = vcmp.lt.s32.totalorder %v3078, 2
      %vm3080 = vcmp.eq.s32.totalorder %v3078, 0
      %v3081 = vxor.u32 %v3076, 2147483648
      %v3082 = vsel %vm3080, %v3075, %v3081
      %vm3083 = vcmp.eq.s32.totalorder %v3078, 2
      %v3084 = vxor.u32 %v3075, 2147483648
      %v3085 = vsel %vm3083, %v3084, %v3076
      %v3086 = vsel %vm3079, %v3082, %v3085
      %v3087 = vsel %vm3077, nan, %v3086
      %v3088 = vand.u32 2147483647, %v464
      %vm3089 = vcmp.le.f32.partialorder %v3088, 0.7853982
      %vm3090 = vcmp.lt.s32.totalorder %v464, 0
      %v3091 = vand.u32 %v464, 2139095040
      %v3092 = vshrl.u32 %v3091, 23
      %v3093 = vsub.s32 %v3092, 127
      %v3094 = vand.u32 2147483647, %v464
      %v3095 = vand.u32 %v3094, 8388607
      %v3096 = vor.u32 %v3095, 8388608
      %v3097 = vsub.s32 0, %v3096
      %v3098 = vadd.s32 %v3093, 1
      %vm3099 = vcmp.gt.s32.totalorder %v3098, 0
      %v3100 = vsel %vm3099, %v3098, 0
      %v3101 = vshrl.u32 %v3100, 5
      %v3102 = vand.u32 %v3100, 31
      %v3103 = vsub.s32 32, %v3102
      %v3104 = vshrl.u32 683565275, %v3103
      %v3105 = vshll.u32 683565275, %v3102
      %v3106 = vshrl.u32 2475754826, %v3103
      %v3107 = vor.u32 %v3105, %v3106
      %v3108 = vshll.u32 2475754826, %v3102
      %v3109 = vshrl.u32 2131351028, %v3103
      %v3110 = vor.u32 %v3108, %v3109
      %v3111 = vshll.u32 2131351028, %v3102
      %v3112 = vshrl.u32 2102212464, %v3103
      %v3113 = vor.u32 %v3111, %v3112
      %v3114 = vshll.u32 2102212464, %v3102
      %v3115 = vshrl.u32 920167782, %v3103
      %v3116 = vor.u32 %v3114, %v3115
      %v3117 = vshll.u32 920167782, %v3102
      %v3118 = vshrl.u32 1326507024, %v3103
      %v3119 = vor.u32 %v3117, %v3118
      %vm3120 = vcmp.lt.s32.totalorder %v3101, 1
      %vm3121 = vcmp.lt.s32.totalorder %v3101, 2
      %vm3122 = vcmp.lt.s32.totalorder %v3101, 3
      %vm3123 = vcmp.lt.s32.totalorder %v3101, 4
      %v3124 = vsel %vm3120, %v3104, %v3107
      %v3125 = vsel %vm3123, %v3113, 2102212464
      %v3126 = vsel %vm3122, %v3110, %v3125
      %v3127 = vsel %vm3121, %v3124, %v3126
      %v3128 = vsel %vm3120, %v3107, %v3110
      %v3129 = vsel %vm3123, %v3116, 920167782
      %v3130 = vsel %vm3122, %v3113, %v3129
      %v3131 = vsel %vm3121, %v3128, %v3130
      %v3132 = vsel %vm3120, %v3110, %v3113
      %v3133 = vsel %vm3123, %v3119, 1326507024
      %v3134 = vsel %vm3122, %v3116, %v3133
      %v3135 = vsel %vm3121, %v3132, %v3134
      %v3136 = vshll.u32 %v3096, 8
      %v3137 = vmul.u32.u64.compose %v3136, %v3135
      %v3138 = vextract.low.u32 %v3137
      %v3139 = vextract.high.u32 %v3137
      %v3140 = vmul.u32.u64.compose %v3136, %v3131
      %v3141 = vextract.low.u32 %v3140
      %v3142 = vextract.high.u32 %v3140
      %v3143 = vmul.u32 %v3136, %v3127
      %v3144 = vadd.s32 %v3139, %v3141
      %vm3145 = vc.u32 %v3139, %v3141
      %v3146 = vadd.s32 %v3142, 1
      %v3147 = vsel %vm3145, %v3146, %v3142
      %v3148 = vadd.s32 %v3143, %v3147
      %v3149 = vadd.s32 %v3148, 536870912
      %v3150 = vshrl.u32 %v3149, 30
      %v3151 = vshll.u32 %v3150, 30
      %v3152 = vsub.s32 %v3148, %v3151
      %vm3153 = vcmp.lt.s32.totalorder %v3152, 0
      %v3154 = vsub.s32 0, %v3152
      %v3155 = vsel %vm3153, %v3154, %v3152
      %v3156 = vclz %v3155
      %v3157 = vsub.s32 %v3156, 2
      %vm3158 = vcmp.gt.s32.totalorder 0, %v3157
      %v3159 = vsel %vm3158, 0, %v3157
      %v3160 = vsub.s32 32, %v3159
      %v3161 = vshll.u32 %v3152, %v3159
      %v3162 = vshrl.u32 %v3144, %v3160
      %v3163 = vor.u32 %v3161, %v3162
      %v3164 = vsub.s32 4294967266, %v3159
      %v3165 = vadd.s32 %v3164, 127
      %v3166 = vshll.u32 %v3165, 23
      %v3167 = vor.u32 4788187, %v3166
      %v3168 = vand.u32 2147483647, %v3167
      %v3170 = vcvt.s32.f32 %v3163
      %v3171 = vmul.f32 %v3170, %v3168
      %v3172 = vxor.u32 %v3171, 2147483648
      %v3173 = vsel %vm3090, %v3172, %v3171
      %v3174 = vsub.s32 4, %v3150
      %v3175 = vsel %vm3090, %v3174, %v3150
      %v3176 = vsel %vm3089, %v464, %v3173
      %v3177 = vsel %vm3089, 0, %v3175
      %v3178 = vcosq.f32.pop %v3176
      %v3179 = vsinq.f32.pop %v3176
      %vm3180 = vweird.f32 %v464
      %v3181 = vand.u32 %v3177, 3
      %vm3182 = vcmp.lt.s32.totalorder %v3181, 2
      %vm3183 = vcmp.eq.s32.totalorder %v3181, 0
      %v3184 = vxor.u32 %v3179, 2147483648
      %v3185 = vsel %vm3183, %v3178, %v3184
      %vm3186 = vcmp.eq.s32.totalorder %v3181, 2
      %v3187 = vxor.u32 %v3178, 2147483648
      %v3188 = vsel %vm3186, %v3187, %v3179
      %v3189 = vsel %vm3182, %v3185, %v3188
      %v3190 = vsel %vm3180, nan, %v3189
      %v3191 = vand.u32 2147483647, %v469
      %vm3192 = vcmp.le.f32.partialorder %v3191, 0.7853982
      %vm3193 = vcmp.lt.s32.totalorder %v469, 0
      %v3194 = vand.u32 %v469, 2139095040
      %v3195 = vshrl.u32 %v3194, 23
      %v3196 = vsub.s32 %v3195, 127
      %v3197 = vand.u32 2147483647, %v469
      %v3198 = vand.u32 %v3197, 8388607
      %v3199 = vor.u32 %v3198, 8388608
      %v3200 = vsub.s32 0, %v3199
      %v3201 = vadd.s32 %v3196, 1
      %vm3202 = vcmp.gt.s32.totalorder %v3201, 0
      %v3203 = vsel %vm3202, %v3201, 0
      %v3204 = vshrl.u32 %v3203, 5
      %v3205 = vand.u32 %v3203, 31
      %v3206 = vsub.s32 32, %v3205
      %v3207 = vshrl.u32 683565275, %v3206
      %v3208 = vshll.u32 683565275, %v3205
      %v3209 = vshrl.u32 2475754826, %v3206
      %v3210 = vor.u32 %v3208, %v3209
      %v3211 = vshll.u32 2475754826, %v3205
      %v3212 = vshrl.u32 2131351028, %v3206
      %v3213 = vor.u32 %v3211, %v3212
      %v3214 = vshll.u32 2131351028, %v3205
      %v3215 = vshrl.u32 2102212464, %v3206
      %v3216 = vor.u32 %v3214, %v3215
      %v3217 = vshll.u32 2102212464, %v3205
      %v3218 = vshrl.u32 920167782, %v3206
      %v3219 = vor.u32 %v3217, %v3218
      %v3220 = vshll.u32 920167782, %v3205
      %v3221 = vshrl.u32 1326507024, %v3206
      %v3222 = vor.u32 %v3220, %v3221
      %vm3223 = vcmp.lt.s32.totalorder %v3204, 1
      %vm3224 = vcmp.lt.s32.totalorder %v3204, 2
      %vm3225 = vcmp.lt.s32.totalorder %v3204, 3
      %vm3226 = vcmp.lt.s32.totalorder %v3204, 4
      %v3227 = vsel %vm3223, %v3207, %v3210
      %v3228 = vsel %vm3226, %v3216, 2102212464
      %v3229 = vsel %vm3225, %v3213, %v3228
      %v3230 = vsel %vm3224, %v3227, %v3229
      %v3231 = vsel %vm3223, %v3210, %v3213
      %v3232 = vsel %vm3226, %v3219, 920167782
      %v3233 = vsel %vm3225, %v3216, %v3232
      %v3234 = vsel %vm3224, %v3231, %v3233
      %v3235 = vsel %vm3223, %v3213, %v3216
      %v3236 = vsel %vm3226, %v3222, 1326507024
      %v3237 = vsel %vm3225, %v3219, %v3236
      %v3238 = vsel %vm3224, %v3235, %v3237
      %v3239 = vshll.u32 %v3199, 8
      %v3240 = vmul.u32.u64.compose %v3239, %v3238
      %v3241 = vextract.low.u32 %v3240
      %v3242 = vextract.high.u32 %v3240
      %v3243 = vmul.u32.u64.compose %v3239, %v3234
      %v3244 = vextract.low.u32 %v3243
      %v3245 = vextract.high.u32 %v3243
      %v3246 = vmul.u32 %v3239, %v3230
      %v3247 = vadd.s32 %v3242, %v3244
      %vm3248 = vc.u32 %v3242, %v3244
      %v3249 = vadd.s32 %v3245, 1
      %v3250 = vsel %vm3248, %v3249, %v3245
      %v3251 = vadd.s32 %v3246, %v3250
      %v3252 = vadd.s32 %v3251, 536870912
      %v3253 = vshrl.u32 %v3252, 30
      %v3254 = vshll.u32 %v3253, 30
      %v3255 = vsub.s32 %v3251, %v3254
      %vm3256 = vcmp.lt.s32.totalorder %v3255, 0
      %v3257 = vsub.s32 0, %v3255
      %v3258 = vsel %vm3256, %v3257, %v3255
      %v3259 = vclz %v3258
      %v3260 = vsub.s32 %v3259, 2
      %vm3261 = vcmp.gt.s32.totalorder 0, %v3260
      %v3262 = vsel %vm3261, 0, %v3260
      %v3263 = vsub.s32 32, %v3262
      %v3264 = vshll.u32 %v3255, %v3262
      %v3265 = vshrl.u32 %v3247, %v3263
      %v3266 = vor.u32 %v3264, %v3265
      %v3267 = vsub.s32 4294967266, %v3262
      %v3268 = vadd.s32 %v3267, 127
      %v3269 = vshll.u32 %v3268, 23
      %v3270 = vor.u32 4788187, %v3269
      %v3271 = vand.u32 2147483647, %v3270
      %v3273 = vcvt.s32.f32 %v3266
      %v3274 = vmul.f32 %v3273, %v3271
      %v3275 = vxor.u32 %v3274, 2147483648
      %v3276 = vsel %vm3193, %v3275, %v3274
      %v3277 = vsub.s32 4, %v3253
      %v3278 = vsel %vm3193, %v3277, %v3253
      %v3279 = vsel %vm3192, %v469, %v3276
      %v3280 = vsel %vm3192, 0, %v3278
      %v3281 = vcosq.f32.pop %v3279
      %v3282 = vsinq.f32.pop %v3279
      %vm3283 = vweird.f32 %v469
      %v3284 = vand.u32 %v3280, 3
      %vm3285 = vcmp.lt.s32.totalorder %v3284, 2
      %vm3286 = vcmp.eq.s32.totalorder %v3284, 0
      %v3287 = vxor.u32 %v3282, 2147483648
      %v3288 = vsel %vm3286, %v3281, %v3287
      %vm3289 = vcmp.eq.s32.totalorder %v3284, 2
      %v3290 = vxor.u32 %v3281, 2147483648
      %v3291 = vsel %vm3289, %v3290, %v3282
      %v3292 = vsel %vm3285, %v3288, %v3291
      %v3293 = vsel %vm3283, nan, %v3292
      %v3294 = vand.u32 2147483647, %v474
      %vm3295 = vcmp.le.f32.partialorder %v3294, 0.7853982
      %vm3296 = vcmp.lt.s32.totalorder %v474, 0
      %v3297 = vand.u32 %v474, 2139095040
      %v3298 = vshrl.u32 %v3297, 23
      %v3299 = vsub.s32 %v3298, 127
      %v3300 = vand.u32 2147483647, %v474
      %v3301 = vand.u32 %v3300, 8388607
      %v3302 = vor.u32 %v3301, 8388608
      %v3303 = vsub.s32 0, %v3302
      %v3304 = vadd.s32 %v3299, 1
      %vm3305 = vcmp.gt.s32.totalorder %v3304, 0
      %v3306 = vsel %vm3305, %v3304, 0
      %v3307 = vshrl.u32 %v3306, 5
      %v3308 = vand.u32 %v3306, 31
      %v3309 = vsub.s32 32, %v3308
      %v3310 = vshrl.u32 683565275, %v3309
      %v3311 = vshll.u32 683565275, %v3308
      %v3312 = vshrl.u32 2475754826, %v3309
      %v3313 = vor.u32 %v3311, %v3312
      %v3314 = vshll.u32 2475754826, %v3308
      %v3315 = vshrl.u32 2131351028, %v3309
      %v3316 = vor.u32 %v3314, %v3315
      %v3317 = vshll.u32 2131351028, %v3308
      %v3318 = vshrl.u32 2102212464, %v3309
      %v3319 = vor.u32 %v3317, %v3318
      %v3320 = vshll.u32 2102212464, %v3308
      %v3321 = vshrl.u32 920167782, %v3309
      %v3322 = vor.u32 %v3320, %v3321
      %v3323 = vshll.u32 920167782, %v3308
      %v3324 = vshrl.u32 1326507024, %v3309
      %v3325 = vor.u32 %v3323, %v3324
      %vm3326 = vcmp.lt.s32.totalorder %v3307, 1
      %vm3327 = vcmp.lt.s32.totalorder %v3307, 2
      %vm3328 = vcmp.lt.s32.totalorder %v3307, 3
      %vm3329 = vcmp.lt.s32.totalorder %v3307, 4
      %v3330 = vsel %vm3326, %v3310, %v3313
      %v3331 = vsel %vm3329, %v3319, 2102212464
      %v3332 = vsel %vm3328, %v3316, %v3331
      %v3333 = vsel %vm3327, %v3330, %v3332
      %v3334 = vsel %vm3326, %v3313, %v3316
      %v3335 = vsel %vm3329, %v3322, 920167782
      %v3336 = vsel %vm3328, %v3319, %v3335
      %v3337 = vsel %vm3327, %v3334, %v3336
      %v3338 = vsel %vm3326, %v3316, %v3319
      %v3339 = vsel %vm3329, %v3325, 1326507024
      %v3340 = vsel %vm3328, %v3322, %v3339
      %v3341 = vsel %vm3327, %v3338, %v3340
      %v3342 = vshll.u32 %v3302, 8
      %v3343 = vmul.u32.u64.compose %v3342, %v3341
      %v3344 = vextract.low.u32 %v3343
      %v3345 = vextract.high.u32 %v3343
      %v3346 = vmul.u32.u64.compose %v3342, %v3337
      %v3347 = vextract.low.u32 %v3346
      %v3348 = vextract.high.u32 %v3346
      %v3349 = vmul.u32 %v3342, %v3333
      %v3350 = vadd.s32 %v3345, %v3347
      %vm3351 = vc.u32 %v3345, %v3347
      %v3352 = vadd.s32 %v3348, 1
      %v3353 = vsel %vm3351, %v3352, %v3348
      %v3354 = vadd.s32 %v3349, %v3353
      %v3355 = vadd.s32 %v3354, 536870912
      %v3356 = vshrl.u32 %v3355, 30
      %v3357 = vshll.u32 %v3356, 30
      %v3358 = vsub.s32 %v3354, %v3357
      %vm3359 = vcmp.lt.s32.totalorder %v3358, 0
      %v3360 = vsub.s32 0, %v3358
      %v3361 = vsel %vm3359, %v3360, %v3358
      %v3362 = vclz %v3361
      %v3363 = vsub.s32 %v3362, 2
      %vm3364 = vcmp.gt.s32.totalorder 0, %v3363
      %v3365 = vsel %vm3364, 0, %v3363
      %v3366 = vsub.s32 32, %v3365
      %v3367 = vshll.u32 %v3358, %v3365
      %v3368 = vshrl.u32 %v3350, %v3366
      %v3369 = vor.u32 %v3367, %v3368
      %v3370 = vsub.s32 4294967266, %v3365
      %v3371 = vadd.s32 %v3370, 127
      %v3372 = vshll.u32 %v3371, 23
      %v3373 = vor.u32 4788187, %v3372
      %v3374 = vand.u32 2147483647, %v3373
      %v3376 = vcvt.s32.f32 %v3369
      %v3377 = vmul.f32 %v3376, %v3374
      %v3378 = vxor.u32 %v3377, 2147483648
      %v3379 = vsel %vm3296, %v3378, %v3377
      %v3380 = vsub.s32 4, %v3356
      %v3381 = vsel %vm3296, %v3380, %v3356
      %v3382 = vsel %vm3295, %v474, %v3379
      %v3383 = vsel %vm3295, 0, %v3381
      %v3384 = vcosq.f32.pop %v3382
      %v3385 = vsinq.f32.pop %v3382
      %vm3386 = vweird.f32 %v474
      %v3387 = vand.u32 %v3383, 3
      %vm3388 = vcmp.lt.s32.totalorder %v3387, 2
      %vm3389 = vcmp.eq.s32.totalorder %v3387, 0
      %v3390 = vxor.u32 %v3385, 2147483648
      %v3391 = vsel %vm3389, %v3384, %v3390
      %vm3392 = vcmp.eq.s32.totalorder %v3387, 2
      %v3393 = vxor.u32 %v3384, 2147483648
      %v3394 = vsel %vm3392, %v3393, %v3385
      %v3395 = vsel %vm3388, %v3391, %v3394
      %v3396 = vsel %vm3386, nan, %v3395
      %v3397 = vand.u32 2147483647, %v479
      %vm3398 = vcmp.le.f32.partialorder %v3397, 0.7853982
      %vm3399 = vcmp.lt.s32.totalorder %v479, 0
      %v3400 = vand.u32 %v479, 2139095040
      %v3401 = vshrl.u32 %v3400, 23
      %v3402 = vsub.s32 %v3401, 127
      %v3403 = vand.u32 2147483647, %v479
      %v3404 = vand.u32 %v3403, 8388607
      %v3405 = vor.u32 %v3404, 8388608
      %v3406 = vsub.s32 0, %v3405
      %v3407 = vadd.s32 %v3402, 1
      %vm3408 = vcmp.gt.s32.totalorder %v3407, 0
      %v3409 = vsel %vm3408, %v3407, 0
      %v3410 = vshrl.u32 %v3409, 5
      %v3411 = vand.u32 %v3409, 31
      %v3412 = vsub.s32 32, %v3411
      %v3413 = vshrl.u32 683565275, %v3412
      %v3414 = vshll.u32 683565275, %v3411
      %v3415 = vshrl.u32 2475754826, %v3412
      %v3416 = vor.u32 %v3414, %v3415
      %v3417 = vshll.u32 2475754826, %v3411
      %v3418 = vshrl.u32 2131351028, %v3412
      %v3419 = vor.u32 %v3417, %v3418
      %v3420 = vshll.u32 2131351028, %v3411
      %v3421 = vshrl.u32 2102212464, %v3412
      %v3422 = vor.u32 %v3420, %v3421
      %v3423 = vshll.u32 2102212464, %v3411
      %v3424 = vshrl.u32 920167782, %v3412
      %v3425 = vor.u32 %v3423, %v3424
      %v3426 = vshll.u32 920167782, %v3411
      %v3427 = vshrl.u32 1326507024, %v3412
      %v3428 = vor.u32 %v3426, %v3427
      %vm3429 = vcmp.lt.s32.totalorder %v3410, 1
      %vm3430 = vcmp.lt.s32.totalorder %v3410, 2
      %vm3431 = vcmp.lt.s32.totalorder %v3410, 3
      %vm3432 = vcmp.lt.s32.totalorder %v3410, 4
      %v3433 = vsel %vm3429, %v3413, %v3416
      %v3434 = vsel %vm3432, %v3422, 2102212464
      %v3435 = vsel %vm3431, %v3419, %v3434
      %v3436 = vsel %vm3430, %v3433, %v3435
      %v3437 = vsel %vm3429, %v3416, %v3419
      %v3438 = vsel %vm3432, %v3425, 920167782
      %v3439 = vsel %vm3431, %v3422, %v3438
      %v3440 = vsel %vm3430, %v3437, %v3439
      %v3441 = vsel %vm3429, %v3419, %v3422
      %v3442 = vsel %vm3432, %v3428, 1326507024
      %v3443 = vsel %vm3431, %v3425, %v3442
      %v3444 = vsel %vm3430, %v3441, %v3443
      %v3445 = vshll.u32 %v3405, 8
      %v3446 = vmul.u32.u64.compose %v3445, %v3444
      %v3447 = vextract.low.u32 %v3446
      %v3448 = vextract.high.u32 %v3446
      %v3449 = vmul.u32.u64.compose %v3445, %v3440
      %v3450 = vextract.low.u32 %v3449
      %v3451 = vextract.high.u32 %v3449
      %v3452 = vmul.u32 %v3445, %v3436
      %v3453 = vadd.s32 %v3448, %v3450
      %vm3454 = vc.u32 %v3448, %v3450
      %v3455 = vadd.s32 %v3451, 1
      %v3456 = vsel %vm3454, %v3455, %v3451
      %v3457 = vadd.s32 %v3452, %v3456
      %v3458 = vadd.s32 %v3457, 536870912
      %v3459 = vshrl.u32 %v3458, 30
      %v3460 = vshll.u32 %v3459, 30
      %v3461 = vsub.s32 %v3457, %v3460
      %vm3462 = vcmp.lt.s32.totalorder %v3461, 0
      %v3463 = vsub.s32 0, %v3461
      %v3464 = vsel %vm3462, %v3463, %v3461
      %v3465 = vclz %v3464
      %v3466 = vsub.s32 %v3465, 2
      %vm3467 = vcmp.gt.s32.totalorder 0, %v3466
      %v3468 = vsel %vm3467, 0, %v3466
      %v3469 = vsub.s32 32, %v3468
      %v3470 = vshll.u32 %v3461, %v3468
      %v3471 = vshrl.u32 %v3453, %v3469
      %v3472 = vor.u32 %v3470, %v3471
      %v3473 = vsub.s32 4294967266, %v3468
      %v3474 = vadd.s32 %v3473, 127
      %v3475 = vshll.u32 %v3474, 23
      %v3476 = vor.u32 4788187, %v3475
      %v3477 = vand.u32 2147483647, %v3476
      %v3479 = vcvt.s32.f32 %v3472
      %v3480 = vmul.f32 %v3479, %v3477
      %v3481 = vxor.u32 %v3480, 2147483648
      %v3482 = vsel %vm3399, %v3481, %v3480
      %v3483 = vsub.s32 4, %v3459
      %v3484 = vsel %vm3399, %v3483, %v3459
      %v3485 = vsel %vm3398, %v479, %v3482
      %v3486 = vsel %vm3398, 0, %v3484
      %v3487 = vcosq.f32.pop %v3485
      %v3488 = vsinq.f32.pop %v3485
      %vm3489 = vweird.f32 %v479
      %v3490 = vand.u32 %v3486, 3
      %vm3491 = vcmp.lt.s32.totalorder %v3490, 2
      %vm3492 = vcmp.eq.s32.totalorder %v3490, 0
      %v3493 = vxor.u32 %v3488, 2147483648
      %v3494 = vsel %vm3492, %v3487, %v3493
      %vm3495 = vcmp.eq.s32.totalorder %v3490, 2
      %v3496 = vxor.u32 %v3487, 2147483648
      %v3497 = vsel %vm3495, %v3496, %v3488
      %v3498 = vsel %vm3491, %v3494, %v3497
      %v3499 = vsel %vm3489, nan, %v3498
      %v3500 = vand.u32 2147483647, %v484
      %vm3501 = vcmp.le.f32.partialorder %v3500, 0.7853982
      %vm3502 = vcmp.lt.s32.totalorder %v484, 0
      %v3503 = vand.u32 %v484, 2139095040
      %v3504 = vshrl.u32 %v3503, 23
      %v3505 = vsub.s32 %v3504, 127
      %v3506 = vand.u32 2147483647, %v484
      %v3507 = vand.u32 %v3506, 8388607
      %v3508 = vor.u32 %v3507, 8388608
      %v3509 = vsub.s32 0, %v3508
      %v3510 = vadd.s32 %v3505, 1
      %vm3511 = vcmp.gt.s32.totalorder %v3510, 0
      %v3512 = vsel %vm3511, %v3510, 0
      %v3513 = vshrl.u32 %v3512, 5
      %v3514 = vand.u32 %v3512, 31
      %v3515 = vsub.s32 32, %v3514
      %v3516 = vshrl.u32 683565275, %v3515
      %v3517 = vshll.u32 683565275, %v3514
      %v3518 = vshrl.u32 2475754826, %v3515
      %v3519 = vor.u32 %v3517, %v3518
      %v3520 = vshll.u32 2475754826, %v3514
      %v3521 = vshrl.u32 2131351028, %v3515
      %v3522 = vor.u32 %v3520, %v3521
      %v3523 = vshll.u32 2131351028, %v3514
      %v3524 = vshrl.u32 2102212464, %v3515
      %v3525 = vor.u32 %v3523, %v3524
      %v3526 = vshll.u32 2102212464, %v3514
      %v3527 = vshrl.u32 920167782, %v3515
      %v3528 = vor.u32 %v3526, %v3527
      %v3529 = vshll.u32 920167782, %v3514
      %v3530 = vshrl.u32 1326507024, %v3515
      %v3531 = vor.u32 %v3529, %v3530
      %vm3532 = vcmp.lt.s32.totalorder %v3513, 1
      %vm3533 = vcmp.lt.s32.totalorder %v3513, 2
      %vm3534 = vcmp.lt.s32.totalorder %v3513, 3
      %vm3535 = vcmp.lt.s32.totalorder %v3513, 4
      %v3536 = vsel %vm3532, %v3516, %v3519
      %v3537 = vsel %vm3535, %v3525, 2102212464
      %v3538 = vsel %vm3534, %v3522, %v3537
      %v3539 = vsel %vm3533, %v3536, %v3538
      %v3540 = vsel %vm3532, %v3519, %v3522
      %v3541 = vsel %vm3535, %v3528, 920167782
      %v3542 = vsel %vm3534, %v3525, %v3541
      %v3543 = vsel %vm3533, %v3540, %v3542
      %v3544 = vsel %vm3532, %v3522, %v3525
      %v3545 = vsel %vm3535, %v3531, 1326507024
      %v3546 = vsel %vm3534, %v3528, %v3545
      %v3547 = vsel %vm3533, %v3544, %v3546
      %v3548 = vshll.u32 %v3508, 8
      %v3549 = vmul.u32.u64.compose %v3548, %v3547
      %v3550 = vextract.low.u32 %v3549
      %v3551 = vextract.high.u32 %v3549
      %v3552 = vmul.u32.u64.compose %v3548, %v3543
      %v3553 = vextract.low.u32 %v3552
      %v3554 = vextract.high.u32 %v3552
      %v3555 = vmul.u32 %v3548, %v3539
      %v3556 = vadd.s32 %v3551, %v3553
      %vm3557 = vc.u32 %v3551, %v3553
      %v3558 = vadd.s32 %v3554, 1
      %v3559 = vsel %vm3557, %v3558, %v3554
      %v3560 = vadd.s32 %v3555, %v3559
      %v3561 = vadd.s32 %v3560, 536870912
      %v3562 = vshrl.u32 %v3561, 30
      %v3563 = vshll.u32 %v3562, 30
      %v3564 = vsub.s32 %v3560, %v3563
      %vm3565 = vcmp.lt.s32.totalorder %v3564, 0
      %v3566 = vsub.s32 0, %v3564
      %v3567 = vsel %vm3565, %v3566, %v3564
      %v3568 = vclz %v3567
      %v3569 = vsub.s32 %v3568, 2
      %vm3570 = vcmp.gt.s32.totalorder 0, %v3569
      %v3571 = vsel %vm3570, 0, %v3569
      %v3572 = vsub.s32 32, %v3571
      %v3573 = vshll.u32 %v3564, %v3571
      %v3574 = vshrl.u32 %v3556, %v3572
      %v3575 = vor.u32 %v3573, %v3574
      %v3576 = vsub.s32 4294967266, %v3571
      %v3577 = vadd.s32 %v3576, 127
      %v3578 = vshll.u32 %v3577, 23
      %v3579 = vor.u32 4788187, %v3578
      %v3580 = vand.u32 2147483647, %v3579
      %v3582 = vcvt.s32.f32 %v3575
      %v3583 = vmul.f32 %v3582, %v3580
      %v3584 = vxor.u32 %v3583, 2147483648
      %v3585 = vsel %vm3502, %v3584, %v3583
      %v3586 = vsub.s32 4, %v3562
      %v3587 = vsel %vm3502, %v3586, %v3562
      %v3588 = vsel %vm3501, %v484, %v3585
      %v3589 = vsel %vm3501, 0, %v3587
      %v3590 = vcosq.f32.pop %v3588
      %v3591 = vsinq.f32.pop %v3588
      %vm3592 = vweird.f32 %v484
      %v3593 = vand.u32 %v3589, 3
      %vm3594 = vcmp.lt.s32.totalorder %v3593, 2
      %vm3595 = vcmp.eq.s32.totalorder %v3593, 0
      %v3596 = vxor.u32 %v3591, 2147483648
      %v3597 = vsel %vm3595, %v3590, %v3596
      %vm3598 = vcmp.eq.s32.totalorder %v3593, 2
      %v3599 = vxor.u32 %v3590, 2147483648
      %v3600 = vsel %vm3598, %v3599, %v3591
      %v3601 = vsel %vm3594, %v3597, %v3600
      %v3602 = vsel %vm3592, nan, %v3601
      %v3603 = vand.u32 2147483647, %v489
      %vm3604 = vcmp.le.f32.partialorder %v3603, 0.7853982
      %vm3605 = vcmp.lt.s32.totalorder %v489, 0
      %v3606 = vand.u32 %v489, 2139095040
      %v3607 = vshrl.u32 %v3606, 23
      %v3608 = vsub.s32 %v3607, 127
      %v3609 = vand.u32 2147483647, %v489
      %v3610 = vand.u32 %v3609, 8388607
      %v3611 = vor.u32 %v3610, 8388608
      %v3612 = vsub.s32 0, %v3611
      %v3613 = vadd.s32 %v3608, 1
      %vm3614 = vcmp.gt.s32.totalorder %v3613, 0
      %v3615 = vsel %vm3614, %v3613, 0
      %v3616 = vshrl.u32 %v3615, 5
      %v3617 = vand.u32 %v3615, 31
      %v3618 = vsub.s32 32, %v3617
      %v3619 = vshrl.u32 683565275, %v3618
      %v3620 = vshll.u32 683565275, %v3617
      %v3621 = vshrl.u32 2475754826, %v3618
      %v3622 = vor.u32 %v3620, %v3621
      %v3623 = vshll.u32 2475754826, %v3617
      %v3624 = vshrl.u32 2131351028, %v3618
      %v3625 = vor.u32 %v3623, %v3624
      %v3626 = vshll.u32 2131351028, %v3617
      %v3627 = vshrl.u32 2102212464, %v3618
      %v3628 = vor.u32 %v3626, %v3627
      %v3629 = vshll.u32 2102212464, %v3617
      %v3630 = vshrl.u32 920167782, %v3618
      %v3631 = vor.u32 %v3629, %v3630
      %v3632 = vshll.u32 920167782, %v3617
      %v3633 = vshrl.u32 1326507024, %v3618
      %v3634 = vor.u32 %v3632, %v3633
      %vm3635 = vcmp.lt.s32.totalorder %v3616, 1
      %vm3636 = vcmp.lt.s32.totalorder %v3616, 2
      %vm3637 = vcmp.lt.s32.totalorder %v3616, 3
      %vm3638 = vcmp.lt.s32.totalorder %v3616, 4
      %v3639 = vsel %vm3635, %v3619, %v3622
      %v3640 = vsel %vm3638, %v3628, 2102212464
      %v3641 = vsel %vm3637, %v3625, %v3640
      %v3642 = vsel %vm3636, %v3639, %v3641
      %v3643 = vsel %vm3635, %v3622, %v3625
      %v3644 = vsel %vm3638, %v3631, 920167782
      %v3645 = vsel %vm3637, %v3628, %v3644
      %v3646 = vsel %vm3636, %v3643, %v3645
      %v3647 = vsel %vm3635, %v3625, %v3628
      %v3648 = vsel %vm3638, %v3634, 1326507024
      %v3649 = vsel %vm3637, %v3631, %v3648
      %v3650 = vsel %vm3636, %v3647, %v3649
      %v3651 = vshll.u32 %v3611, 8
      %v3652 = vmul.u32.u64.compose %v3651, %v3650
      %v3653 = vextract.low.u32 %v3652
      %v3654 = vextract.high.u32 %v3652
      %v3655 = vmul.u32.u64.compose %v3651, %v3646
      %v3656 = vextract.low.u32 %v3655
      %v3657 = vextract.high.u32 %v3655
      %v3658 = vmul.u32 %v3651, %v3642
      %v3659 = vadd.s32 %v3654, %v3656
      %vm3660 = vc.u32 %v3654, %v3656
      %v3661 = vadd.s32 %v3657, 1
      %v3662 = vsel %vm3660, %v3661, %v3657
      %v3663 = vadd.s32 %v3658, %v3662
      %v3664 = vadd.s32 %v3663, 536870912
      %v3665 = vshrl.u32 %v3664, 30
      %v3666 = vshll.u32 %v3665, 30
      %v3667 = vsub.s32 %v3663, %v3666
      %vm3668 = vcmp.lt.s32.totalorder %v3667, 0
      %v3669 = vsub.s32 0, %v3667
      %v3670 = vsel %vm3668, %v3669, %v3667
      %v3671 = vclz %v3670
      %v3672 = vsub.s32 %v3671, 2
      %vm3673 = vcmp.gt.s32.totalorder 0, %v3672
      %v3674 = vsel %vm3673, 0, %v3672
      %v3675 = vsub.s32 32, %v3674
      %v3676 = vshll.u32 %v3667, %v3674
      %v3677 = vshrl.u32 %v3659, %v3675
      %v3678 = vor.u32 %v3676, %v3677
      %v3679 = vsub.s32 4294967266, %v3674
      %v3680 = vadd.s32 %v3679, 127
      %v3681 = vshll.u32 %v3680, 23
      %v3682 = vor.u32 4788187, %v3681
      %v3683 = vand.u32 2147483647, %v3682
      %v3685 = vcvt.s32.f32 %v3678
      %v3686 = vmul.f32 %v3685, %v3683
      %v3687 = vxor.u32 %v3686, 2147483648
      %v3688 = vsel %vm3605, %v3687, %v3686
      %v3689 = vsub.s32 4, %v3665
      %v3690 = vsel %vm3605, %v3689, %v3665
      %v3691 = vsel %vm3604, %v489, %v3688
      %v3692 = vsel %vm3604, 0, %v3690
      %v3693 = vcosq.f32.pop %v3691
      %v3694 = vsinq.f32.pop %v3691
      %vm3695 = vweird.f32 %v489
      %v3696 = vand.u32 %v3692, 3
      %vm3697 = vcmp.lt.s32.totalorder %v3696, 2
      %vm3698 = vcmp.eq.s32.totalorder %v3696, 0
      %v3699 = vxor.u32 %v3694, 2147483648
      %v3700 = vsel %vm3698, %v3693, %v3699
      %vm3701 = vcmp.eq.s32.totalorder %v3696, 2
      %v3702 = vxor.u32 %v3693, 2147483648
      %v3703 = vsel %vm3701, %v3702, %v3694
      %v3704 = vsel %vm3697, %v3700, %v3703
      %v3705 = vsel %vm3695, nan, %v3704
      %v3706 = vand.u32 2147483647, %v494
      %vm3707 = vcmp.le.f32.partialorder %v3706, 0.7853982
      %vm3708 = vcmp.lt.s32.totalorder %v494, 0
      %v3709 = vand.u32 %v494, 2139095040
      %v3710 = vshrl.u32 %v3709, 23
      %v3711 = vsub.s32 %v3710, 127
      %v3712 = vand.u32 2147483647, %v494
      %v3713 = vand.u32 %v3712, 8388607
      %v3714 = vor.u32 %v3713, 8388608
      %v3715 = vsub.s32 0, %v3714
      %v3716 = vadd.s32 %v3711, 1
      %vm3717 = vcmp.gt.s32.totalorder %v3716, 0
      %v3718 = vsel %vm3717, %v3716, 0
      %v3719 = vshrl.u32 %v3718, 5
      %v3720 = vand.u32 %v3718, 31
      %v3721 = vsub.s32 32, %v3720
      %v3722 = vshrl.u32 683565275, %v3721
      %v3723 = vshll.u32 683565275, %v3720
      %v3724 = vshrl.u32 2475754826, %v3721
      %v3725 = vor.u32 %v3723, %v3724
      %v3726 = vshll.u32 2475754826, %v3720
      %v3727 = vshrl.u32 2131351028, %v3721
      %v3728 = vor.u32 %v3726, %v3727
      %v3729 = vshll.u32 2131351028, %v3720
      %v3730 = vshrl.u32 2102212464, %v3721
      %v3731 = vor.u32 %v3729, %v3730
      %v3732 = vshll.u32 2102212464, %v3720
      %v3733 = vshrl.u32 920167782, %v3721
      %v3734 = vor.u32 %v3732, %v3733
      %v3735 = vshll.u32 920167782, %v3720
      %v3736 = vshrl.u32 1326507024, %v3721
      %v3737 = vor.u32 %v3735, %v3736
      %vm3738 = vcmp.lt.s32.totalorder %v3719, 1
      %vm3739 = vcmp.lt.s32.totalorder %v3719, 2
      %vm3740 = vcmp.lt.s32.totalorder %v3719, 3
      %vm3741 = vcmp.lt.s32.totalorder %v3719, 4
      %v3742 = vsel %vm3738, %v3722, %v3725
      %v3743 = vsel %vm3741, %v3731, 2102212464
      %v3744 = vsel %vm3740, %v3728, %v3743
      %v3745 = vsel %vm3739, %v3742, %v3744
      %v3746 = vsel %vm3738, %v3725, %v3728
      %v3747 = vsel %vm3741, %v3734, 920167782
      %v3748 = vsel %vm3740, %v3731, %v3747
      %v3749 = vsel %vm3739, %v3746, %v3748
      %v3750 = vsel %vm3738, %v3728, %v3731
      %v3751 = vsel %vm3741, %v3737, 1326507024
      %v3752 = vsel %vm3740, %v3734, %v3751
      %v3753 = vsel %vm3739, %v3750, %v3752
      %v3754 = vshll.u32 %v3714, 8
      %v3755 = vmul.u32.u64.compose %v3754, %v3753
      %v3756 = vextract.low.u32 %v3755
      %v3757 = vextract.high.u32 %v3755
      %v3758 = vmul.u32.u64.compose %v3754, %v3749
      %v3759 = vextract.low.u32 %v3758
      %v3760 = vextract.high.u32 %v3758
      %v3761 = vmul.u32 %v3754, %v3745
      %v3762 = vadd.s32 %v3757, %v3759
      %vm3763 = vc.u32 %v3757, %v3759
      %v3764 = vadd.s32 %v3760, 1
      %v3765 = vsel %vm3763, %v3764, %v3760
      %v3766 = vadd.s32 %v3761, %v3765
      %v3767 = vadd.s32 %v3766, 536870912
      %v3768 = vshrl.u32 %v3767, 30
      %v3769 = vshll.u32 %v3768, 30
      %v3770 = vsub.s32 %v3766, %v3769
      %vm3771 = vcmp.lt.s32.totalorder %v3770, 0
      %v3772 = vsub.s32 0, %v3770
      %v3773 = vsel %vm3771, %v3772, %v3770
      %v3774 = vclz %v3773
      %v3775 = vsub.s32 %v3774, 2
      %vm3776 = vcmp.gt.s32.totalorder 0, %v3775
      %v3777 = vsel %vm3776, 0, %v3775
      %v3778 = vsub.s32 32, %v3777
      %v3779 = vshll.u32 %v3770, %v3777
      %v3780 = vshrl.u32 %v3762, %v3778
      %v3781 = vor.u32 %v3779, %v3780
      %v3782 = vsub.s32 4294967266, %v3777
      %v3783 = vadd.s32 %v3782, 127
      %v3784 = vshll.u32 %v3783, 23
      %v3785 = vor.u32 4788187, %v3784
      %v3786 = vand.u32 2147483647, %v3785
      %v3788 = vcvt.s32.f32 %v3781
      %v3789 = vmul.f32 %v3788, %v3786
      %v3790 = vxor.u32 %v3789, 2147483648
      %v3791 = vsel %vm3708, %v3790, %v3789
      %v3792 = vsub.s32 4, %v3768
      %v3793 = vsel %vm3708, %v3792, %v3768
      %v3794 = vsel %vm3707, %v494, %v3791
      %v3795 = vsel %vm3707, 0, %v3793
      %v3796 = vcosq.f32.pop %v3794
      %v3797 = vsinq.f32.pop %v3794
      %vm3798 = vweird.f32 %v494
      %v3799 = vand.u32 %v3795, 3
      %vm3800 = vcmp.lt.s32.totalorder %v3799, 2
      %vm3801 = vcmp.eq.s32.totalorder %v3799, 0
      %v3802 = vxor.u32 %v3797, 2147483648
      %v3803 = vsel %vm3801, %v3796, %v3802
      %vm3804 = vcmp.eq.s32.totalorder %v3799, 2
      %v3805 = vxor.u32 %v3796, 2147483648
      %v3806 = vsel %vm3804, %v3805, %v3797
      %v3807 = vsel %vm3800, %v3803, %v3806
      %v3808 = vsel %vm3798, nan, %v3807
      %v3809 = vld [vmem:[%s2] sm:$0xff]
      %v3810 = vld [vmem:[%s2 + $0x8] sm:$0xff]
      %v3811 = vld [vmem:[%s2 + $0x10] sm:$0xff]
      %v3812 = vld [vmem:[%s2 + $0x18] sm:$0xff]
      %v3813 = vld [vmem:[%s2 + $0x20] sm:$0xff]
      %v3814 = vld [vmem:[%s2 + $0x28] sm:$0xff]
      %v3815 = vld [vmem:[%s2 + $0x30] sm:$0xff]
      %v3816 = vld [vmem:[%s2 + $0x38] sm:$0xff]
      %v3817 = vld [vmem:[%s3] sm:$0xff]
      %v3818 = vld [vmem:[%s3 + $0x8] sm:$0xff]
      %v3819 = vld [vmem:[%s3 + $0x10] sm:$0xff]
      %v3820 = vld [vmem:[%s3 + $0x18] sm:$0xff]
      %v3821 = vld [vmem:[%s3 + $0x20] sm:$0xff]
      %v3822 = vld [vmem:[%s3 + $0x28] sm:$0xff]
      %v3823 = vld [vmem:[%s3 + $0x30] sm:$0xff]
      %v3824 = vld [vmem:[%s3 + $0x38] sm:$0xff]
      %vm3825 = vcmask 523264
      %v3827 = vsel %vm3825, %v2263, 0
      %v3830 = vsel %vm3825, %v2366, 0
      %v3833 = vsel %vm3825, %v2469, 0
      %v3836 = vsel %vm3825, %v2572, 0
      %v3839 = vsel %vm3825, %v2675, 0
      %v3842 = vsel %vm3825, %v2778, 0
      %v3845 = vsel %vm3825, %v2881, 0
      %v3848 = vsel %vm3825, %v2984, 0
      %v3851 = vsel %vm3825, %v3087, 0
      %v3854 = vsel %vm3825, %v3190, 0
      %v3857 = vsel %vm3825, %v3293, 0
      %v3860 = vsel %vm3825, %v3396, 0
      %v3863 = vsel %vm3825, %v3499, 0
      %v3866 = vsel %vm3825, %v3602, 0
      %v3869 = vsel %vm3825, %v3705, 0
      %v3872 = vsel %vm3825, %v3808, 0
      %3874 = vmatprep.subr.mxu0 0.0
      %3875 = vmatpush1.msra.mxu0 %v3817
      %3876 = vmatprep.subr.mxu0 0.0
      %3877 = vmatpush1.msra.mxu0 %v3818
      %3878 = vmatprep.subr.mxu0 0.0
      %3879 = vmatpush1.msra.mxu0 %v3819
      %3880 = vmatprep.subr.mxu0 0.0
      %3881 = vmatpush1.msra.mxu0 %v3820
      %3882 = vmatprep.subr.mxu0 0.0
      %3883 = vmatpush1.msra.mxu0 %v3821
      %3884 = vmatprep.subr.mxu0 0.0
      %3885 = vmatpush1.msra.mxu0 %v3822
      %3886 = vmatprep.subr.mxu0 0.0
      %3887 = vmatpush1.msra.mxu0 %v3823
      %3888 = vmatprep.subr.mxu0 0.0
      %3889 = vmatpush1.msra.mxu0 %v3824
      %3890 = vmatprep.subr.mxu0 0.0
      %3891 = vmatpush1.msra.mxu0 0.0
      %3892 = vmatprep.subr.mxu0 0.0
      %3893 = vmatpush1.msra.mxu0 0.0
      %3894 = vmatprep.subr.mxu0 0.0
      %3895 = vmatpush1.msra.mxu0 0.0
      %3896 = vmatprep.subr.mxu0 0.0
      %3897 = vmatpush1.msra.mxu0 0.0
      %3898 = vmatprep.subr.mxu0 0.0
      %3899 = vmatpush1.msra.mxu0 0.0
      %3900 = vmatprep.subr.mxu0 0.0
      %3901 = vmatpush1.msra.mxu0 0.0
      %3902 = vmatprep.subr.mxu0 0.0
      %3903 = vmatpush1.msra.mxu0 0.0
      %3904 = vmatprep.subr.mxu0 0.0
      %3905 = vmatpush1.msra.mxu0 0.0
      %3906 = vmatprep.subr.mxu0 0.0
      %3907 = vmatpush1.msra.mxu0 0.0
      %3908 = vmatprep.subr.mxu0 0.0
      %3909 = vmatpush1.msra.mxu0 0.0
      %3910 = vmatprep.subr.mxu0 0.0
      %3911 = vmatpush1.msra.mxu0 0.0
      %3912 = vmatprep.subr.mxu0 0.0
      %3913 = vmatpush1.msra.mxu0 0.0
      %3914 = vmatprep.subr.mxu0 0.0
      %3915 = vmatpush1.msra.mxu0 0.0
      %3916 = vmatprep.subr.mxu0 0.0
      %3917 = vmatpush1.msra.mxu0 0.0
      %3918 = vmatprep.subr.mxu0 0.0
      %3919 = vmatpush1.msra.mxu0 0.0
      %3920 = vmatprep.subr.mxu0 0.0
      %3921 = vmatpush1.msra.mxu0 0.0
      %3922 = vmatprep.subr.mxu0 0.0
      %3923 = vmatpush1.msra.mxu0 0.0
      %3924 = vmatprep.subr.mxu0 0.0
      %3925 = vmatpush1.msra.mxu0 0.0
      %3926 = vmatprep.subr.mxu0 0.0
      %3927 = vmatpush1.msra.mxu0 0.0
      %3928 = vmatprep.subr.mxu0 0.0
      %3929 = vmatpush1.msra.mxu0 0.0
      %3930 = vmatprep.subr.mxu0 0.0
      %3931 = vmatpush1.msra.mxu0 0.0
      %3932 = vmatprep.subr.mxu0 0.0
      %3933 = vmatpush1.msra.mxu0 0.0
      %3934 = vmatprep.subr.mxu0 0.0
      %3935 = vmatpush1.msra.mxu0 0.0
      %3936 = vmatprep.subr.mxu0 0.0
      %3937 = vmatpush1.msra.mxu0 0.0
      %3938 = vmatprep.mubr.f32.mxu0 0.0
      %3939 = vmatmul.mubr.f32.gmra.mrb[0].mxu0 %v3827
      %v3940 = vpop.f32.mrb[0].mxu0
      %v3941 = vadd.f32 0.0, %v3940
      %v3942 = vpop.f32.mrb[0].mxu0
      %3943 = vmatprep.mubr.f32.mxu0 0.0
      %3944 = vmatmul.mubr.f32.gmra.mrb[0].mxu0 %v3830
      %v3945 = vpop.f32.mrb[0].mxu0
      %v3946 = vadd.f32 0.0, %v3945
      %v3947 = vpop.f32.mrb[0].mxu0
      %3948 = vmatprep.mubr.f32.mxu0 0.0
      %3949 = vmatmul.mubr.f32.gmra.mrb[0].mxu0 %v3833
      %v3950 = vpop.f32.mrb[0].mxu0
      %v3951 = vadd.f32 0.0, %v3950
      %v3952 = vpop.f32.mrb[0].mxu0
      %3953 = vmatprep.mubr.f32.mxu0 0.0
      %3954 = vmatmul.mubr.f32.gmra.mrb[0].mxu0 %v3836
      %v3955 = vpop.f32.mrb[0].mxu0
      %v3956 = vadd.f32 0.0, %v3955
      %v3957 = vpop.f32.mrb[0].mxu0
      %3958 = vmatprep.mubr.f32.mxu0 0.0
      %3959 = vmatmul.mubr.f32.gmra.mrb[0].mxu0 %v3839
      %v3960 = vpop.f32.mrb[0].mxu0
      %v3961 = vadd.f32 0.0, %v3960
      %v3962 = vpop.f32.mrb[0].mxu0
      %3963 = vmatprep.mubr.f32.mxu0 0.0
      %3964 = vmatmul.mubr.f32.gmra.mrb[0].mxu0 %v3842
      %v3965 = vpop.f32.mrb[0].mxu0
      %v3966 = vadd.f32 0.0, %v3965
      %v3967 = vpop.f32.mrb[0].mxu0
      %3968 = vmatprep.mubr.f32.mxu0 0.0
      %3969 = vmatmul.mubr.f32.gmra.mrb[0].mxu0 %v3845
      %v3970 = vpop.f32.mrb[0].mxu0
      %v3971 = vadd.f32 0.0, %v3970
      %v3972 = vpop.f32.mrb[0].mxu0
      %3973 = vmatprep.mubr.f32.mxu0 0.0
      %3974 = vmatmul.mubr.f32.gmra.mrb[0].mxu0 %v3848
      %v3975 = vpop.f32.mrb[0].mxu0
      %v3976 = vadd.f32 0.0, %v3975
      %v3977 = vpop.f32.mrb[0].mxu0
      %3978 = vmatprep.mubr.f32.mxu0 0.0
      %3979 = vmatmul.mubr.f32.gmra.mrb[0].mxu0 %v3851
      %v3980 = vpop.f32.mrb[0].mxu0
      %v3981 = vadd.f32 0.0, %v3980
      %v3982 = vpop.f32.mrb[0].mxu0
      %3983 = vmatprep.mubr.f32.mxu0 0.0
      %3984 = vmatmul.mubr.f32.gmra.mrb[0].mxu0 %v3854
      %v3985 = vpop.f32.mrb[0].mxu0
      %v3986 = vadd.f32 0.0, %v3985
      %v3987 = vpop.f32.mrb[0].mxu0
      %3988 = vmatprep.mubr.f32.mxu0 0.0
      %3989 = vmatmul.mubr.f32.gmra.mrb[0].mxu0 %v3857
      %v3990 = vpop.f32.mrb[0].mxu0
      %v3991 = vadd.f32 0.0, %v3990
      %v3992 = vpop.f32.mrb[0].mxu0
      %3993 = vmatprep.mubr.f32.mxu0 0.0
      %3994 = vmatmul.mubr.f32.gmra.mrb[0].mxu0 %v3860
      %v3995 = vpop.f32.mrb[0].mxu0
      %v3996 = vadd.f32 0.0, %v3995
      %v3997 = vpop.f32.mrb[0].mxu0
      %3998 = vmatprep.mubr.f32.mxu0 0.0
      %3999 = vmatmul.mubr.f32.gmra.mrb[0].mxu0 %v3863
      %v4000 = vpop.f32.mrb[0].mxu0
      %v4001 = vadd.f32 0.0, %v4000
      %v4002 = vpop.f32.mrb[0].mxu0
      %4003 = vmatprep.mubr.f32.mxu0 0.0
      %4004 = vmatmul.mubr.f32.gmra.mrb[0].mxu0 %v3866
      %v4005 = vpop.f32.mrb[0].mxu0
      %v4006 = vadd.f32 0.0, %v4005
      %v4007 = vpop.f32.mrb[0].mxu0
      %4008 = vmatprep.mubr.f32.mxu0 0.0
      %4009 = vmatmul.mubr.f32.gmra.mrb[0].mxu0 %v3869
      %v4010 = vpop.f32.mrb[0].mxu0
      %v4011 = vadd.f32 0.0, %v4010
      %v4012 = vpop.f32.mrb[0].mxu0
      %4013 = vmatprep.mubr.f32.mxu0 0.0
      %4014 = vmatmul.mubr.f32.gmra.mrb[0].mxu0 %v3872
      %v4015 = vpop.f32.mrb[0].mxu0
      %v4016 = vadd.f32 0.0, %v4015
      %v4017 = vpop.f32.mrb[0].mxu0
      %4018 = vdwg.mxu0
      %v4020 = vsel %vm3825, %v600, 0
      %v4023 = vsel %vm3825, %v704, 0
      %v4026 = vsel %vm3825, %v808, 0
      %v4029 = vsel %vm3825, %v912, 0
      %v4032 = vsel %vm3825, %v1016, 0
      %v4035 = vsel %vm3825, %v1120, 0
      %v4038 = vsel %vm3825, %v1224, 0
      %v4041 = vsel %vm3825, %v1328, 0
      %v4044 = vsel %vm3825, %v1432, 0
      %v4047 = vsel %vm3825, %v1536, 0
      %v4050 = vsel %vm3825, %v1640, 0
      %v4053 = vsel %vm3825, %v1744, 0
      %v4056 = vsel %vm3825, %v1848, 0
      %v4059 = vsel %vm3825, %v1952, 0
      %v4062 = vsel %vm3825, %v2056, 0
      %v4065 = vsel %vm3825, %v2160, 0
      %4067 = vmatprep.subr.mxu0 0.0
      %4068 = vmatpush1.msra.mxu0 %v3809
      %4069 = vmatprep.subr.mxu0 0.0
      %4070 = vmatpush1.msra.mxu0 %v3810
      %4071 = vmatprep.subr.mxu0 0.0
      %4072 = vmatpush1.msra.mxu0 %v3811
      %4073 = vmatprep.subr.mxu0 0.0
      %4074 = vmatpush1.msra.mxu0 %v3812
      %4075 = vmatprep.subr.mxu0 0.0
      %4076 = vmatpush1.msra.mxu0 %v3813
      %4077 = vmatprep.subr.mxu0 0.0
      %4078 = vmatpush1.msra.mxu0 %v3814
      %4079 = vmatprep.subr.mxu0 0.0
      %4080 = vmatpush1.msra.mxu0 %v3815
      %4081 = vmatprep.subr.mxu0 0.0
      %4082 = vmatpush1.msra.mxu0 %v3816
      %4083 = vmatprep.subr.mxu0 0.0
      %4084 = vmatpush1.msra.mxu0 0.0
      %4085 = vmatprep.subr.mxu0 0.0
      %4086 = vmatpush1.msra.mxu0 0.0
      %4087 = vmatprep.subr.mxu0 0.0
      %4088 = vmatpush1.msra.mxu0 0.0
      %4089 = vmatprep.subr.mxu0 0.0
      %4090 = vmatpush1.msra.mxu0 0.0
      %4091 = vmatprep.subr.mxu0 0.0
      %4092 = vmatpush1.msra.mxu0 0.0
      %4093 = vmatprep.subr.mxu0 0.0
      %4094 = vmatpush1.msra.mxu0 0.0
      %4095 = vmatprep.subr.mxu0 0.0
      %4096 = vmatpush1.msra.mxu0 0.0
      %4097 = vmatprep.subr.mxu0 0.0
      %4098 = vmatpush1.msra.mxu0 0.0
      %4099 = vmatprep.subr.mxu0 0.0
      %4100 = vmatpush1.msra.mxu0 0.0
      %4101 = vmatprep.subr.mxu0 0.0
      %4102 = vmatpush1.msra.mxu0 0.0
      %4103 = vmatprep.subr.mxu0 0.0
      %4104 = vmatpush1.msra.mxu0 0.0
      %4105 = vmatprep.subr.mxu0 0.0
      %4106 = vmatpush1.msra.mxu0 0.0
      %4107 = vmatprep.subr.mxu0 0.0
      %4108 = vmatpush1.msra.mxu0 0.0
      %4109 = vmatprep.subr.mxu0 0.0
      %4110 = vmatpush1.msra.mxu0 0.0
      %4111 = vmatprep.subr.mxu0 0.0
      %4112 = vmatpush1.msra.mxu0 0.0
      %4113 = vmatprep.subr.mxu0 0.0
      %4114 = vmatpush1.msra.mxu0 0.0
      %4115 = vmatprep.subr.mxu0 0.0
      %4116 = vmatpush1.msra.mxu0 0.0
      %4117 = vmatprep.subr.mxu0 0.0
      %4118 = vmatpush1.msra.mxu0 0.0
      %4119 = vmatprep.subr.mxu0 0.0
      %4120 = vmatpush1.msra.mxu0 0.0
      %4121 = vmatprep.subr.mxu0 0.0
      %4122 = vmatpush1.msra.mxu0 0.0
      %4123 = vmatprep.subr.mxu0 0.0
      %4124 = vmatpush1.msra.mxu0 0.0
      %4125 = vmatprep.subr.mxu0 0.0
      %4126 = vmatpush1.msra.mxu0 0.0
      %4127 = vmatprep.subr.mxu0 0.0
      %4128 = vmatpush1.msra.mxu0 0.0
      %4129 = vmatprep.subr.mxu0 0.0
      %4130 = vmatpush1.msra.mxu0 0.0
      %4131 = vmatprep.mubr.f32.mxu0 0.0
      %4132 = vmatmul.mubr.f32.gmra.mrb[0].mxu0 %v4020
      %v4133 = vpop.f32.mrb[0].mxu0
      %v4134 = vadd.f32 %v3941, %v4133
      %v4135 = vpop.f32.mrb[0].mxu0
      %4136 = vmatprep.mubr.f32.mxu0 0.0
      %4137 = vmatmul.mubr.f32.gmra.mrb[0].mxu0 %v4023
      %v4138 = vpop.f32.mrb[0].mxu0
      %v4139 = vadd.f32 %v3946, %v4138
      %v4140 = vpop.f32.mrb[0].mxu0
      %4141 = vmatprep.mubr.f32.mxu0 0.0
      %4142 = vmatmul.mubr.f32.gmra.mrb[0].mxu0 %v4026
      %v4143 = vpop.f32.mrb[0].mxu0
      %v4144 = vadd.f32 %v3951, %v4143
      %v4145 = vpop.f32.mrb[0].mxu0
      %4146 = vmatprep.mubr.f32.mxu0 0.0
      %4147 = vmatmul.mubr.f32.gmra.mrb[0].mxu0 %v4029
      %v4148 = vpop.f32.mrb[0].mxu0
      %v4149 = vadd.f32 %v3956, %v4148
      %v4150 = vpop.f32.mrb[0].mxu0
      %4151 = vmatprep.mubr.f32.mxu0 0.0
      %4152 = vmatmul.mubr.f32.gmra.mrb[0].mxu0 %v4032
      %v4153 = vpop.f32.mrb[0].mxu0
      %v4154 = vadd.f32 %v3961, %v4153
      %v4155 = vpop.f32.mrb[0].mxu0
      %4156 = vmatprep.mubr.f32.mxu0 0.0
      %4157 = vmatmul.mubr.f32.gmra.mrb[0].mxu0 %v4035
      %v4158 = vpop.f32.mrb[0].mxu0
      %v4159 = vadd.f32 %v3966, %v4158
      %v4160 = vpop.f32.mrb[0].mxu0
      %4161 = vmatprep.mubr.f32.mxu0 0.0
      %4162 = vmatmul.mubr.f32.gmra.mrb[0].mxu0 %v4038
      %v4163 = vpop.f32.mrb[0].mxu0
      %v4164 = vadd.f32 %v3971, %v4163
      %v4165 = vpop.f32.mrb[0].mxu0
      %4166 = vmatprep.mubr.f32.mxu0 0.0
      %4167 = vmatmul.mubr.f32.gmra.mrb[0].mxu0 %v4041
      %v4168 = vpop.f32.mrb[0].mxu0
      %v4169 = vadd.f32 %v3976, %v4168
      %v4170 = vpop.f32.mrb[0].mxu0
      %4171 = vmatprep.mubr.f32.mxu0 0.0
      %4172 = vmatmul.mubr.f32.gmra.mrb[0].mxu0 %v4044
      %v4173 = vpop.f32.mrb[0].mxu0
      %v4174 = vadd.f32 %v3981, %v4173
      %v4175 = vpop.f32.mrb[0].mxu0
      %4176 = vmatprep.mubr.f32.mxu0 0.0
      %4177 = vmatmul.mubr.f32.gmra.mrb[0].mxu0 %v4047
      %v4178 = vpop.f32.mrb[0].mxu0
      %v4179 = vadd.f32 %v3986, %v4178
      %v4180 = vpop.f32.mrb[0].mxu0
      %4181 = vmatprep.mubr.f32.mxu0 0.0
      %4182 = vmatmul.mubr.f32.gmra.mrb[0].mxu0 %v4050
      %v4183 = vpop.f32.mrb[0].mxu0
      %v4184 = vadd.f32 %v3991, %v4183
      %v4185 = vpop.f32.mrb[0].mxu0
      %4186 = vmatprep.mubr.f32.mxu0 0.0
      %4187 = vmatmul.mubr.f32.gmra.mrb[0].mxu0 %v4053
      %v4188 = vpop.f32.mrb[0].mxu0
      %v4189 = vadd.f32 %v3996, %v4188
      %v4190 = vpop.f32.mrb[0].mxu0
      %4191 = vmatprep.mubr.f32.mxu0 0.0
      %4192 = vmatmul.mubr.f32.gmra.mrb[0].mxu0 %v4056
      %v4193 = vpop.f32.mrb[0].mxu0
      %v4194 = vadd.f32 %v4001, %v4193
      %v4195 = vpop.f32.mrb[0].mxu0
      %4196 = vmatprep.mubr.f32.mxu0 0.0
      %4197 = vmatmul.mubr.f32.gmra.mrb[0].mxu0 %v4059
      %v4198 = vpop.f32.mrb[0].mxu0
      %v4199 = vadd.f32 %v4006, %v4198
      %v4200 = vpop.f32.mrb[0].mxu0
      %4201 = vmatprep.mubr.f32.mxu0 0.0
      %4202 = vmatmul.mubr.f32.gmra.mrb[0].mxu0 %v4062
      %v4203 = vpop.f32.mrb[0].mxu0
      %v4204 = vadd.f32 %v4011, %v4203
      %v4205 = vpop.f32.mrb[0].mxu0
      %4206 = vmatprep.mubr.f32.mxu0 0.0
      %4207 = vmatmul.mubr.f32.gmra.mrb[0].mxu0 %v4065
      %v4208 = vpop.f32.mrb[0].mxu0
      %v4209 = vadd.f32 %v4016, %v4208
      %v4210 = vpop.f32.mrb[0].mxu0
      %4211 = vdwg.mxu0
      %v4212 = vld [vmem:[%s4] sm:$0x1]
      %v4214 = vlaneseq
      %v4215 = vshrl.u32 %v4214, 7
      %v4216 = vsub.s32 0, %v4215
      %v4217 = vrot.slane %v4212, %v4216
      %v4219 = vadd.f32 %v4134, %v4217
      %v4220 = vadd.f32 %v4139, %v4217
      %v4221 = vadd.f32 %v4144, %v4217
      %v4222 = vadd.f32 %v4149, %v4217
      %v4223 = vadd.f32 %v4154, %v4217
      %v4224 = vadd.f32 %v4159, %v4217
      %v4225 = vadd.f32 %v4164, %v4217
      %v4226 = vadd.f32 %v4169, %v4217
      %v4227 = vadd.f32 %v4174, %v4217
      %v4228 = vadd.f32 %v4179, %v4217
      %v4229 = vadd.f32 %v4184, %v4217
      %v4230 = vadd.f32 %v4189, %v4217
      %v4231 = vadd.f32 %v4194, %v4217
      %v4232 = vadd.f32 %v4199, %v4217
      %v4233 = vadd.f32 %v4204, %v4217
      %v4234 = vadd.f32 %v4209, %v4217
      %v4235 = vxor.u32 %v4219, 2147483648
      %v4236 = vxor.u32 %v4220, 2147483648
      %v4237 = vxor.u32 %v4221, 2147483648
      %v4238 = vxor.u32 %v4222, 2147483648
      %v4239 = vxor.u32 %v4223, 2147483648
      %v4240 = vxor.u32 %v4224, 2147483648
      %v4241 = vxor.u32 %v4225, 2147483648
      %v4242 = vxor.u32 %v4226, 2147483648
      %v4243 = vxor.u32 %v4227, 2147483648
      %v4244 = vxor.u32 %v4228, 2147483648
      %v4245 = vxor.u32 %v4229, 2147483648
      %v4246 = vxor.u32 %v4230, 2147483648
      %v4247 = vxor.u32 %v4231, 2147483648
      %v4248 = vxor.u32 %v4232, 2147483648
      %v4249 = vxor.u32 %v4233, 2147483648
      %v4250 = vxor.u32 %v4234, 2147483648
      %v4251 = vmul.f32 %v4235, 1.442695
      %v4252 = vpow.pop %v4251
      %v4253 = vmul.f32 %v4236, 1.442695
      %v4254 = vpow.pop %v4253
      %v4255 = vmul.f32 %v4237, 1.442695
      %v4256 = vpow.pop %v4255
      %v4257 = vmul.f32 %v4238, 1.442695
      %v4258 = vpow.pop %v4257
      %v4259 = vmul.f32 %v4239, 1.442695
      %v4260 = vpow.pop %v4259
      %v4261 = vmul.f32 %v4240, 1.442695
      %v4262 = vpow.pop %v4261
      %v4263 = vmul.f32 %v4241, 1.442695
      %v4264 = vpow.pop %v4263
      %v4265 = vmul.f32 %v4242, 1.442695
      %v4266 = vpow.pop %v4265
      %v4267 = vmul.f32 %v4243, 1.442695
      %v4268 = vpow.pop %v4267
      %v4269 = vmul.f32 %v4244, 1.442695
      %v4270 = vpow.pop %v4269
      %v4271 = vmul.f32 %v4245, 1.442695
      %v4272 = vpow.pop %v4271
      %v4273 = vmul.f32 %v4246, 1.442695
      %v4274 = vpow.pop %v4273
      %v4275 = vmul.f32 %v4247, 1.442695
      %v4276 = vpow.pop %v4275
      %v4277 = vmul.f32 %v4248, 1.442695
      %v4278 = vpow.pop %v4277
      %v4279 = vmul.f32 %v4249, 1.442695
      %v4280 = vpow.pop %v4279
      %v4281 = vmul.f32 %v4250, 1.442695
      %v4282 = vpow.pop %v4281
      %v4283 = vadd.f32 %v4252, 1.0
      %v4284 = vadd.f32 %v4254, 1.0
      %v4285 = vadd.f32 %v4256, 1.0
      %v4286 = vadd.f32 %v4258, 1.0
      %v4287 = vadd.f32 %v4260, 1.0
      %v4288 = vadd.f32 %v4262, 1.0
      %v4289 = vadd.f32 %v4264, 1.0
      %v4290 = vadd.f32 %v4266, 1.0
      %v4291 = vadd.f32 %v4268, 1.0
      %v4292 = vadd.f32 %v4270, 1.0
      %v4293 = vadd.f32 %v4272, 1.0
      %v4294 = vadd.f32 %v4274, 1.0
      %v4295 = vadd.f32 %v4276, 1.0
      %v4296 = vadd.f32 %v4278, 1.0
      %v4297 = vadd.f32 %v4280, 1.0
      %v4298 = vadd.f32 %v4282, 1.0
      %v4299 = vrcp.pop %v4283
      %v4300 = vmul.f32 1.0, %v4299
      %v4301 = vrcp.pop %v4284
      %v4302 = vmul.f32 1.0, %v4301
      %v4303 = vrcp.pop %v4285
      %v4304 = vmul.f32 1.0, %v4303
      %v4305 = vrcp.pop %v4286
      %v4306 = vmul.f32 1.0, %v4305
      %v4307 = vrcp.pop %v4287
      %v4308 = vmul.f32 1.0, %v4307
      %v4309 = vrcp.pop %v4288
      %v4310 = vmul.f32 1.0, %v4309
      %v4311 = vrcp.pop %v4289
      %v4312 = vmul.f32 1.0, %v4311
      %v4313 = vrcp.pop %v4290
      %v4314 = vmul.f32 1.0, %v4313
      %v4315 = vrcp.pop %v4291
      %v4316 = vmul.f32 1.0, %v4315
      %v4317 = vrcp.pop %v4292
      %v4318 = vmul.f32 1.0, %v4317
      %v4319 = vrcp.pop %v4293
      %v4320 = vmul.f32 1.0, %v4319
      %v4321 = vrcp.pop %v4294
      %v4322 = vmul.f32 1.0, %v4321
      %v4323 = vrcp.pop %v4295
      %v4324 = vmul.f32 1.0, %v4323
      %v4325 = vrcp.pop %v4296
      %v4326 = vmul.f32 1.0, %v4325
      %v4327 = vrcp.pop %v4297
      %v4328 = vmul.f32 1.0, %v4327
      %v4329 = vrcp.pop %v4298
      %v4330 = vmul.f32 1.0, %v4329
      %v4331 = vmul.f32 %v4219, %v4300
      %v4332 = vmul.f32 %v4220, %v4302
      %v4333 = vmul.f32 %v4221, %v4304
      %v4334 = vmul.f32 %v4222, %v4306
      %v4335 = vmul.f32 %v4223, %v4308
      %v4336 = vmul.f32 %v4224, %v4310
      %v4337 = vmul.f32 %v4225, %v4312
      %v4338 = vmul.f32 %v4226, %v4314
      %v4339 = vmul.f32 %v4227, %v4316
      %v4340 = vmul.f32 %v4228, %v4318
      %v4341 = vmul.f32 %v4229, %v4320
      %v4342 = vmul.f32 %v4230, %v4322
      %v4343 = vmul.f32 %v4231, %v4324
      %v4344 = vmul.f32 %v4232, %v4326
      %v4345 = vmul.f32 %v4233, %v4328
      %v4346 = vmul.f32 %v4234, %v4330
      %v4347 = vld [vmem:[%s5] sm:$0xff]
      %v4348 = vld [vmem:[%s5 + $0x8] sm:$0xff]
      %v4349 = vld [vmem:[%s5 + $0x10] sm:$0xff]
      %v4350 = vld [vmem:[%s5 + $0x18] sm:$0xff]
      %v4351 = vld [vmem:[%s5 + $0x20] sm:$0xff]
      %v4352 = vld [vmem:[%s5 + $0x28] sm:$0xff]
      %v4353 = vld [vmem:[%s5 + $0x30] sm:$0xff]
      %v4354 = vld [vmem:[%s5 + $0x38] sm:$0xff]
      %v4355 = vld [vmem:[%s5 + $0x40] sm:$0xff]
      %v4356 = vld [vmem:[%s5 + $0x48] sm:$0xff]
      %v4357 = vld [vmem:[%s5 + $0x50] sm:$0xff]
      %v4358 = vld [vmem:[%s5 + $0x58] sm:$0xff]
      %v4359 = vld [vmem:[%s5 + $0x60] sm:$0xff]
      %v4360 = vld [vmem:[%s5 + $0x68] sm:$0xff]
      %v4361 = vld [vmem:[%s5 + $0x70] sm:$0xff]
      %v4362 = vld [vmem:[%s5 + $0x78] sm:$0xff]
      %v4363 = vld [vmem:[%s6] sm:$0x1]
      %v4365 = vlaneseq
      %v4366 = vshrl.u32 %v4365, 7
      %v4367 = vsub.s32 0, %v4366
      %v4368 = vrot.slane %v4363, %v4367
      %4370 = vmatprep.subr.mxu0 0.0
      %4371 = vmatpush1.msra.mxu0 %v4347
      %4372 = vmatprep.subr.mxu0 0.0
      %4373 = vmatpush1.msra.mxu0 %v4348
      %4374 = vmatprep.subr.mxu0 0.0
      %4375 = vmatpush1.msra.mxu0 %v4349
      %4376 = vmatprep.subr.mxu0 0.0
      %4377 = vmatpush1.msra.mxu0 %v4350
      %4378 = vmatprep.subr.mxu0 0.0
      %4379 = vmatpush1.msra.mxu0 %v4351
      %4380 = vmatprep.subr.mxu0 0.0
      %4381 = vmatpush1.msra.mxu0 %v4352
      %4382 = vmatprep.subr.mxu0 0.0
      %4383 = vmatpush1.msra.mxu0 %v4353
      %4384 = vmatprep.subr.mxu0 0.0
      %4385 = vmatpush1.msra.mxu0 %v4354
      %4386 = vmatprep.subr.mxu0 0.0
      %4387 = vmatpush1.msra.mxu0 %v4355
      %4388 = vmatprep.subr.mxu0 0.0
      %4389 = vmatpush1.msra.mxu0 %v4356
      %4390 = vmatprep.subr.mxu0 0.0
      %4391 = vmatpush1.msra.mxu0 %v4357
      %4392 = vmatprep.subr.mxu0 0.0
      %4393 = vmatpush1.msra.mxu0 %v4358
      %4394 = vmatprep.subr.mxu0 0.0
      %4395 = vmatpush1.msra.mxu0 %v4359
      %4396 = vmatprep.subr.mxu0 0.0
      %4397 = vmatpush1.msra.mxu0 %v4360
      %4398 = vmatprep.subr.mxu0 0.0
      %4399 = vmatpush1.msra.mxu0 %v4361
      %4400 = vmatprep.subr.mxu0 0.0
      %4401 = vmatpush1.msra.mxu0 %v4362
      %4402 = vmatprep.subr.mxu0 0.0
      %4403 = vmatpush1.msra.mxu0 0.0
      %4404 = vmatprep.subr.mxu0 0.0
      %4405 = vmatpush1.msra.mxu0 0.0
      %4406 = vmatprep.subr.mxu0 0.0
      %4407 = vmatpush1.msra.mxu0 0.0
      %4408 = vmatprep.subr.mxu0 0.0
      %4409 = vmatpush1.msra.mxu0 0.0
      %4410 = vmatprep.subr.mxu0 0.0
      %4411 = vmatpush1.msra.mxu0 0.0
      %4412 = vmatprep.subr.mxu0 0.0
      %4413 = vmatpush1.msra.mxu0 0.0
      %4414 = vmatprep.subr.mxu0 0.0
      %4415 = vmatpush1.msra.mxu0 0.0
      %4416 = vmatprep.subr.mxu0 0.0
      %4417 = vmatpush1.msra.mxu0 0.0
      %4418 = vmatprep.subr.mxu0 0.0
      %4419 = vmatpush1.msra.mxu0 0.0
      %4420 = vmatprep.subr.mxu0 0.0
      %4421 = vmatpush1.msra.mxu0 0.0
      %4422 = vmatprep.subr.mxu0 0.0
      %4423 = vmatpush1.msra.mxu0 0.0
      %4424 = vmatprep.subr.mxu0 0.0
      %4425 = vmatpush1.msra.mxu0 0.0
      %4426 = vmatprep.subr.mxu0 0.0
      %4427 = vmatpush1.msra.mxu0 0.0
      %4428 = vmatprep.subr.mxu0 0.0
      %4429 = vmatpush1.msra.mxu0 0.0
      %4430 = vmatprep.subr.mxu0 0.0
      %4431 = vmatpush1.msra.mxu0 0.0
      %4432 = vmatprep.subr.mxu0 0.0
      %4433 = vmatpush1.msra.mxu0 0.0
      %4434 = vmatprep.mubr.f32.mxu0 0.0
      %4435 = vmatmul.mubr.f32.gmra.mrb[0].mxu0 %v4331
      %v4436 = vpop.f32.mrb[0].mxu0
      %v4437 = vadd.f32 %v4368, %v4436
      %v4438 = vpop.f32.mrb[0].mxu0
      %4439 = vmatprep.mubr.f32.mxu0 0.0
      %4440 = vmatmul.mubr.f32.gmra.mrb[0].mxu0 %v4332
      %v4441 = vpop.f32.mrb[0].mxu0
      %v4442 = vadd.f32 %v4368, %v4441
      %v4443 = vpop.f32.mrb[0].mxu0
      %4444 = vmatprep.mubr.f32.mxu0 0.0
      %4445 = vmatmul.mubr.f32.gmra.mrb[0].mxu0 %v4333
      %v4446 = vpop.f32.mrb[0].mxu0
      %v4447 = vadd.f32 %v4368, %v4446
      %v4448 = vpop.f32.mrb[0].mxu0
      %4449 = vmatprep.mubr.f32.mxu0 0.0
      %4450 = vmatmul.mubr.f32.gmra.mrb[0].mxu0 %v4334
      %v4451 = vpop.f32.mrb[0].mxu0
      %v4452 = vadd.f32 %v4368, %v4451
      %v4453 = vpop.f32.mrb[0].mxu0
      %4454 = vmatprep.mubr.f32.mxu0 0.0
      %4455 = vmatmul.mubr.f32.gmra.mrb[0].mxu0 %v4335
      %v4456 = vpop.f32.mrb[0].mxu0
      %v4457 = vadd.f32 %v4368, %v4456
      %v4458 = vpop.f32.mrb[0].mxu0
      %4459 = vmatprep.mubr.f32.mxu0 0.0
      %4460 = vmatmul.mubr.f32.gmra.mrb[0].mxu0 %v4336
      %v4461 = vpop.f32.mrb[0].mxu0
      %v4462 = vadd.f32 %v4368, %v4461
      %v4463 = vpop.f32.mrb[0].mxu0
      %4464 = vmatprep.mubr.f32.mxu0 0.0
      %4465 = vmatmul.mubr.f32.gmra.mrb[0].mxu0 %v4337
      %v4466 = vpop.f32.mrb[0].mxu0
      %v4467 = vadd.f32 %v4368, %v4466
      %v4468 = vpop.f32.mrb[0].mxu0
      %4469 = vmatprep.mubr.f32.mxu0 0.0
      %4470 = vmatmul.mubr.f32.gmra.mrb[0].mxu0 %v4338
      %v4471 = vpop.f32.mrb[0].mxu0
      %v4472 = vadd.f32 %v4368, %v4471
      %v4473 = vpop.f32.mrb[0].mxu0
      %4474 = vmatprep.mubr.f32.mxu0 0.0
      %4475 = vmatmul.mubr.f32.gmra.mrb[0].mxu0 %v4339
      %v4476 = vpop.f32.mrb[0].mxu0
      %v4477 = vadd.f32 %v4368, %v4476
      %v4478 = vpop.f32.mrb[0].mxu0
      %4479 = vmatprep.mubr.f32.mxu0 0.0
      %4480 = vmatmul.mubr.f32.gmra.mrb[0].mxu0 %v4340
      %v4481 = vpop.f32.mrb[0].mxu0
      %v4482 = vadd.f32 %v4368, %v4481
      %v4483 = vpop.f32.mrb[0].mxu0
      %4484 = vmatprep.mubr.f32.mxu0 0.0
      %4485 = vmatmul.mubr.f32.gmra.mrb[0].mxu0 %v4341
      %v4486 = vpop.f32.mrb[0].mxu0
      %v4487 = vadd.f32 %v4368, %v4486
      %v4488 = vpop.f32.mrb[0].mxu0
      %4489 = vmatprep.mubr.f32.mxu0 0.0
      %4490 = vmatmul.mubr.f32.gmra.mrb[0].mxu0 %v4342
      %v4491 = vpop.f32.mrb[0].mxu0
      %v4492 = vadd.f32 %v4368, %v4491
      %v4493 = vpop.f32.mrb[0].mxu0
      %4494 = vmatprep.mubr.f32.mxu0 0.0
      %4495 = vmatmul.mubr.f32.gmra.mrb[0].mxu0 %v4343
      %v4496 = vpop.f32.mrb[0].mxu0
      %v4497 = vadd.f32 %v4368, %v4496
      %v4498 = vpop.f32.mrb[0].mxu0
      %4499 = vmatprep.mubr.f32.mxu0 0.0
      %4500 = vmatmul.mubr.f32.gmra.mrb[0].mxu0 %v4344
      %v4501 = vpop.f32.mrb[0].mxu0
      %v4502 = vadd.f32 %v4368, %v4501
      %v4503 = vpop.f32.mrb[0].mxu0
      %4504 = vmatprep.mubr.f32.mxu0 0.0
      %4505 = vmatmul.mubr.f32.gmra.mrb[0].mxu0 %v4345
      %v4506 = vpop.f32.mrb[0].mxu0
      %v4507 = vadd.f32 %v4368, %v4506
      %v4508 = vpop.f32.mrb[0].mxu0
      %4509 = vmatprep.mubr.f32.mxu0 0.0
      %4510 = vmatmul.mubr.f32.gmra.mrb[0].mxu0 %v4346
      %v4511 = vpop.f32.mrb[0].mxu0
      %v4512 = vadd.f32 %v4368, %v4511
      %v4513 = vpop.f32.mrb[0].mxu0
      %4514 = vdwg.mxu0
      %4515 = vst [vmem:[%s280] sm:$0xff] %v4437
      %4516 = vst [vmem:[%s280 + $0x8] sm:$0xff] %v4442
      %4517 = vst [vmem:[%s280 + $0x10] sm:$0xff] %v4447
      %4518 = vst [vmem:[%s280 + $0x18] sm:$0xff] %v4452
      %4519 = vst [vmem:[%s280 + $0x20] sm:$0xff] %v4457
      %4520 = vst [vmem:[%s280 + $0x28] sm:$0xff] %v4462
      %4521 = vst [vmem:[%s280 + $0x30] sm:$0xff] %v4467
      %4522 = vst [vmem:[%s280 + $0x38] sm:$0xff] %v4472
      %4523 = vst [vmem:[%s280 + $0x40] sm:$0xff] %v4477
      %4524 = vst [vmem:[%s280 + $0x48] sm:$0xff] %v4482
      %4525 = vst [vmem:[%s280 + $0x50] sm:$0xff] %v4487
      %4526 = vst [vmem:[%s280 + $0x58] sm:$0xff] %v4492
      %4527 = vst [vmem:[%s280 + $0x60] sm:$0xff] %v4497
      %4528 = vst [vmem:[%s280 + $0x68] sm:$0xff] %v4502
      %4529 = vst [vmem:[%s280 + $0x70] sm:$0xff] %v4507
      %4530 = vst [vmem:[%s280 + $0x78] sm:$0xff] %v4512
      %s4531 = smul.u32 16, %s18
      %p4532 = scmp.lt.s32.totalorder %s4531, 63
      %s4533 = scalar_select %p4532, %s4531, 63
      %s4534 = smul.addr %s4533, 8
      %s4535 = scalar_lea.vmem %s7, %s4534
      // Predicated region
      $region49: #{_fourier_expansion_impl.1} parent=47 // pred_check
        %p4536 = pneg %p188
      $region50: #{_fourier_expansion_impl.1} parent=47 // pred_check_branch
        %4538 = sbr.rel (%p4536) target = $region52
      $region51: #{_fourier_expansion_impl.1} parent=47 // pred_region
        %s4539 = smul.u32 16, %s18
      $region52: #{_fourier_expansion_impl.1} parent=47 // pred_fallthru
        _
    $region48: #{_fourier_expansion_impl.1} parent=5 // pred_fallthru
      _
    %p4540 = scmp.le.s32.totalorder 2, %s13
    // Predicated region
    $region53: #{_fourier_expansion_impl.1} parent=5 // pred_check
      %p4541 = pneg %p4540
    $region54: #{_fourier_expansion_impl.1} parent=5 // pred_check_branch
      %4543 = sbr.rel (%p4541) target = $region56
    $region55: #{_fourier_expansion_impl.1} parent=5 // pred_region
      %s4544 = ssub.s32 %s13, 2
      // Predicated region
      $region57: #{_fourier_expansion_impl.1} parent=55 // pred_check
        %p4545 = pneg %p194
      $region58: #{_fourier_expansion_impl.1} parent=55 // pred_check_branch
        %4547 = sbr.rel (%p4545) target = $region60
      $region59: #{_fourier_expansion_impl.1} parent=55 // pred_region
        %s4548 = smul.u32 16, %s19
        %p4549 = scmp.lt.s32.totalorder %s4548, 63
        %s4550 = scalar_select %p4549, %s4548, 63
        %s4551 = smul.addr %s4550, 8
        %s4552 = scalar_lea.vmem %s7, %s4551
      $region60: #{_fourier_expansion_impl.1} parent=55 // pred_fallthru
        _
    $region56: #{_fourier_expansion_impl.1} parent=5 // pred_fallthru
      _
  $region6: #{_fourier_expansion_impl.1} parent=0 // loop_footer
    %s17 = sadd.s32 1, %s13
  $region7: #{_fourier_expansion_impl.1} parent=0 // loop_footer_branch
    %12 = sbr.rel target = $region3
  $region8: #{_fourier_expansion_impl.1} parent=0 // loop_exit
    _

</llo_original>
